<compile_context>
chip_gen: v5e
topology: v5e:2x2
jax: 0.10.0
libtpu: 0.0.40
codegen_flags: <defaults>
</compile_context>

<pallas_src>
import functools

import jax
import jax.numpy as jnp
from jax.experimental import pallas as pl
from jax.experimental.pallas import tpu as pltpu


# ----------------------------------------------------------------------------
# Fused forward kernel.
#
# Row conventions (batch-minor, so per-tap gathers are contiguous):
#   h1 rows : ((h%2)*2 + (w%2)) * 25*B + (h//2)*5*B + (w//2)*B + b     (10x10)
#   h2 rows : (oh*4 + ow)*B + b                                        (4x4)
#   h3 rows : (oh*2 + ow)*B + b                                        (2x2)
# ----------------------------------------------------------------------------
def _dqn_kernel(cols1_ref, w1_ref, b1_ref, w2_ref, b2_ref, w3_ref, b3_ref,
                wf1_ref, bf1_ref, wf2_ref, bf2_ref, wo_ref, bo_ref,
                out_ref,
                h1_s, a2_s, h2_s, a3_s, *, batch):
    B = batch                      # padded batch, multiple of 8
    f32 = jnp.float32

    # ---- conv1 (1->32, 8x8, stride 4): one MXU matmul over the patches -----
    # w1 is tiled 4x along N, so the 32 output channels sit at lane offsets
    # 0/32/64/96; the conv2 gather below then copies between matching lane
    # offsets (no lane rotates).  Same MXU/VPU cost as N=32 (lanes were padded
    # to 128 anyway).
    h1_s[...] = jnp.maximum(
        jnp.dot(cols1_ref[...], w1_ref[...], preferred_element_type=f32)
        + b1_ref[...], 0.0)                                    # (100*B, 128)

    # ---- conv2 (32->64, 4x4, stride 2): lane-packed im2col + ONE GEMM ------
    # a2_s rows = (oh*4 + ow)*B + b, lanes = tap*32 + cin  (K = 16*32 = 512).
    # The parity-class ordering of h1 rows makes every stride-2 gather a
    # contiguous, sublane-aligned 4*B-row block copy.
    for ki in range(4):
        for kj in range(4):
            k = ki * 4 + kj
            for oh in range(4):
                src = ((ki % 2) * 50 + (kj % 2) * 25
                       + (oh + ki // 2) * 5 + kj // 2) * B
                a2_s[pl.ds(oh * 4 * B, 4 * B), pl.ds(k * 32, 32)] = \
                    h1_s[pl.ds(src, 4 * B), pl.ds(kj * 32, 32)]
    # One deep-K matmul (K=512) instead of 16 K=32 dots + 15 VPU adds.
    h2_s[...] = jnp.maximum(
        jnp.dot(a2_s[...], w2_ref[...], preferred_element_type=f32)
        + b2_ref[...], 0.0)                                    # (16*B, 128)

    # ---- conv3 (64->64, 3x3, stride 1): lane-packed im2col + ONE GEMM ------
    # a3_s rows = (oh*2 + ow)*B + b, lanes = tap*64 + cin  (K = 9*64 = 576).
    # h2's channels are duplicated across the two 64-lane bands (w2 tiled 2x
    # along N) so source/dest lane offsets match.
    for ki in range(3):
        for kj in range(3):
            k = ki * 3 + kj
            for oh in range(2):
                src = ((oh + ki) * 4 + kj) * B
                a3_s[pl.ds(oh * 2 * B, 2 * B), pl.ds(k * 64, 64)] = \
                    h2_s[pl.ds(src, 2 * B), pl.ds((k % 2) * 64, 64)]
    h3 = jnp.maximum(
        jnp.dot(a3_s[...], w3_ref[...], preferred_element_type=f32)
        + b3_ref[...], 0.0)                                    # (4*B, 64)

    # ---- fc1 (256->64): lane-dense repack + ONE K=256 dot ------------------
    # The PyTorch NCHW-flatten permutation is folded into wf1's row order.
    h3_flat = jnp.concatenate(
        [h3[p * B:(p + 1) * B, :] for p in range(4)], axis=1)  # (B, 256)
    t = jnp.maximum(
        jnp.dot(h3_flat, wf1_ref[...], preferred_element_type=f32)
        + bf1_ref[...], 0.0)                                   # (B, 64)

    # ---- fc2 (64->32) + the outer F.relu ------------------------------------
    t = jnp.maximum(
        jnp.dot(t, wf2_ref[...], preferred_element_type=f32) + bf2_ref[...],
        0.0)                                                   # (B, 32)

    # ---- head (32->3), no activation ----------------------------------------
    out_ref[...] = (jnp.dot(t, wo_ref[...], preferred_element_type=f32)
                    + bo_ref[...]).astype(out_ref.dtype)


# ----------------------------------------------------------------------------
# Parameter preparation: fold every layout permutation into constants (once).
# ----------------------------------------------------------------------------
def prepare_params(p):
    q = {}
    # conv1: (32,1,8,8) -> (64,32); feature order (cin, ki, kj) == (ki, kj).
    # Tile 4x along N so the 32 channels appear at lane offsets 0/32/64/96.
    w1 = p["w1"].reshape(32, 64).T
    q["w1"] = jnp.concatenate([w1] * 4, axis=1)                # (64, 128)
    q["b1"] = jnp.tile(p["b1"].reshape(1, 32), (1, 4))         # (1, 128)
    # conv2: rows in (ki, kj, cin) order to match the lane-packed im2col;
    # tile 2x along N so h2's 64 channels appear at lane offsets 0 and 64.
    w2 = p["w2"].transpose(2, 3, 1, 0).reshape(16 * 32, 64)
    q["w2"] = jnp.concatenate([w2] * 2, axis=1)                # (512, 128)
    q["b2"] = jnp.tile(p["b2"].reshape(1, 64), (1, 2))         # (1, 128)
    # conv3: rows in (ki, kj, cin) order (matches a3_s lane packing).
    q["w3"] = p["w3"].transpose(2, 3, 1, 0).reshape(9 * 64, 64)
    q["b3"] = p["b3"].reshape(1, 64)
    # fc1: absorb PyTorch's NCHW flatten -> (h, w, c) row order.
    q["wf1"] = p["wf1"].reshape(64, 2, 2, 64).transpose(1, 2, 0, 3).reshape(256, 64)
    q["bf1"] = p["bf1"].reshape(1, 64)
    q["wf2"] = p["wf2"]
    q["bf2"] = p["bf2"].reshape(1, 32)
    q["wo"] = p["wo"]
    q["bo"] = p["bo"].reshape(1, 3)
    return q


# ----------------------------------------------------------------------------
# Forward wrapper: one XLA patches op + ONE fused Pallas kernel.
# ----------------------------------------------------------------------------
def dqn_forward(q, x):
    B, C, H, W = x.shape
    assert C == 1 and H == 44 and W == 44, (B, C, H, W)
    # Pad the batch to a multiple of 8 so every in-kernel gather copy is
    # sublane-aligned; padded rows are garbage-but-harmless and sliced off.
    Bp = max(8, ((B + 7) // 8) * 8)
    if Bp != B:
        x = jnp.pad(x, ((0, Bp - B), (0, 0), (0, 0), (0, 0)))
    # C == 1, so NCHW -> NHWC is a pure relabel (reshape, no data movement).
    x_nhwc = x.reshape(Bp, H, W, 1)
    # conv1 im2col: 8x8 / stride-4 patch extraction needs lane-strided gathers
    # that don't map to a Pallas TPU load, so it is one XLA op feeding the
    # fused kernel.
    patches = jax.lax.conv_general_dilated_patches(
        x_nhwc, filter_shape=(8, 8), window_strides=(4, 4), padding="VALID",
        dimension_numbers=("NHWC", "HWIO", "NHWC"))            # (Bp, 10, 10, 64)
    # Re-order rows to (h%2, w%2, h//2, w//2, b) so conv2's stride-2 access
    # becomes contiguous block copies inside the kernel.
    # TODO(synk): at replay-batch sizes fold this reorder into the kernel path
    # (scalar-prefetch row-offset table on a batch-tiled grid) to avoid the
    # extra HBM round trip of cols1.
    cols1 = patches.reshape(Bp, 5, 2, 5, 2, 64)
    cols1 = cols1.transpose(2, 4, 1, 3, 0, 5).reshape(100 * Bp, 64)

    args = (cols1, q["w1"], q["b1"], q["w2"], q["b2"], q["w3"], q["b3"],
            q["wf1"], q["bf1"], q["wf2"], q["bf2"], q["wo"], q["bo"])

    kernel = functools.partial(_dqn_kernel, batch=Bp)
    out = pl.pallas_call(
        kernel,
        out_shape=jax.ShapeDtypeStruct((Bp, 3), jnp.float32),
        grid=(1,),
        in_specs=[pl.BlockSpec(a.shape, lambda i: (0, 0)) for a in args],
        out_specs=pl.BlockSpec((Bp, 3), lambda i: (0, 0)),
        scratch_shapes=[
            pltpu.VMEM((100 * Bp, 128), jnp.float32),  # h1 (conv1 out, 4x lane bands)
            pltpu.VMEM((16 * Bp, 512), jnp.float32),   # conv2 lane-packed im2col
            pltpu.VMEM((16 * Bp, 128), jnp.float32),   # h2 (conv2 out, 2x lane bands)
            pltpu.VMEM((4 * Bp, 576), jnp.float32),    # conv3 lane-packed im2col
        ],
        compiler_params=pltpu.CompilerParams(
            dimension_semantics=("arbitrary",),
            # Ample headroom: total scratch + double-buffered inputs ~2.2 MiB
            # at Bp=8 and ~20 MiB at Bp=128 with the lane-dense scratches.
            vmem_limit_bytes=32 * 1024 * 1024),
    )(*args)
    return out[:B]


# ----------------------------------------------------------------------------
# Parameter init (PyTorch-default-style uniform init, PyTorch layouts).
# ----------------------------------------------------------------------------
def init_params(key):
    def uniform(key, shape, fan_in):
        bound = 1.0 / jnp.sqrt(fan_in)
        return jax.random.uniform(key, shape, jnp.float32, -bound, bound)

    ks = jax.random.split(key, 12)
    p = {}
    p["w1"] = uniform(ks[0], (32, 1, 8, 8), 1 * 8 * 8)
    p["b1"] = uniform(ks[1], (32,), 1 * 8 * 8)
    p["w2"] = uniform(ks[2], (64, 32, 4, 4), 32 * 4 * 4)
    p["b2"] = uniform(ks[3], (64,), 32 * 4 * 4)
    p["w3"] = uniform(ks[4], (64, 64, 3, 3), 64 * 3 * 3)
    p["b3"] = uniform(ks[5], (64,), 64 * 3 * 3)
    p["wf1"] = uniform(ks[6], (256, 64), 256)
    p["bf1"] = uniform(ks[7], (64,), 256)
    p["wf2"] = uniform(ks[8], (64, 32), 64)
    p["bf2"] = uniform(ks[9], (32,), 64)
    p["wo"] = uniform(ks[10], (32, 3), 32)
    p["bo"] = uniform(ks[11], (3,), 32)
    return p


# ----------------------------------------------------------------------------
# Pure-JAX reference (correctness check only).
# ----------------------------------------------------------------------------
def dqn_reference(params, x):
    def conv(x, w, b, s):
        y = jax.lax.conv_general_dilated(
            x, w, window_strides=(s, s), padding="VALID",
            dimension_numbers=("NCHW", "OIHW", "NCHW"))
        return y + b.reshape(1, -1, 1, 1)

    t = jax.nn.relu(conv(x, params["w1"], params["b1"], 4))
    t = jax.nn.relu(conv(t, params["w2"], params["b2"], 2))
    t = jax.nn.relu(conv(t, params["w3"], params["b3"], 1))
    t = t.reshape(t.shape[0], -1)
    t = jax.nn.relu(t @ params["wf1"] + params["bf1"])
    t = jax.nn.relu(t @ params["wf2"] + params["bf2"])
    return t @ params["wo"] + params["bo"]


if __name__ == "__main__":
    key = jax.random.PRNGKey(0)
    k_param, k_x = jax.random.split(key)
    params = init_params(k_param)
    prepped = prepare_params(params)   # layout folding done once, at init

    # Input implied by the module: DENSE_INPUT=256 -> 44x44 single-channel.
    x = jax.random.uniform(k_x, (2, 1, 44, 44), jnp.float32)

    out = jax.block_until_ready(jax.jit(dqn_forward)(prepped, x))
    assert out.shape == (2, 3), out.shape

    ref = jax.block_until_ready(jax.jit(dqn_reference)(params, x))
    assert jnp.allclose(out, ref, atol=5e-4, rtol=5e-4), (out, ref)

    print("KERNEL_OK")
</pallas_src>

<mosaic_0001>
module attributes {stable_mosaic.version = 11 : i64} {
  func.func @_dqn_kernel(%arg0: i32, %arg1: memref<800x64xf32, #tpu.memory_space<vmem>>, %arg2: memref<64x128xf32, #tpu.memory_space<vmem>>, %arg3: memref<1x128xf32, #tpu.memory_space<vmem>>, %arg4: memref<512x128xf32, #tpu.memory_space<vmem>>, %arg5: memref<1x128xf32, #tpu.memory_space<vmem>>, %arg6: memref<576x64xf32, #tpu.memory_space<vmem>>, %arg7: memref<1x64xf32, #tpu.memory_space<vmem>>, %arg8: memref<256x64xf32, #tpu.memory_space<vmem>>, %arg9: memref<1x64xf32, #tpu.memory_space<vmem>>, %arg10: memref<64x32xf32, #tpu.memory_space<vmem>>, %arg11: memref<1x32xf32, #tpu.memory_space<vmem>>, %arg12: memref<32x3xf32, #tpu.memory_space<vmem>>, %arg13: memref<1x3xf32, #tpu.memory_space<vmem>>, %arg14: memref<8x3xf32, #tpu.memory_space<vmem>>, %arg15: memref<800x128xf32, #tpu.memory_space<vmem>>, %arg16: memref<128x512xf32, #tpu.memory_space<vmem>>, %arg17: memref<128x128xf32, #tpu.memory_space<vmem>>, %arg18: memref<32x576xf32, #tpu.memory_space<vmem>>) attributes {dimension_semantics = [#tpu.dimension_semantics<arbitrary>], iteration_bounds = array<i64: 1>, scalar_prefetch = 0 : i64, scratch_operands = 4 : i64, tpu.core_type = #tpu.core_type<tc>, window_params = [{pipeline_mode = #tpu.pipeline_mode<synchronous>, transform_indices = @transform_0, window_bounds = array<i64: 800, 64>}, {pipeline_mode = #tpu.pipeline_mode<synchronous>, transform_indices = @transform_1, window_bounds = array<i64: 64, 128>}, {pipeline_mode = #tpu.pipeline_mode<synchronous>, transform_indices = @transform_2, window_bounds = array<i64: 1, 128>}, {pipeline_mode = #tpu.pipeline_mode<synchronous>, transform_indices = @transform_3, window_bounds = array<i64: 512, 128>}, {pipeline_mode = #tpu.pipeline_mode<synchronous>, transform_indices = @transform_4, window_bounds = array<i64: 1, 128>}, {pipeline_mode = #tpu.pipeline_mode<synchronous>, transform_indices = @transform_5, window_bounds = array<i64: 576, 64>}, {pipeline_mode = #tpu.pipeline_mode<synchronous>, transform_indices = @transform_6, window_bounds = array<i64: 1, 64>}, {pipeline_mode = #tpu.pipeline_mode<synchronous>, transform_indices = @transform_7, window_bounds = array<i64: 256, 64>}, {pipeline_mode = #tpu.pipeline_mode<synchronous>, transform_indices = @transform_8, window_bounds = array<i64: 1, 64>}, {pipeline_mode = #tpu.pipeline_mode<synchronous>, transform_indices = @transform_9, window_bounds = array<i64: 64, 32>}, {pipeline_mode = #tpu.pipeline_mode<synchronous>, transform_indices = @transform_10, window_bounds = array<i64: 1, 32>}, {pipeline_mode = #tpu.pipeline_mode<synchronous>, transform_indices = @transform_11, window_bounds = array<i64: 32, 3>}, {pipeline_mode = #tpu.pipeline_mode<synchronous>, transform_indices = @transform_12, window_bounds = array<i64: 1, 3>}, {pipeline_mode = #tpu.pipeline_mode<synchronous>, transform_indices = @transform_13, window_bounds = array<i64: 8, 3>}]} {
    %c0 = arith.constant 0 : index
    %c0_0 = arith.constant 0 : index
    %0 = vector.load %arg1[%c0, %c0_0] : memref<800x64xf32, #tpu.memory_space<vmem>>, vector<800x64xf32>
    %c0_1 = arith.constant 0 : index
    %c0_2 = arith.constant 0 : index
    %1 = vector.load %arg2[%c0_1, %c0_2] : memref<64x128xf32, #tpu.memory_space<vmem>>, vector<64x128xf32>
    %cst = arith.constant dense<0.000000e+00> : vector<800x128xf32>
    %2 = tpu.matmul %0, %1, %cst {dimension_numbers = #tpu.dot_dimension_numbers<[1], [0], [0], [1], [0, 0, 1, 1], [], []>} : vector<800x64xf32>, vector<64x128xf32>, vector<800x128xf32> -> vector<800x128xf32>
    %c0_3 = arith.constant 0 : index
    %c0_4 = arith.constant 0 : index
    %3 = vector.load %arg3[%c0_3, %c0_4] : memref<1x128xf32, #tpu.memory_space<vmem>>, vector<1x128xf32>
    %4 = vector.broadcast %3 : vector<1x128xf32> to vector<800x128xf32>
    %5 = arith.addf %2, %4 : vector<800x128xf32>
    %cst_5 = arith.constant 0.000000e+00 : f32
    %6 = vector.broadcast %cst_5 : f32 to vector<800x128xf32>
    %7 = arith.maximumf %5, %6 : vector<800x128xf32>
    %c0_6 = arith.constant 0 : index
    %c0_7 = arith.constant 0 : index
    %8 = vector.load %arg15[%c0_6, %c0_7] : memref<800x128xf32, #tpu.memory_space<vmem>>, vector<800x128xf32>
    tpu.vector_store %arg15[%c0_6, %c0_7], %7 {strides = array<i32>} : memref<800x128xf32, #tpu.memory_space<vmem>>, vector<800x128xf32>,
    %c0_8 = arith.constant 0 : index
    %c0_9 = arith.constant 0 : index
    %9 = vector.load %arg15[%c0_8, %c0_9] : memref<800x128xf32, #tpu.memory_space<vmem>>, vector<32x32xf32>
    %c0_10 = arith.constant 0 : index
    %c0_11 = arith.constant 0 : index
    %10 = vector.load %arg16[%c0_10, %c0_11] : memref<128x512xf32, #tpu.memory_space<vmem>>, vector<32x32xf32>
    tpu.vector_store %arg16[%c0_10, %c0_11], %9 {strides = array<i32>} : memref<128x512xf32, #tpu.memory_space<vmem>>, vector<32x32xf32>,
    %c40 = arith.constant 40 : index
    %c0_12 = arith.constant 0 : index
    %11 = vector.load %arg15[%c40, %c0_12] : memref<800x128xf32, #tpu.memory_space<vmem>>, vector<32x32xf32>
    %c32 = arith.constant 32 : index
    %c0_13 = arith.constant 0 : index
    %12 = vector.load %arg16[%c32, %c0_13] : memref<128x512xf32, #tpu.memory_space<vmem>>, vector<32x32xf32>
    tpu.vector_store %arg16[%c32, %c0_13], %11 {strides = array<i32>} : memref<128x512xf32, #tpu.memory_space<vmem>>, vector<32x32xf32>,
    %c80 = arith.constant 80 : index
    %c0_14 = arith.constant 0 : index
    %13 = vector.load %arg15[%c80, %c0_14] : memref<800x128xf32, #tpu.memory_space<vmem>>, vector<32x32xf32>
    %c64 = arith.constant 64 : index
    %c0_15 = arith.constant 0 : index
    %14 = vector.load %arg16[%c64, %c0_15] : memref<128x512xf32, #tpu.memory_space<vmem>>, vector<32x32xf32>
    tpu.vector_store %arg16[%c64, %c0_15], %13 {strides = array<i32>} : memref<128x512xf32, #tpu.memory_space<vmem>>, vector<32x32xf32>,
    %c120 = arith.constant 120 : index
    %c0_16 = arith.constant 0 : index
    %15 = vector.load %arg15[%c120, %c0_16] : memref<800x128xf32, #tpu.memory_space<vmem>>, vector<32x32xf32>
    %c96 = arith.constant 96 : index
    %c0_17 = arith.constant 0 : index
    %16 = vector.load %arg16[%c96, %c0_17] : memref<128x512xf32, #tpu.memory_space<vmem>>, vector<32x32xf32>
    tpu.vector_store %arg16[%c96, %c0_17], %15 {strides = array<i32>} : memref<128x512xf32, #tpu.memory_space<vmem>>, vector<32x32xf32>,
    %c200 = arith.constant 200 : index
    %c32_18 = arith.constant 32 : index
    %17 = vector.load %arg15[%c200, %c32_18] : memref<800x128xf32, #tpu.memory_space<vmem>>, vector<32x32xf32>
    %c0_19 = arith.constant 0 : index
    %c32_20 = arith.constant 32 : index
    %18 = vector.load %arg16[%c0_19, %c32_20] : memref<128x512xf32, #tpu.memory_space<vmem>>, vector<32x32xf32>
    tpu.vector_store %arg16[%c0_19, %c32_20], %17 {strides = array<i32>} : memref<128x512xf32, #tpu.memory_space<vmem>>, vector<32x32xf32>,
    %c240 = arith.constant 240 : index
    %c32_21 = arith.constant 32 : index
    %19 = vector.load %arg15[%c240, %c32_21] : memref<800x128xf32, #tpu.memory_space<vmem>>, vector<32x32xf32>
    %c32_22 = arith.constant 32 : index
    %c32_23 = arith.constant 32 : index
    %20 = vector.load %arg16[%c32_22, %c32_23] : memref<128x512xf32, #tpu.memory_space<vmem>>, vector<32x32xf32>
    tpu.vector_store %arg16[%c32_22, %c32_23], %19 {strides = array<i32>} : memref<128x512xf32, #tpu.memory_space<vmem>>, vector<32x32xf32>,
    %c280 = arith.constant 280 : index
    %c32_24 = arith.constant 32 : index
    %21 = vector.load %arg15[%c280, %c32_24] : memref<800x128xf32, #tpu.memory_space<vmem>>, vector<32x32xf32>
    %c64_25 = arith.constant 64 : index
    %c32_26 = arith.constant 32 : index
    %22 = vector.load %arg16[%c64_25, %c32_26] : memref<128x512xf32, #tpu.memory_space<vmem>>, vector<32x32xf32>
    tpu.vector_store %arg16[%c64_25, %c32_26], %21 {strides = array<i32>} : memref<128x512xf32, #tpu.memory_space<vmem>>, vector<32x32xf32>,
    %c320 = arith.constant 320 : index
    %c32_27 = arith.constant 32 : index
    %23 = vector.load %arg15[%c320, %c32_27] : memref<800x128xf32, #tpu.memory_space<vmem>>, vector<32x32xf32>
    %c96_28 = arith.constant 96 : index
    %c32_29 = arith.constant 32 : index
    %24 = vector.load %arg16[%c96_28, %c32_29] : memref<128x512xf32, #tpu.memory_space<vmem>>, vector<32x32xf32>
    tpu.vector_store %arg16[%c96_28, %c32_29], %23 {strides = array<i32>} : memref<128x512xf32, #tpu.memory_space<vmem>>, vector<32x32xf32>,
    %c8 = arith.constant 8 : index
    %c64_30 = arith.constant 64 : index
    %25 = vector.load %arg15[%c8, %c64_30] : memref<800x128xf32, #tpu.memory_space<vmem>>, vector<32x32xf32>
    %c0_31 = arith.constant 0 : index
    %c64_32 = arith.constant 64 : index
    %26 = vector.load %arg16[%c0_31, %c64_32] : memref<128x512xf32, #tpu.memory_space<vmem>>, vector<32x32xf32>
    tpu.vector_store %arg16[%c0_31, %c64_32], %25 {strides = array<i32>} : memref<128x512xf32, #tpu.memory_space<vmem>>, vector<32x32xf32>,
    %c48 = arith.constant 48 : index
    %c64_33 = arith.constant 64 : index
    %27 = vector.load %arg15[%c48, %c64_33] : memref<800x128xf32, #tpu.memory_space<vmem>>, vector<32x32xf32>
    %c32_34 = arith.constant 32 : index
    %c64_35 = arith.constant 64 : index
    %28 = vector.load %arg16[%c32_34, %c64_35] : memref<128x512xf32, #tpu.memory_space<vmem>>, vector<32x32xf32>
    tpu.vector_store %arg16[%c32_34, %c64_35], %27 {strides = array<i32>} : memref<128x512xf32, #tpu.memory_space<vmem>>, vector<32x32xf32>,
    %c88 = arith.constant 88 : index
    %c64_36 = arith.constant 64 : index
    %29 = vector.load %arg15[%c88, %c64_36] : memref<800x128xf32, #tpu.memory_space<vmem>>, vector<32x32xf32>
    %c64_37 = arith.constant 64 : index
    %c64_38 = arith.constant 64 : index
    %30 = vector.load %arg16[%c64_37, %c64_38] : memref<128x512xf32, #tpu.memory_space<vmem>>, vector<32x32xf32>
    tpu.vector_store %arg16[%c64_37, %c64_38], %29 {strides = array<i32>} : memref<128x512xf32, #tpu.memory_space<vmem>>, vector<32x32xf32>,
    %c128 = arith.constant 128 : index
    %c64_39 = arith.constant 64 : index
    %31 = vector.load %arg15[%c128, %c64_39] : memref<800x128xf32, #tpu.memory_space<vmem>>, vector<32x32xf32>
    %c96_40 = arith.constant 96 : index
    %c64_41 = arith.constant 64 : index
    %32 = vector.load %arg16[%c96_40, %c64_41] : memref<128x512xf32, #tpu.memory_space<vmem>>, vector<32x32xf32>
    tpu.vector_store %arg16[%c96_40, %c64_41], %31 {strides = array<i32>} : memref<128x512xf32, #tpu.memory_space<vmem>>, vector<32x32xf32>,
    %c208 = arith.constant 208 : index
    %c96_42 = arith.constant 96 : index
    %33 = vector.load %arg15[%c208, %c96_42] : memref<800x128xf32, #tpu.memory_space<vmem>>, vector<32x32xf32>
    %c0_43 = arith.constant 0 : index
    %c96_44 = arith.constant 96 : index
    %34 = vector.load %arg16[%c0_43, %c96_44] : memref<128x512xf32, #tpu.memory_space<vmem>>, vector<32x32xf32>
    tpu.vector_store %arg16[%c0_43, %c96_44], %33 {strides = array<i32>} : memref<128x512xf32, #tpu.memory_space<vmem>>, vector<32x32xf32>,
    %c248 = arith.constant 248 : index
    %c96_45 = arith.constant 96 : index
    %35 = vector.load %arg15[%c248, %c96_45] : memref<800x128xf32, #tpu.memory_space<vmem>>, vector<32x32xf32>
    %c32_46 = arith.constant 32 : index
    %c96_47 = arith.constant 96 : index
    %36 = vector.load %arg16[%c32_46, %c96_47] : memref<128x512xf32, #tpu.memory_space<vmem>>, vector<32x32xf32>
    tpu.vector_store %arg16[%c32_46, %c96_47], %35 {strides = array<i32>} : memref<128x512xf32, #tpu.memory_space<vmem>>, vector<32x32xf32>,
    %c288 = arith.constant 288 : index
    %c96_48 = arith.constant 96 : index
    %37 = vector.load %arg15[%c288, %c96_48] : memref<800x128xf32, #tpu.memory_space<vmem>>, vector<32x32xf32>
    %c64_49 = arith.constant 64 : index
    %c96_50 = arith.constant 96 : index
    %38 = vector.load %arg16[%c64_49, %c96_50] : memref<128x512xf32, #tpu.memory_space<vmem>>, vector<32x32xf32>
    tpu.vector_store %arg16[%c64_49, %c96_50], %37 {strides = array<i32>} : memref<128x512xf32, #tpu.memory_space<vmem>>, vector<32x32xf32>,
    %c328 = arith.constant 328 : index
    %c96_51 = arith.constant 96 : index
    %39 = vector.load %arg15[%c328, %c96_51] : memref<800x128xf32, #tpu.memory_space<vmem>>, vector<32x32xf32>
    %c96_52 = arith.constant 96 : index
    %c96_53 = arith.constant 96 : index
    %40 = vector.load %arg16[%c96_52, %c96_53] : memref<128x512xf32, #tpu.memory_space<vmem>>, vector<32x32xf32>
    tpu.vector_store %arg16[%c96_52, %c96_53], %39 {strides = array<i32>} : memref<128x512xf32, #tpu.memory_space<vmem>>, vector<32x32xf32>,
    %c400 = arith.constant 400 : index
    %c0_54 = arith.constant 0 : index
    %41 = vector.load %arg15[%c400, %c0_54] : memref<800x128xf32, #tpu.memory_space<vmem>>, vector<32x32xf32>
    %c0_55 = arith.constant 0 : index
    %c128_56 = arith.constant 128 : index
    %42 = vector.load %arg16[%c0_55, %c128_56] : memref<128x512xf32, #tpu.memory_space<vmem>>, vector<32x32xf32>
    tpu.vector_store %arg16[%c0_55, %c128_56], %41 {strides = array<i32>} : memref<128x512xf32, #tpu.memory_space<vmem>>, vector<32x32xf32>,
    %c440 = arith.constant 440 : index
    %c0_57 = arith.constant 0 : index
    %43 = vector.load %arg15[%c440, %c0_57] : memref<800x128xf32, #tpu.memory_space<vmem>>, vector<32x32xf32>
    %c32_58 = arith.constant 32 : index
    %c128_59 = arith.constant 128 : index
    %44 = vector.load %arg16[%c32_58, %c128_59] : memref<128x512xf32, #tpu.memory_space<vmem>>, vector<32x32xf32>
    tpu.vector_store %arg16[%c32_58, %c128_59], %43 {strides = array<i32>} : memref<128x512xf32, #tpu.memory_space<vmem>>, vector<32x32xf32>,
    %c480 = arith.constant 480 : index
    %c0_60 = arith.constant 0 : index
    %45 = vector.load %arg15[%c480, %c0_60] : memref<800x128xf32, #tpu.memory_space<vmem>>, vector<32x32xf32>
    %c64_61 = arith.constant 64 : index
    %c128_62 = arith.constant 128 : index
    %46 = vector.load %arg16[%c64_61, %c128_62] : memref<128x512xf32, #tpu.memory_space<vmem>>, vector<32x32xf32>
    tpu.vector_store %arg16[%c64_61, %c128_62], %45 {strides = array<i32>} : memref<128x512xf32, #tpu.memory_space<vmem>>, vector<32x32xf32>,
    %c520 = arith.constant 520 : index
    %c0_63 = arith.constant 0 : index
    %47 = vector.load %arg15[%c520, %c0_63] : memref<800x128xf32, #tpu.memory_space<vmem>>, vector<32x32xf32>
    %c96_64 = arith.constant 96 : index
    %c128_65 = arith.constant 128 : index
    %48 = vector.load %arg16[%c96_64, %c128_65] : memref<128x512xf32, #tpu.memory_space<vmem>>, vector<32x32xf32>
    tpu.vector_store %arg16[%c96_64, %c128_65], %47 {strides = array<i32>} : memref<128x512xf32, #tpu.memory_space<vmem>>, vector<32x32xf32>,
    %c600 = arith.constant 600 : index
    %c32_66 = arith.constant 32 : index
    %49 = vector.load %arg15[%c600, %c32_66] : memref<800x128xf32, #tpu.memory_space<vmem>>, vector<32x32xf32>
    %c0_67 = arith.constant 0 : index
    %c160 = arith.constant 160 : index
    %50 = vector.load %arg16[%c0_67, %c160] : memref<128x512xf32, #tpu.memory_space<vmem>>, vector<32x32xf32>
    tpu.vector_store %arg16[%c0_67, %c160], %49 {strides = array<i32>} : memref<128x512xf32, #tpu.memory_space<vmem>>, vector<32x32xf32>,
    %c640 = arith.constant 640 : index
    %c32_68 = arith.constant 32 : index
    %51 = vector.load %arg15[%c640, %c32_68] : memref<800x128xf32, #tpu.memory_space<vmem>>, vector<32x32xf32>
    %c32_69 = arith.constant 32 : index
    %c160_70 = arith.constant 160 : index
    %52 = vector.load %arg16[%c32_69, %c160_70] : memref<128x512xf32, #tpu.memory_space<vmem>>, vector<32x32xf32>
    tpu.vector_store %arg16[%c32_69, %c160_70], %51 {strides = array<i32>} : memref<128x512xf32, #tpu.memory_space<vmem>>, vector<32x32xf32>,
    %c680 = arith.constant 680 : index
    %c32_71 = arith.constant 32 : index
    %53 = vector.load %arg15[%c680, %c32_71] : memref<800x128xf32, #tpu.memory_space<vmem>>, vector<32x32xf32>
    %c64_72 = arith.constant 64 : index
    %c160_73 = arith.constant 160 : index
    %54 = vector.load %arg16[%c64_72, %c160_73] : memref<128x512xf32, #tpu.memory_space<vmem>>, vector<32x32xf32>
    tpu.vector_store %arg16[%c64_72, %c160_73], %53 {strides = array<i32>} : memref<128x512xf32, #tpu.memory_space<vmem>>, vector<32x32xf32>,
    %c720 = arith.constant 720 : index
    %c32_74 = arith.constant 32 : index
    %55 = vector.load %arg15[%c720, %c32_74] : memref<800x128xf32, #tpu.memory_space<vmem>>, vector<32x32xf32>
    %c96_75 = arith.constant 96 : index
    %c160_76 = arith.constant 160 : index
    %56 = vector.load %arg16[%c96_75, %c160_76] : memref<128x512xf32, #tpu.memory_space<vmem>>, vector<32x32xf32>
    tpu.vector_store %arg16[%c96_75, %c160_76], %55 {strides = array<i32>} : memref<128x512xf32, #tpu.memory_space<vmem>>, vector<32x32xf32>,
    %c408 = arith.constant 408 : index
    %c64_77 = arith.constant 64 : index
    %57 = vector.load %arg15[%c408, %c64_77] : memref<800x128xf32, #tpu.memory_space<vmem>>, vector<32x32xf32>
    %c0_78 = arith.constant 0 : index
    %c192 = arith.constant 192 : index
    %58 = vector.load %arg16[%c0_78, %c192] : memref<128x512xf32, #tpu.memory_space<vmem>>, vector<32x32xf32>
    tpu.vector_store %arg16[%c0_78, %c192], %57 {strides = array<i32>} : memref<128x512xf32, #tpu.memory_space<vmem>>, vector<32x32xf32>,
    %c448 = arith.constant 448 : index
    %c64_79 = arith.constant 64 : index
    %59 = vector.load %arg15[%c448, %c64_79] : memref<800x128xf32, #tpu.memory_space<vmem>>, vector<32x32xf32>
    %c32_80 = arith.constant 32 : index
    %c192_81 = arith.constant 192 : index
    %60 = vector.load %arg16[%c32_80, %c192_81] : memref<128x512xf32, #tpu.memory_space<vmem>>, vector<32x32xf32>
    tpu.vector_store %arg16[%c32_80, %c192_81], %59 {strides = array<i32>} : memref<128x512xf32, #tpu.memory_space<vmem>>, vector<32x32xf32>,
    %c488 = arith.constant 488 : index
    %c64_82 = arith.constant 64 : index
    %61 = vector.load %arg15[%c488, %c64_82] : memref<800x128xf32, #tpu.memory_space<vmem>>, vector<32x32xf32>
    %c64_83 = arith.constant 64 : index
    %c192_84 = arith.constant 192 : index
    %62 = vector.load %arg16[%c64_83, %c192_84] : memref<128x512xf32, #tpu.memory_space<vmem>>, vector<32x32xf32>
    tpu.vector_store %arg16[%c64_83, %c192_84], %61 {strides = array<i32>} : memref<128x512xf32, #tpu.memory_space<vmem>>, vector<32x32xf32>,
    %c528 = arith.constant 528 : index
    %c64_85 = arith.constant 64 : index
    %63 = vector.load %arg15[%c528, %c64_85] : memref<800x128xf32, #tpu.memory_space<vmem>>, vector<32x32xf32>
    %c96_86 = arith.constant 96 : index
    %c192_87 = arith.constant 192 : index
    %64 = vector.load %arg16[%c96_86, %c192_87] : memref<128x512xf32, #tpu.memory_space<vmem>>, vector<32x32xf32>
    tpu.vector_store %arg16[%c96_86, %c192_87], %63 {strides = array<i32>} : memref<128x512xf32, #tpu.memory_space<vmem>>, vector<32x32xf32>,
    %c608 = arith.constant 608 : index
    %c96_88 = arith.constant 96 : index
    %65 = vector.load %arg15[%c608, %c96_88] : memref<800x128xf32, #tpu.memory_space<vmem>>, vector<32x32xf32>
    %c0_89 = arith.constant 0 : index
    %c224 = arith.constant 224 : index
    %66 = vector.load %arg16[%c0_89, %c224] : memref<128x512xf32, #tpu.memory_space<vmem>>, vector<32x32xf32>
    tpu.vector_store %arg16[%c0_89, %c224], %65 {strides = array<i32>} : memref<128x512xf32, #tpu.memory_space<vmem>>, vector<32x32xf32>,
    %c648 = arith.constant 648 : index
    %c96_90 = arith.constant 96 : index
    %67 = vector.load %arg15[%c648, %c96_90] : memref<800x128xf32, #tpu.memory_space<vmem>>, vector<32x32xf32>
    %c32_91 = arith.constant 32 : index
    %c224_92 = arith.constant 224 : index
    %68 = vector.load %arg16[%c32_91, %c224_92] : memref<128x512xf32, #tpu.memory_space<vmem>>, vector<32x32xf32>
    tpu.vector_store %arg16[%c32_91, %c224_92], %67 {strides = array<i32>} : memref<128x512xf32, #tpu.memory_space<vmem>>, vector<32x32xf32>,
    %c688 = arith.constant 688 : index
    %c96_93 = arith.constant 96 : index
    %69 = vector.load %arg15[%c688, %c96_93] : memref<800x128xf32, #tpu.memory_space<vmem>>, vector<32x32xf32>
    %c64_94 = arith.constant 64 : index
    %c224_95 = arith.constant 224 : index
    %70 = vector.load %arg16[%c64_94, %c224_95] : memref<128x512xf32, #tpu.memory_space<vmem>>, vector<32x32xf32>
    tpu.vector_store %arg16[%c64_94, %c224_95], %69 {strides = array<i32>} : memref<128x512xf32, #tpu.memory_space<vmem>>, vector<32x32xf32>,
    %c728 = arith.constant 728 : index
    %c96_96 = arith.constant 96 : index
    %71 = vector.load %arg15[%c728, %c96_96] : memref<800x128xf32, #tpu.memory_space<vmem>>, vector<32x32xf32>
    %c96_97 = arith.constant 96 : index
    %c224_98 = arith.constant 224 : index
    %72 = vector.load %arg16[%c96_97, %c224_98] : memref<128x512xf32, #tpu.memory_space<vmem>>, vector<32x32xf32>
    tpu.vector_store %arg16[%c96_97, %c224_98], %71 {strides = array<i32>} : memref<128x512xf32, #tpu.memory_space<vmem>>, vector<32x32xf32>,
    %c40_99 = arith.constant 40 : index
    %c0_100 = arith.constant 0 : index
    %73 = vector.load %arg15[%c40_99, %c0_100] : memref<800x128xf32, #tpu.memory_space<vmem>>, vector<32x32xf32>
    %c0_101 = arith.constant 0 : index
    %c256 = arith.constant 256 : index
    %74 = vector.load %arg16[%c0_101, %c256] : memref<128x512xf32, #tpu.memory_space<vmem>>, vector<32x32xf32>
    tpu.vector_store %arg16[%c0_101, %c256], %73 {strides = array<i32>} : memref<128x512xf32, #tpu.memory_space<vmem>>, vector<32x32xf32>,
    %c80_102 = arith.constant 80 : index
    %c0_103 = arith.constant 0 : index
    %75 = vector.load %arg15[%c80_102, %c0_103] : memref<800x128xf32, #tpu.memory_space<vmem>>, vector<32x32xf32>
    %c32_104 = arith.constant 32 : index
    %c256_105 = arith.constant 256 : index
    %76 = vector.load %arg16[%c32_104, %c256_105] : memref<128x512xf32, #tpu.memory_space<vmem>>, vector<32x32xf32>
    tpu.vector_store %arg16[%c32_104, %c256_105], %75 {strides = array<i32>} : memref<128x512xf32, #tpu.memory_space<vmem>>, vector<32x32xf32>,
    %c120_106 = arith.constant 120 : index
    %c0_107 = arith.constant 0 : index
    %77 = vector.load %arg15[%c120_106, %c0_107] : memref<800x128xf32, #tpu.memory_space<vmem>>, vector<32x32xf32>
    %c64_108 = arith.constant 64 : index
    %c256_109 = arith.constant 256 : index
    %78 = vector.load %arg16[%c64_108, %c256_109] : memref<128x512xf32, #tpu.memory_space<vmem>>, vector<32x32xf32>
    tpu.vector_store %arg16[%c64_108, %c256_109], %77 {strides = array<i32>} : memref<128x512xf32, #tpu.memory_space<vmem>>, vector<32x32xf32>,
    %c160_110 = arith.constant 160 : index
    %c0_111 = arith.constant 0 : index
    %79 = vector.load %arg15[%c160_110, %c0_111] : memref<800x128xf32, #tpu.memory_space<vmem>>, vector<32x32xf32>
    %c96_112 = arith.constant 96 : index
    %c256_113 = arith.constant 256 : index
    %80 = vector.load %arg16[%c96_112, %c256_113] : memref<128x512xf32, #tpu.memory_space<vmem>>, vector<32x32xf32>
    tpu.vector_store %arg16[%c96_112, %c256_113], %79 {strides = array<i32>} : memref<128x512xf32, #tpu.memory_space<vmem>>, vector<32x32xf32>,
    %c240_114 = arith.constant 240 : index
    %c32_115 = arith.constant 32 : index
    %81 = vector.load %arg15[%c240_114, %c32_115] : memref<800x128xf32, #tpu.memory_space<vmem>>, vector<32x32xf32>
    %c0_116 = arith.constant 0 : index
    %c288_117 = arith.constant 288 : index
    %82 = vector.load %arg16[%c0_116, %c288_117] : memref<128x512xf32, #tpu.memory_space<vmem>>, vector<32x32xf32>
    tpu.vector_store %arg16[%c0_116, %c288_117], %81 {strides = array<i32>} : memref<128x512xf32, #tpu.memory_space<vmem>>, vector<32x32xf32>,
    %c280_118 = arith.constant 280 : index
    %c32_119 = arith.constant 32 : index
    %83 = vector.load %arg15[%c280_118, %c32_119] : memref<800x128xf32, #tpu.memory_space<vmem>>, vector<32x32xf32>
    %c32_120 = arith.constant 32 : index
    %c288_121 = arith.constant 288 : index
    %84 = vector.load %arg16[%c32_120, %c288_121] : memref<128x512xf32, #tpu.memory_space<vmem>>, vector<32x32xf32>
    tpu.vector_store %arg16[%c32_120, %c288_121], %83 {strides = array<i32>} : memref<128x512xf32, #tpu.memory_space<vmem>>, vector<32x32xf32>,
    %c320_122 = arith.constant 320 : index
    %c32_123 = arith.constant 32 : index
    %85 = vector.load %arg15[%c320_122, %c32_123] : memref<800x128xf32, #tpu.memory_space<vmem>>, vector<32x32xf32>
    %c64_124 = arith.constant 64 : index
    %c288_125 = arith.constant 288 : index
    %86 = vector.load %arg16[%c64_124, %c288_125] : memref<128x512xf32, #tpu.memory_space<vmem>>, vector<32x32xf32>
    tpu.vector_store %arg16[%c64_124, %c288_125], %85 {strides = array<i32>} : memref<128x512xf32, #tpu.memory_space<vmem>>, vector<32x32xf32>,
    %c360 = arith.constant 360 : index
    %c32_126 = arith.constant 32 : index
    %87 = vector.load %arg15[%c360, %c32_126] : memref<800x128xf32, #tpu.memory_space<vmem>>, vector<32x32xf32>
    %c96_127 = arith.constant 96 : index
    %c288_128 = arith.constant 288 : index
    %88 = vector.load %arg16[%c96_127, %c288_128] : memref<128x512xf32, #tpu.memory_space<vmem>>, vector<32x32xf32>
    tpu.vector_store %arg16[%c96_127, %c288_128], %87 {strides = array<i32>} : memref<128x512xf32, #tpu.memory_space<vmem>>, vector<32x32xf32>,
    %c48_129 = arith.constant 48 : index
    %c64_130 = arith.constant 64 : index
    %89 = vector.load %arg15[%c48_129, %c64_130] : memref<800x128xf32, #tpu.memory_space<vmem>>, vector<32x32xf32>
    %c0_131 = arith.constant 0 : index
    %c320_132 = arith.constant 320 : index
    %90 = vector.load %arg16[%c0_131, %c320_132] : memref<128x512xf32, #tpu.memory_space<vmem>>, vector<32x32xf32>
    tpu.vector_store %arg16[%c0_131, %c320_132], %89 {strides = array<i32>} : memref<128x512xf32, #tpu.memory_space<vmem>>, vector<32x32xf32>,
    %c88_133 = arith.constant 88 : index
    %c64_134 = arith.constant 64 : index
    %91 = vector.load %arg15[%c88_133, %c64_134] : memref<800x128xf32, #tpu.memory_space<vmem>>, vector<32x32xf32>
    %c32_135 = arith.constant 32 : index
    %c320_136 = arith.constant 320 : index
    %92 = vector.load %arg16[%c32_135, %c320_136] : memref<128x512xf32, #tpu.memory_space<vmem>>, vector<32x32xf32>
    tpu.vector_store %arg16[%c32_135, %c320_136], %91 {strides = array<i32>} : memref<128x512xf32, #tpu.memory_space<vmem>>, vector<32x32xf32>,
    %c128_137 = arith.constant 128 : index
    %c64_138 = arith.constant 64 : index
    %93 = vector.load %arg15[%c128_137, %c64_138] : memref<800x128xf32, #tpu.memory_space<vmem>>, vector<32x32xf32>
    %c64_139 = arith.constant 64 : index
    %c320_140 = arith.constant 320 : index
    %94 = vector.load %arg16[%c64_139, %c320_140] : memref<128x512xf32, #tpu.memory_space<vmem>>, vector<32x32xf32>
    tpu.vector_store %arg16[%c64_139, %c320_140], %93 {strides = array<i32>} : memref<128x512xf32, #tpu.memory_space<vmem>>, vector<32x32xf32>,
    %c168 = arith.constant 168 : index
    %c64_141 = arith.constant 64 : index
    %95 = vector.load %arg15[%c168, %c64_141] : memref<800x128xf32, #tpu.memory_space<vmem>>, vector<32x32xf32>
    %c96_142 = arith.constant 96 : index
    %c320_143 = arith.constant 320 : index
    %96 = vector.load %arg16[%c96_142, %c320_143] : memref<128x512xf32, #tpu.memory_space<vmem>>, vector<32x32xf32>
    tpu.vector_store %arg16[%c96_142, %c320_143], %95 {strides = array<i32>} : memref<128x512xf32, #tpu.memory_space<vmem>>, vector<32x32xf32>,
    %c248_144 = arith.constant 248 : index
    %c96_145 = arith.constant 96 : index
    %97 = vector.load %arg15[%c248_144, %c96_145] : memref<800x128xf32, #tpu.memory_space<vmem>>, vector<32x32xf32>
    %c0_146 = arith.constant 0 : index
    %c352 = arith.constant 352 : index
    %98 = vector.load %arg16[%c0_146, %c352] : memref<128x512xf32, #tpu.memory_space<vmem>>, vector<32x32xf32>
    tpu.vector_store %arg16[%c0_146, %c352], %97 {strides = array<i32>} : memref<128x512xf32, #tpu.memory_space<vmem>>, vector<32x32xf32>,
    %c288_147 = arith.constant 288 : index
    %c96_148 = arith.constant 96 : index
    %99 = vector.load %arg15[%c288_147, %c96_148] : memref<800x128xf32, #tpu.memory_space<vmem>>, vector<32x32xf32>
    %c32_149 = arith.constant 32 : index
    %c352_150 = arith.constant 352 : index
    %100 = vector.load %arg16[%c32_149, %c352_150] : memref<128x512xf32, #tpu.memory_space<vmem>>, vector<32x32xf32>
    tpu.vector_store %arg16[%c32_149, %c352_150], %99 {strides = array<i32>} : memref<128x512xf32, #tpu.memory_space<vmem>>, vector<32x32xf32>,
    %c328_151 = arith.constant 328 : index
    %c96_152 = arith.constant 96 : index
    %101 = vector.load %arg15[%c328_151, %c96_152] : memref<800x128xf32, #tpu.memory_space<vmem>>, vector<32x32xf32>
    %c64_153 = arith.constant 64 : index
    %c352_154 = arith.constant 352 : index
    %102 = vector.load %arg16[%c64_153, %c352_154] : memref<128x512xf32, #tpu.memory_space<vmem>>, vector<32x32xf32>
    tpu.vector_store %arg16[%c64_153, %c352_154], %101 {strides = array<i32>} : memref<128x512xf32, #tpu.memory_space<vmem>>, vector<32x32xf32>,
    %c368 = arith.constant 368 : index
    %c96_155 = arith.constant 96 : index
    %103 = vector.load %arg15[%c368, %c96_155] : memref<800x128xf32, #tpu.memory_space<vmem>>, vector<32x32xf32>
    %c96_156 = arith.constant 96 : index
    %c352_157 = arith.constant 352 : index
    %104 = vector.load %arg16[%c96_156, %c352_157] : memref<128x512xf32, #tpu.memory_space<vmem>>, vector<32x32xf32>
    tpu.vector_store %arg16[%c96_156, %c352_157], %103 {strides = array<i32>} : memref<128x512xf32, #tpu.memory_space<vmem>>, vector<32x32xf32>,
    %c440_158 = arith.constant 440 : index
    %c0_159 = arith.constant 0 : index
    %105 = vector.load %arg15[%c440_158, %c0_159] : memref<800x128xf32, #tpu.memory_space<vmem>>, vector<32x32xf32>
    %c0_160 = arith.constant 0 : index
    %c384 = arith.constant 384 : index
    %106 = vector.load %arg16[%c0_160, %c384] : memref<128x512xf32, #tpu.memory_space<vmem>>, vector<32x32xf32>
    tpu.vector_store %arg16[%c0_160, %c384], %105 {strides = array<i32>} : memref<128x512xf32, #tpu.memory_space<vmem>>, vector<32x32xf32>,
    %c480_161 = arith.constant 480 : index
    %c0_162 = arith.constant 0 : index
    %107 = vector.load %arg15[%c480_161, %c0_162] : memref<800x128xf32, #tpu.memory_space<vmem>>, vector<32x32xf32>
    %c32_163 = arith.constant 32 : index
    %c384_164 = arith.constant 384 : index
    %108 = vector.load %arg16[%c32_163, %c384_164] : memref<128x512xf32, #tpu.memory_space<vmem>>, vector<32x32xf32>
    tpu.vector_store %arg16[%c32_163, %c384_164], %107 {strides = array<i32>} : memref<128x512xf32, #tpu.memory_space<vmem>>, vector<32x32xf32>,
    %c520_165 = arith.constant 520 : index
    %c0_166 = arith.constant 0 : index
    %109 = vector.load %arg15[%c520_165, %c0_166] : memref<800x128xf32, #tpu.memory_space<vmem>>, vector<32x32xf32>
    %c64_167 = arith.constant 64 : index
    %c384_168 = arith.constant 384 : index
    %110 = vector.load %arg16[%c64_167, %c384_168] : memref<128x512xf32, #tpu.memory_space<vmem>>, vector<32x32xf32>
    tpu.vector_store %arg16[%c64_167, %c384_168], %109 {strides = array<i32>} : memref<128x512xf32, #tpu.memory_space<vmem>>, vector<32x32xf32>,
    %c560 = arith.constant 560 : index
    %c0_169 = arith.constant 0 : index
    %111 = vector.load %arg15[%c560, %c0_169] : memref<800x128xf32, #tpu.memory_space<vmem>>, vector<32x32xf32>
    %c96_170 = arith.constant 96 : index
    %c384_171 = arith.constant 384 : index
    %112 = vector.load %arg16[%c96_170, %c384_171] : memref<128x512xf32, #tpu.memory_space<vmem>>, vector<32x32xf32>
    tpu.vector_store %arg16[%c96_170, %c384_171], %111 {strides = array<i32>} : memref<128x512xf32, #tpu.memory_space<vmem>>, vector<32x32xf32>,
    %c640_172 = arith.constant 640 : index
    %c32_173 = arith.constant 32 : index
    %113 = vector.load %arg15[%c640_172, %c32_173] : memref<800x128xf32, #tpu.memory_space<vmem>>, vector<32x32xf32>
    %c0_174 = arith.constant 0 : index
    %c416 = arith.constant 416 : index
    %114 = vector.load %arg16[%c0_174, %c416] : memref<128x512xf32, #tpu.memory_space<vmem>>, vector<32x32xf32>
    tpu.vector_store %arg16[%c0_174, %c416], %113 {strides = array<i32>} : memref<128x512xf32, #tpu.memory_space<vmem>>, vector<32x32xf32>,
    %c680_175 = arith.constant 680 : index
    %c32_176 = arith.constant 32 : index
    %115 = vector.load %arg15[%c680_175, %c32_176] : memref<800x128xf32, #tpu.memory_space<vmem>>, vector<32x32xf32>
    %c32_177 = arith.constant 32 : index
    %c416_178 = arith.constant 416 : index
    %116 = vector.load %arg16[%c32_177, %c416_178] : memref<128x512xf32, #tpu.memory_space<vmem>>, vector<32x32xf32>
    tpu.vector_store %arg16[%c32_177, %c416_178], %115 {strides = array<i32>} : memref<128x512xf32, #tpu.memory_space<vmem>>, vector<32x32xf32>,
    %c720_179 = arith.constant 720 : index
    %c32_180 = arith.constant 32 : index
    %117 = vector.load %arg15[%c720_179, %c32_180] : memref<800x128xf32, #tpu.memory_space<vmem>>, vector<32x32xf32>
    %c64_181 = arith.constant 64 : index
    %c416_182 = arith.constant 416 : index
    %118 = vector.load %arg16[%c64_181, %c416_182] : memref<128x512xf32, #tpu.memory_space<vmem>>, vector<32x32xf32>
    tpu.vector_store %arg16[%c64_181, %c416_182], %117 {strides = array<i32>} : memref<128x512xf32, #tpu.memory_space<vmem>>, vector<32x32xf32>,
    %c760 = arith.constant 760 : index
    %c32_183 = arith.constant 32 : index
    %119 = vector.load %arg15[%c760, %c32_183] : memref<800x128xf32, #tpu.memory_space<vmem>>, vector<32x32xf32>
    %c96_184 = arith.constant 96 : index
    %c416_185 = arith.constant 416 : index
    %120 = vector.load %arg16[%c96_184, %c416_185] : memref<128x512xf32, #tpu.memory_space<vmem>>, vector<32x32xf32>
    tpu.vector_store %arg16[%c96_184, %c416_185], %119 {strides = array<i32>} : memref<128x512xf32, #tpu.memory_space<vmem>>, vector<32x32xf32>,
    %c448_186 = arith.constant 448 : index
    %c64_187 = arith.constant 64 : index
    %121 = vector.load %arg15[%c448_186, %c64_187] : memref<800x128xf32, #tpu.memory_space<vmem>>, vector<32x32xf32>
    %c0_188 = arith.constant 0 : index
    %c448_189 = arith.constant 448 : index
    %122 = vector.load %arg16[%c0_188, %c448_189] : memref<128x512xf32, #tpu.memory_space<vmem>>, vector<32x32xf32>
    tpu.vector_store %arg16[%c0_188, %c448_189], %121 {strides = array<i32>} : memref<128x512xf32, #tpu.memory_space<vmem>>, vector<32x32xf32>,
    %c488_190 = arith.constant 488 : index
    %c64_191 = arith.constant 64 : index
    %123 = vector.load %arg15[%c488_190, %c64_191] : memref<800x128xf32, #tpu.memory_space<vmem>>, vector<32x32xf32>
    %c32_192 = arith.constant 32 : index
    %c448_193 = arith.constant 448 : index
    %124 = vector.load %arg16[%c32_192, %c448_193] : memref<128x512xf32, #tpu.memory_space<vmem>>, vector<32x32xf32>
    tpu.vector_store %arg16[%c32_192, %c448_193], %123 {strides = array<i32>} : memref<128x512xf32, #tpu.memory_space<vmem>>, vector<32x32xf32>,
    %c528_194 = arith.constant 528 : index
    %c64_195 = arith.constant 64 : index
    %125 = vector.load %arg15[%c528_194, %c64_195] : memref<800x128xf32, #tpu.memory_space<vmem>>, vector<32x32xf32>
    %c64_196 = arith.constant 64 : index
    %c448_197 = arith.constant 448 : index
    %126 = vector.load %arg16[%c64_196, %c448_197] : memref<128x512xf32, #tpu.memory_space<vmem>>, vector<32x32xf32>
    tpu.vector_store %arg16[%c64_196, %c448_197], %125 {strides = array<i32>} : memref<128x512xf32, #tpu.memory_space<vmem>>, vector<32x32xf32>,
    %c568 = arith.constant 568 : index
    %c64_198 = arith.constant 64 : index
    %127 = vector.load %arg15[%c568, %c64_198] : memref<800x128xf32, #tpu.memory_space<vmem>>, vector<32x32xf32>
    %c96_199 = arith.constant 96 : index
    %c448_200 = arith.constant 448 : index
    %128 = vector.load %arg16[%c96_199, %c448_200] : memref<128x512xf32, #tpu.memory_space<vmem>>, vector<32x32xf32>
    tpu.vector_store %arg16[%c96_199, %c448_200], %127 {strides = array<i32>} : memref<128x512xf32, #tpu.memory_space<vmem>>, vector<32x32xf32>,
    %c648_201 = arith.constant 648 : index
    %c96_202 = arith.constant 96 : index
    %129 = vector.load %arg15[%c648_201, %c96_202] : memref<800x128xf32, #tpu.memory_space<vmem>>, vector<32x32xf32>
    %c0_203 = arith.constant 0 : index
    %c480_204 = arith.constant 480 : index
    %130 = vector.load %arg16[%c0_203, %c480_204] : memref<128x512xf32, #tpu.memory_space<vmem>>, vector<32x32xf32>
    tpu.vector_store %arg16[%c0_203, %c480_204], %129 {strides = array<i32>} : memref<128x512xf32, #tpu.memory_space<vmem>>, vector<32x32xf32>,
    %c688_205 = arith.constant 688 : index
    %c96_206 = arith.constant 96 : index
    %131 = vector.load %arg15[%c688_205, %c96_206] : memref<800x128xf32, #tpu.memory_space<vmem>>, vector<32x32xf32>
    %c32_207 = arith.constant 32 : index
    %c480_208 = arith.constant 480 : index
    %132 = vector.load %arg16[%c32_207, %c480_208] : memref<128x512xf32, #tpu.memory_space<vmem>>, vector<32x32xf32>
    tpu.vector_store %arg16[%c32_207, %c480_208], %131 {strides = array<i32>} : memref<128x512xf32, #tpu.memory_space<vmem>>, vector<32x32xf32>,
    %c728_209 = arith.constant 728 : index
    %c96_210 = arith.constant 96 : index
    %133 = vector.load %arg15[%c728_209, %c96_210] : memref<800x128xf32, #tpu.memory_space<vmem>>, vector<32x32xf32>
    %c64_211 = arith.constant 64 : index
    %c480_212 = arith.constant 480 : index
    %134 = vector.load %arg16[%c64_211, %c480_212] : memref<128x512xf32, #tpu.memory_space<vmem>>, vector<32x32xf32>
    tpu.vector_store %arg16[%c64_211, %c480_212], %133 {strides = array<i32>} : memref<128x512xf32, #tpu.memory_space<vmem>>, vector<32x32xf32>,
    %c768 = arith.constant 768 : index
    %c96_213 = arith.constant 96 : index
    %135 = vector.load %arg15[%c768, %c96_213] : memref<800x128xf32, #tpu.memory_space<vmem>>, vector<32x32xf32>
    %c96_214 = arith.constant 96 : index
    %c480_215 = arith.constant 480 : index
    %136 = vector.load %arg16[%c96_214, %c480_215] : memref<128x512xf32, #tpu.memory_space<vmem>>, vector<32x32xf32>
    tpu.vector_store %arg16[%c96_214, %c480_215], %135 {strides = array<i32>} : memref<128x512xf32, #tpu.memory_space<vmem>>, vector<32x32xf32>,
    %c0_216 = arith.constant 0 : index
    %c0_217 = arith.constant 0 : index
    %137 = vector.load %arg16[%c0_216, %c0_217] : memref<128x512xf32, #tpu.memory_space<vmem>>, vector<128x512xf32>
    %c0_218 = arith.constant 0 : index
    %c0_219 = arith.constant 0 : index
    %138 = vector.load %arg4[%c0_218, %c0_219] : memref<512x128xf32, #tpu.memory_space<vmem>>, vector<512x128xf32>
    %cst_220 = arith.constant dense<0.000000e+00> : vector<128x128xf32>
    %139 = tpu.matmul %137, %138, %cst_220 {dimension_numbers = #tpu.dot_dimension_numbers<[1], [0], [0], [1], [0, 0, 1, 1], [], []>} : vector<128x512xf32>, vector<512x128xf32>, vector<128x128xf32> -> vector<128x128xf32>
    %c0_221 = arith.constant 0 : index
    %c0_222 = arith.constant 0 : index
    %140 = vector.load %arg5[%c0_221, %c0_222] : memref<1x128xf32, #tpu.memory_space<vmem>>, vector<1x128xf32>
    %141 = vector.broadcast %140 : vector<1x128xf32> to vector<128x128xf32>
    %142 = arith.addf %139, %141 : vector<128x128xf32>
    %cst_223 = arith.constant 0.000000e+00 : f32
    %143 = vector.broadcast %cst_223 : f32 to vector<128x128xf32>
    %144 = arith.maximumf %142, %143 : vector<128x128xf32>
    %c0_224 = arith.constant 0 : index
    %c0_225 = arith.constant 0 : index
    %145 = vector.load %arg17[%c0_224, %c0_225] : memref<128x128xf32, #tpu.memory_space<vmem>>, vector<128x128xf32>
    tpu.vector_store %arg17[%c0_224, %c0_225], %144 {strides = array<i32>} : memref<128x128xf32, #tpu.memory_space<vmem>>, vector<128x128xf32>,
    %c0_226 = arith.constant 0 : index
    %c0_227 = arith.constant 0 : index
    %146 = vector.load %arg17[%c0_226, %c0_227] : memref<128x128xf32, #tpu.memory_space<vmem>>, vector<16x64xf32>
    %c0_228 = arith.constant 0 : index
    %c0_229 = arith.constant 0 : index
    %147 = vector.load %arg18[%c0_228, %c0_229] : memref<32x576xf32, #tpu.memory_space<vmem>>, vector<16x64xf32>
    tpu.vector_store %arg18[%c0_228, %c0_229], %146 {strides = array<i32>} : memref<32x576xf32, #tpu.memory_space<vmem>>, vector<16x64xf32>,
    %c32_230 = arith.constant 32 : index
    %c0_231 = arith.constant 0 : index
    %148 = vector.load %arg17[%c32_230, %c0_231] : memref<128x128xf32, #tpu.memory_space<vmem>>, vector<16x64xf32>
    %c16 = arith.constant 16 : index
    %c0_232 = arith.constant 0 : index
    %149 = vector.load %arg18[%c16, %c0_232] : memref<32x576xf32, #tpu.memory_space<vmem>>, vector<16x64xf32>
    tpu.vector_store %arg18[%c16, %c0_232], %148 {strides = array<i32>} : memref<32x576xf32, #tpu.memory_space<vmem>>, vector<16x64xf32>,
    %c8_233 = arith.constant 8 : index
    %c64_234 = arith.constant 64 : index
    %150 = vector.load %arg17[%c8_233, %c64_234] : memref<128x128xf32, #tpu.memory_space<vmem>>, vector<16x64xf32>
    %c0_235 = arith.constant 0 : index
    %c64_236 = arith.constant 64 : index
    %151 = vector.load %arg18[%c0_235, %c64_236] : memref<32x576xf32, #tpu.memory_space<vmem>>, vector<16x64xf32>
    tpu.vector_store %arg18[%c0_235, %c64_236], %150 {strides = array<i32>} : memref<32x576xf32, #tpu.memory_space<vmem>>, vector<16x64xf32>,
    %c40_237 = arith.constant 40 : index
    %c64_238 = arith.constant 64 : index
    %152 = vector.load %arg17[%c40_237, %c64_238] : memref<128x128xf32, #tpu.memory_space<vmem>>, vector<16x64xf32>
    %c16_239 = arith.constant 16 : index
    %c64_240 = arith.constant 64 : index
    %153 = vector.load %arg18[%c16_239, %c64_240] : memref<32x576xf32, #tpu.memory_space<vmem>>, vector<16x64xf32>
    tpu.vector_store %arg18[%c16_239, %c64_240], %152 {strides = array<i32>} : memref<32x576xf32, #tpu.memory_space<vmem>>, vector<16x64xf32>,
    %c16_241 = arith.constant 16 : index
    %c0_242 = arith.constant 0 : index
    %154 = vector.load %arg17[%c16_241, %c0_242] : memref<128x128xf32, #tpu.memory_space<vmem>>, vector<16x64xf32>
    %c0_243 = arith.constant 0 : index
    %c128_244 = arith.constant 128 : index
    %155 = vector.load %arg18[%c0_243, %c128_244] : memref<32x576xf32, #tpu.memory_space<vmem>>, vector<16x64xf32>
    tpu.vector_store %arg18[%c0_243, %c128_244], %154 {strides = array<i32>} : memref<32x576xf32, #tpu.memory_space<vmem>>, vector<16x64xf32>,
    %c48_245 = arith.constant 48 : index
    %c0_246 = arith.constant 0 : index
    %156 = vector.load %arg17[%c48_245, %c0_246] : memref<128x128xf32, #tpu.memory_space<vmem>>, vector<16x64xf32>
    %c16_247 = arith.constant 16 : index
    %c128_248 = arith.constant 128 : index
    %157 = vector.load %arg18[%c16_247, %c128_248] : memref<32x576xf32, #tpu.memory_space<vmem>>, vector<16x64xf32>
    tpu.vector_store %arg18[%c16_247, %c128_248], %156 {strides = array<i32>} : memref<32x576xf32, #tpu.memory_space<vmem>>, vector<16x64xf32>,
    %c32_249 = arith.constant 32 : index
    %c64_250 = arith.constant 64 : index
    %158 = vector.load %arg17[%c32_249, %c64_250] : memref<128x128xf32, #tpu.memory_space<vmem>>, vector<16x64xf32>
    %c0_251 = arith.constant 0 : index
    %c192_252 = arith.constant 192 : index
    %159 = vector.load %arg18[%c0_251, %c192_252] : memref<32x576xf32, #tpu.memory_space<vmem>>, vector<16x64xf32>
    tpu.vector_store %arg18[%c0_251, %c192_252], %158 {strides = array<i32>} : memref<32x576xf32, #tpu.memory_space<vmem>>, vector<16x64xf32>,
    %c64_253 = arith.constant 64 : index
    %c64_254 = arith.constant 64 : index
    %160 = vector.load %arg17[%c64_253, %c64_254] : memref<128x128xf32, #tpu.memory_space<vmem>>, vector<16x64xf32>
    %c16_255 = arith.constant 16 : index
    %c192_256 = arith.constant 192 : index
    %161 = vector.load %arg18[%c16_255, %c192_256] : memref<32x576xf32, #tpu.memory_space<vmem>>, vector<16x64xf32>
    tpu.vector_store %arg18[%c16_255, %c192_256], %160 {strides = array<i32>} : memref<32x576xf32, #tpu.memory_space<vmem>>, vector<16x64xf32>,
    %c40_257 = arith.constant 40 : index
    %c0_258 = arith.constant 0 : index
    %162 = vector.load %arg17[%c40_257, %c0_258] : memref<128x128xf32, #tpu.memory_space<vmem>>, vector<16x64xf32>
    %c0_259 = arith.constant 0 : index
    %c256_260 = arith.constant 256 : index
    %163 = vector.load %arg18[%c0_259, %c256_260] : memref<32x576xf32, #tpu.memory_space<vmem>>, vector<16x64xf32>
    tpu.vector_store %arg18[%c0_259, %c256_260], %162 {strides = array<i32>} : memref<32x576xf32, #tpu.memory_space<vmem>>, vector<16x64xf32>,
    %c72 = arith.constant 72 : index
    %c0_261 = arith.constant 0 : index
    %164 = vector.load %arg17[%c72, %c0_261] : memref<128x128xf32, #tpu.memory_space<vmem>>, vector<16x64xf32>
    %c16_262 = arith.constant 16 : index
    %c256_263 = arith.constant 256 : index
    %165 = vector.load %arg18[%c16_262, %c256_263] : memref<32x576xf32, #tpu.memory_space<vmem>>, vector<16x64xf32>
    tpu.vector_store %arg18[%c16_262, %c256_263], %164 {strides = array<i32>} : memref<32x576xf32, #tpu.memory_space<vmem>>, vector<16x64xf32>,
    %c48_264 = arith.constant 48 : index
    %c64_265 = arith.constant 64 : index
    %166 = vector.load %arg17[%c48_264, %c64_265] : memref<128x128xf32, #tpu.memory_space<vmem>>, vector<16x64xf32>
    %c0_266 = arith.constant 0 : index
    %c320_267 = arith.constant 320 : index
    %167 = vector.load %arg18[%c0_266, %c320_267] : memref<32x576xf32, #tpu.memory_space<vmem>>, vector<16x64xf32>
    tpu.vector_store %arg18[%c0_266, %c320_267], %166 {strides = array<i32>} : memref<32x576xf32, #tpu.memory_space<vmem>>, vector<16x64xf32>,
    %c80_268 = arith.constant 80 : index
    %c64_269 = arith.constant 64 : index
    %168 = vector.load %arg17[%c80_268, %c64_269] : memref<128x128xf32, #tpu.memory_space<vmem>>, vector<16x64xf32>
    %c16_270 = arith.constant 16 : index
    %c320_271 = arith.constant 320 : index
    %169 = vector.load %arg18[%c16_270, %c320_271] : memref<32x576xf32, #tpu.memory_space<vmem>>, vector<16x64xf32>
    tpu.vector_store %arg18[%c16_270, %c320_271], %168 {strides = array<i32>} : memref<32x576xf32, #tpu.memory_space<vmem>>, vector<16x64xf32>,
    %c64_272 = arith.constant 64 : index
    %c0_273 = arith.constant 0 : index
    %170 = vector.load %arg17[%c64_272, %c0_273] : memref<128x128xf32, #tpu.memory_space<vmem>>, vector<16x64xf32>
    %c0_274 = arith.constant 0 : index
    %c384_275 = arith.constant 384 : index
    %171 = vector.load %arg18[%c0_274, %c384_275] : memref<32x576xf32, #tpu.memory_space<vmem>>, vector<16x64xf32>
    tpu.vector_store %arg18[%c0_274, %c384_275], %170 {strides = array<i32>} : memref<32x576xf32, #tpu.memory_space<vmem>>, vector<16x64xf32>,
    %c96_276 = arith.constant 96 : index
    %c0_277 = arith.constant 0 : index
    %172 = vector.load %arg17[%c96_276, %c0_277] : memref<128x128xf32, #tpu.memory_space<vmem>>, vector<16x64xf32>
    %c16_278 = arith.constant 16 : index
    %c384_279 = arith.constant 384 : index
    %173 = vector.load %arg18[%c16_278, %c384_279] : memref<32x576xf32, #tpu.memory_space<vmem>>, vector<16x64xf32>
    tpu.vector_store %arg18[%c16_278, %c384_279], %172 {strides = array<i32>} : memref<32x576xf32, #tpu.memory_space<vmem>>, vector<16x64xf32>,
    %c72_280 = arith.constant 72 : index
    %c64_281 = arith.constant 64 : index
    %174 = vector.load %arg17[%c72_280, %c64_281] : memref<128x128xf32, #tpu.memory_space<vmem>>, vector<16x64xf32>
    %c0_282 = arith.constant 0 : index
    %c448_283 = arith.constant 448 : index
    %175 = vector.load %arg18[%c0_282, %c448_283] : memref<32x576xf32, #tpu.memory_space<vmem>>, vector<16x64xf32>
    tpu.vector_store %arg18[%c0_282, %c448_283], %174 {strides = array<i32>} : memref<32x576xf32, #tpu.memory_space<vmem>>, vector<16x64xf32>,
    %c104 = arith.constant 104 : index
    %c64_284 = arith.constant 64 : index
    %176 = vector.load %arg17[%c104, %c64_284] : memref<128x128xf32, #tpu.memory_space<vmem>>, vector<16x64xf32>
    %c16_285 = arith.constant 16 : index
    %c448_286 = arith.constant 448 : index
    %177 = vector.load %arg18[%c16_285, %c448_286] : memref<32x576xf32, #tpu.memory_space<vmem>>, vector<16x64xf32>
    tpu.vector_store %arg18[%c16_285, %c448_286], %176 {strides = array<i32>} : memref<32x576xf32, #tpu.memory_space<vmem>>, vector<16x64xf32>,
    %c80_287 = arith.constant 80 : index
    %c0_288 = arith.constant 0 : index
    %178 = vector.load %arg17[%c80_287, %c0_288] : memref<128x128xf32, #tpu.memory_space<vmem>>, vector<16x64xf32>
    %c0_289 = arith.constant 0 : index
    %c512 = arith.constant 512 : index
    %179 = vector.load %arg18[%c0_289, %c512] : memref<32x576xf32, #tpu.memory_space<vmem>>, vector<16x64xf32>
    tpu.vector_store %arg18[%c0_289, %c512], %178 {strides = array<i32>} : memref<32x576xf32, #tpu.memory_space<vmem>>, vector<16x64xf32>,
    %c112 = arith.constant 112 : index
    %c0_290 = arith.constant 0 : index
    %180 = vector.load %arg17[%c112, %c0_290] : memref<128x128xf32, #tpu.memory_space<vmem>>, vector<16x64xf32>
    %c16_291 = arith.constant 16 : index
    %c512_292 = arith.constant 512 : index
    %181 = vector.load %arg18[%c16_291, %c512_292] : memref<32x576xf32, #tpu.memory_space<vmem>>, vector<16x64xf32>
    tpu.vector_store %arg18[%c16_291, %c512_292], %180 {strides = array<i32>} : memref<32x576xf32, #tpu.memory_space<vmem>>, vector<16x64xf32>,
    %c0_293 = arith.constant 0 : index
    %c0_294 = arith.constant 0 : index
    %182 = vector.load %arg18[%c0_293, %c0_294] : memref<32x576xf32, #tpu.memory_space<vmem>>, vector<32x576xf32>
    %c0_295 = arith.constant 0 : index
    %c0_296 = arith.constant 0 : index
    %183 = vector.load %arg6[%c0_295, %c0_296] : memref<576x64xf32, #tpu.memory_space<vmem>>, vector<576x64xf32>
    %cst_297 = arith.constant dense<0.000000e+00> : vector<32x64xf32>
    %184 = tpu.matmul %182, %183, %cst_297 {dimension_numbers = #tpu.dot_dimension_numbers<[1], [0], [0], [1], [0, 0, 1, 1], [], []>} : vector<32x576xf32>, vector<576x64xf32>, vector<32x64xf32> -> vector<32x64xf32>
    %c0_298 = arith.constant 0 : index
    %c0_299 = arith.constant 0 : index
    %185 = vector.load %arg7[%c0_298, %c0_299] : memref<1x64xf32, #tpu.memory_space<vmem>>, vector<1x64xf32>
    %186 = vector.broadcast %185 : vector<1x64xf32> to vector<32x64xf32>
    %187 = arith.addf %184, %186 : vector<32x64xf32>
    %cst_300 = arith.constant 0.000000e+00 : f32
    %188 = vector.broadcast %cst_300 : f32 to vector<32x64xf32>
    %189 = arith.maximumf %187, %188 : vector<32x64xf32>
    %190 = vector.extract_strided_slice %189 {offsets = [0, 0], sizes = [8, 64], strides = [1, 1]} : vector<32x64xf32> to vector<8x64xf32>
    %191 = vector.extract_strided_slice %189 {offsets = [8, 0], sizes = [8, 64], strides = [1, 1]} : vector<32x64xf32> to vector<8x64xf32>
    %192 = vector.extract_strided_slice %189 {offsets = [16, 0], sizes = [8, 64], strides = [1, 1]} : vector<32x64xf32> to vector<8x64xf32>
    %193 = vector.extract_strided_slice %189 {offsets = [24, 0], sizes = [8, 64], strides = [1, 1]} : vector<32x64xf32> to vector<8x64xf32>
    %194 = tpu.concatenate %190, %191, %192, %193 in 1 : vector<8x64xf32>, vector<8x64xf32>, vector<8x64xf32>, vector<8x64xf32> -> vector<8x256xf32>
    %c0_301 = arith.constant 0 : index
    %c0_302 = arith.constant 0 : index
    %195 = vector.load %arg8[%c0_301, %c0_302] : memref<256x64xf32, #tpu.memory_space<vmem>>, vector<256x64xf32>
    %cst_303 = arith.constant dense<0.000000e+00> : vector<8x64xf32>
    %196 = tpu.matmul %194, %195, %cst_303 {dimension_numbers = #tpu.dot_dimension_numbers<[1], [0], [0], [1], [0, 0, 1, 1], [], []>} : vector<8x256xf32>, vector<256x64xf32>, vector<8x64xf32> -> vector<8x64xf32>
    %c0_304 = arith.constant 0 : index
    %c0_305 = arith.constant 0 : index
    %197 = vector.load %arg9[%c0_304, %c0_305] : memref<1x64xf32, #tpu.memory_space<vmem>>, vector<1x64xf32>
    %198 = vector.broadcast %197 : vector<1x64xf32> to vector<8x64xf32>
    %199 = arith.addf %196, %198 : vector<8x64xf32>
    %cst_306 = arith.constant 0.000000e+00 : f32
    %200 = vector.broadcast %cst_306 : f32 to vector<8x64xf32>
    %201 = arith.maximumf %199, %200 : vector<8x64xf32>
    %c0_307 = arith.constant 0 : index
    %c0_308 = arith.constant 0 : index
    %202 = vector.load %arg10[%c0_307, %c0_308] : memref<64x32xf32, #tpu.memory_space<vmem>>, vector<64x32xf32>
    %cst_309 = arith.constant dense<0.000000e+00> : vector<8x32xf32>
    %203 = tpu.matmul %201, %202, %cst_309 {dimension_numbers = #tpu.dot_dimension_numbers<[1], [0], [0], [1], [0, 0, 1, 1], [], []>} : vector<8x64xf32>, vector<64x32xf32>, vector<8x32xf32> -> vector<8x32xf32>
    %c0_310 = arith.constant 0 : index
    %c0_311 = arith.constant 0 : index
    %204 = vector.load %arg11[%c0_310, %c0_311] : memref<1x32xf32, #tpu.memory_space<vmem>>, vector<1x32xf32>
    %205 = vector.broadcast %204 : vector<1x32xf32> to vector<8x32xf32>
    %206 = arith.addf %203, %205 : vector<8x32xf32>
    %cst_312 = arith.constant 0.000000e+00 : f32
    %207 = vector.broadcast %cst_312 : f32 to vector<8x32xf32>
    %208 = arith.maximumf %206, %207 : vector<8x32xf32>
    %c0_313 = arith.constant 0 : index
    %c0_314 = arith.constant 0 : index
    %209 = vector.load %arg12[%c0_313, %c0_314] : memref<32x3xf32, #tpu.memory_space<vmem>>, vector<32x3xf32>
    %cst_315 = arith.constant dense<0.000000e+00> : vector<8x3xf32>
    %210 = tpu.matmul %208, %209, %cst_315 {dimension_numbers = #tpu.dot_dimension_numbers<[1], [0], [0], [1], [0, 0, 1, 1], [], []>} : vector<8x32xf32>, vector<32x3xf32>, vector<8x3xf32> -> vector<8x3xf32>
    %c0_316 = arith.constant 0 : index
    %c0_317 = arith.constant 0 : index
    %211 = vector.load %arg13[%c0_316, %c0_317] : memref<1x3xf32, #tpu.memory_space<vmem>>, vector<1x3xf32>
    %212 = vector.broadcast %211 : vector<1x3xf32> to vector<8x3xf32>
    %213 = arith.addf %210, %212 : vector<8x3xf32>
    %c0_318 = arith.constant 0 : index
    %c0_319 = arith.constant 0 : index
    %214 = vector.load %arg14[%c0_318, %c0_319] : memref<8x3xf32, #tpu.memory_space<vmem>>, vector<8x3xf32>
    tpu.vector_store %arg14[%c0_318, %c0_319], %213 {strides = array<i32>} : memref<8x3xf32, #tpu.memory_space<vmem>>, vector<8x3xf32>,
    return
  }
  func.func @transform_0(%arg0: i32) -> (i32, i32) {
    %c0_i32 = arith.constant 0 : i32
    %c0_i32_0 = arith.constant 0 : i32
    %c0_i32_1 = arith.constant 0 : i32
    return %c0_i32, %c0_i32_0 : i32, i32
  }
  func.func @transform_1(%arg0: i32) -> (i32, i32) {
    %c0_i32 = arith.constant 0 : i32
    %c0_i32_0 = arith.constant 0 : i32
    %c0_i32_1 = arith.constant 0 : i32
    return %c0_i32, %c0_i32_0 : i32, i32
  }
  func.func @transform_2(%arg0: i32) -> (i32, i32) {
    %c0_i32 = arith.constant 0 : i32
    %c0_i32_0 = arith.constant 0 : i32
    %c0_i32_1 = arith.constant 0 : i32
    return %c0_i32, %c0_i32_0 : i32, i32
  }
  func.func @transform_3(%arg0: i32) -> (i32, i32) {
    %c0_i32 = arith.constant 0 : i32
    %c0_i32_0 = arith.constant 0 : i32
    %c0_i32_1 = arith.constant 0 : i32
    return %c0_i32, %c0_i32_0 : i32, i32
  }
  func.func @transform_4(%arg0: i32) -> (i32, i32) {
    %c0_i32 = arith.constant 0 : i32
    %c0_i32_0 = arith.constant 0 : i32
    %c0_i32_1 = arith.constant 0 : i32
    return %c0_i32, %c0_i32_0 : i32, i32
  }
  func.func @transform_5(%arg0: i32) -> (i32, i32) {
    %c0_i32 = arith.constant 0 : i32
    %c0_i32_0 = arith.constant 0 : i32
    %c0_i32_1 = arith.constant 0 : i32
    return %c0_i32, %c0_i32_0 : i32, i32
  }
  func.func @transform_6(%arg0: i32) -> (i32, i32) {
    %c0_i32 = arith.constant 0 : i32
    %c0_i32_0 = arith.constant 0 : i32
    %c0_i32_1 = arith.constant 0 : i32
    return %c0_i32, %c0_i32_0 : i32, i32
  }
  func.func @transform_7(%arg0: i32) -> (i32, i32) {
    %c0_i32 = arith.constant 0 : i32
    %c0_i32_0 = arith.constant 0 : i32
    %c0_i32_1 = arith.constant 0 : i32
    return %c0_i32, %c0_i32_0 : i32, i32
  }
  func.func @transform_8(%arg0: i32) -> (i32, i32) {
    %c0_i32 = arith.constant 0 : i32
    %c0_i32_0 = arith.constant 0 : i32
    %c0_i32_1 = arith.constant 0 : i32
    return %c0_i32, %c0_i32_0 : i32, i32
  }
  func.func @transform_9(%arg0: i32) -> (i32, i32) {
    %c0_i32 = arith.constant 0 : i32
    %c0_i32_0 = arith.constant 0 : i32
    %c0_i32_1 = arith.constant 0 : i32
    return %c0_i32, %c0_i32_0 : i32, i32
  }
  func.func @transform_10(%arg0: i32) -> (i32, i32) {
    %c0_i32 = arith.constant 0 : i32
    %c0_i32_0 = arith.constant 0 : i32
    %c0_i32_1 = arith.constant 0 : i32
    return %c0_i32, %c0_i32_0 : i32, i32
  }
  func.func @transform_11(%arg0: i32) -> (i32, i32) {
    %c0_i32 = arith.constant 0 : i32
    %c0_i32_0 = arith.constant 0 : i32
    %c0_i32_1 = arith.constant 0 : i32
    return %c0_i32, %c0_i32_0 : i32, i32
  }
  func.func @transform_12(%arg0: i32) -> (i32, i32) {
    %c0_i32 = arith.constant 0 : i32
    %c0_i32_0 = arith.constant 0 : i32
    %c0_i32_1 = arith.constant 0 : i32
    return %c0_i32, %c0_i32_0 : i32, i32
  }
  func.func @transform_13(%arg0: i32) -> (i32, i32) {
    %c0_i32 = arith.constant 0 : i32
    %c0_i32_0 = arith.constant 0 : i32
    %c0_i32_1 = arith.constant 0 : i32
    return %c0_i32, %c0_i32_0 : i32, i32
  }
}

</mosaic_0001>

<llo_original>
// kernel: dqn_forward.1
$region0: #{dqn_forward.1}
  #allocation0 [shape = 'u32[]', space=smem, size = 0x4, offset = 0x4, fixed_abs, tag = 'smem constant byte address 0x4 - core index']
  #allocation1 [shape = 'u32[72,128]{1,0:T(1,128)}', space=vmem, size = 0x9000, scoped, tag = 'internal scratch']
  #allocation2 [shape = 'f32[800,128]{1,0:T(8,128)}', space=vmem, size = 0x64000, scoped, tag = 'scratch operand']
  #allocation3 [shape = 'f32[128,512]{1,0:T(8,128)}', space=vmem, size = 0x40000, scoped, tag = 'scratch operand']
  #allocation4 [shape = 'f32[128,128]{1,0:T(8,128)}', space=vmem, size = 0x10000, scoped, tag = 'scratch operand']
  #allocation5 [shape = 'f32[32,576]{1,0:T(8,128)}', space=vmem, size = 0x14000, scoped, tag = 'scratch operand']
  %s0 = inlined_call_operand.vmem [shape: f32[800,64], index: 0, kind: input, shape index: {}]
  %s1 = inlined_call_operand.vmem [shape: f32[64,128], index: 1, kind: input, shape index: {}]
  %s2 = inlined_call_operand.vmem [shape: f32[1,128], index: 2, kind: input, shape index: {}]
  %s3 = inlined_call_operand.vmem [shape: f32[512,128], index: 3, kind: input, shape index: {}]
  %s4 = inlined_call_operand.vmem [shape: f32[1,128], index: 4, kind: input, shape index: {}]
  %s5 = inlined_call_operand.vmem [shape: f32[576,64], index: 5, kind: input, shape index: {}]
  %s6 = inlined_call_operand.vmem [shape: f32[1,64], index: 6, kind: input, shape index: {}]
  %s7 = inlined_call_operand.vmem [shape: f32[256,64], index: 7, kind: input, shape index: {}]
  %s8 = inlined_call_operand.vmem [shape: f32[1,64], index: 8, kind: input, shape index: {}]
  %s9 = inlined_call_operand.vmem [shape: f32[64,32], index: 9, kind: input, shape index: {}]
  %s10 = inlined_call_operand.vmem [shape: f32[1,32], index: 10, kind: input, shape index: {}]
  %s11 = inlined_call_operand.vmem [shape: f32[32,3], index: 11, kind: input, shape index: {}]
  %s12 = inlined_call_operand.vmem [shape: f32[1,3], index: 12, kind: input, shape index: {}]
  %s13 = inlined_call_operand.vmem [shape: f32[8,3], index: 13, kind: output, shape index: {}]
  %s14 = sld [smem:[#allocation0]]
  $region62: #{dqn_forward.1} parent=0
    _
  %s16 = ssub.s32 1, %s14
  %s17 = scalar_select 0, %s16, %s14
  // Predicated region
  $region2: #{dqn_forward.1} parent=0 // pred_check
    _
  $region3: #{dqn_forward.1} parent=0 // pred_check_branch
    %19 = sbr.rel (0) target = $region5
  $region4: #{dqn_forward.1} parent=0 // pred_region
    _
  $region5: #{dqn_forward.1} parent=0 // pred_fallthru
    _
  // Predicated region
  $region6: #{dqn_forward.1} parent=0 // pred_check
    _
  $region7: #{dqn_forward.1} parent=0 // pred_check_branch
    %21 = sbr.rel (0) target = $region9
  $region8: #{dqn_forward.1} parent=0 // pred_region
    _
  $region9: #{dqn_forward.1} parent=0 // pred_fallthru
    _
  // Predicated region
  $region10: #{dqn_forward.1} parent=0 // pred_check
    _
  $region11: #{dqn_forward.1} parent=0 // pred_check_branch
    %23 = sbr.rel (0) target = $region13
  $region12: #{dqn_forward.1} parent=0 // pred_region
    _
  $region13: #{dqn_forward.1} parent=0 // pred_fallthru
    _
  // Predicated region
  $region14: #{dqn_forward.1} parent=0 // pred_check
    _
  $region15: #{dqn_forward.1} parent=0 // pred_check_branch
    %25 = sbr.rel (0) target = $region17
  $region16: #{dqn_forward.1} parent=0 // pred_region
    _
  $region17: #{dqn_forward.1} parent=0 // pred_fallthru
    _
  // Predicated region
  $region18: #{dqn_forward.1} parent=0 // pred_check
    _
  $region19: #{dqn_forward.1} parent=0 // pred_check_branch
    %27 = sbr.rel (0) target = $region21
  $region20: #{dqn_forward.1} parent=0 // pred_region
    _
  $region21: #{dqn_forward.1} parent=0 // pred_fallthru
    _
  // Predicated region
  $region22: #{dqn_forward.1} parent=0 // pred_check
    _
  $region23: #{dqn_forward.1} parent=0 // pred_check_branch
    %29 = sbr.rel (0) target = $region25
  $region24: #{dqn_forward.1} parent=0 // pred_region
    _
  $region25: #{dqn_forward.1} parent=0 // pred_fallthru
    _
  // Predicated region
  $region26: #{dqn_forward.1} parent=0 // pred_check
    _
  $region27: #{dqn_forward.1} parent=0 // pred_check_branch
    %31 = sbr.rel (0) target = $region29
  $region28: #{dqn_forward.1} parent=0 // pred_region
    _
  $region29: #{dqn_forward.1} parent=0 // pred_fallthru
    _
  // Predicated region
  $region30: #{dqn_forward.1} parent=0 // pred_check
    _
  $region31: #{dqn_forward.1} parent=0 // pred_check_branch
    %33 = sbr.rel (0) target = $region33
  $region32: #{dqn_forward.1} parent=0 // pred_region
    _
  $region33: #{dqn_forward.1} parent=0 // pred_fallthru
    _
  // Predicated region
  $region34: #{dqn_forward.1} parent=0 // pred_check
    _
  $region35: #{dqn_forward.1} parent=0 // pred_check_branch
    %35 = sbr.rel (0) target = $region37
  $region36: #{dqn_forward.1} parent=0 // pred_region
    _
  $region37: #{dqn_forward.1} parent=0 // pred_fallthru
    _
  // Predicated region
  $region38: #{dqn_forward.1} parent=0 // pred_check
    _
  $region39: #{dqn_forward.1} parent=0 // pred_check_branch
    %37 = sbr.rel (0) target = $region41
  $region40: #{dqn_forward.1} parent=0 // pred_region
    _
  $region41: #{dqn_forward.1} parent=0 // pred_fallthru
    _
  // Predicated region
  $region42: #{dqn_forward.1} parent=0 // pred_check
    _
  $region43: #{dqn_forward.1} parent=0 // pred_check_branch
    %39 = sbr.rel (0) target = $region45
  $region44: #{dqn_forward.1} parent=0 // pred_region
    _
  $region45: #{dqn_forward.1} parent=0 // pred_fallthru
    _
  // Predicated region
  $region46: #{dqn_forward.1} parent=0 // pred_check
    _
  $region47: #{dqn_forward.1} parent=0 // pred_check_branch
    %41 = sbr.rel (0) target = $region49
  $region48: #{dqn_forward.1} parent=0 // pred_region
    _
  $region49: #{dqn_forward.1} parent=0 // pred_fallthru
    _
  // Predicated region
  $region50: #{dqn_forward.1} parent=0 // pred_check
    _
  $region51: #{dqn_forward.1} parent=0 // pred_check_branch
    %43 = sbr.rel (0) target = $region53
  $region52: #{dqn_forward.1} parent=0 // pred_region
    _
  $region53: #{dqn_forward.1} parent=0 // pred_fallthru
    _
  %v44 = vld [vmem:[%s0] sm:$0xff]
  %v45 = vld [vmem:[%s0 + $0x8] sm:$0xff]
  %v46 = vld [vmem:[%s0 + $0x10] sm:$0xff]
  %v47 = vld [vmem:[%s0 + $0x18] sm:$0xff]
  %v48 = vld [vmem:[%s0 + $0x20] sm:$0xff]
  %v49 = vld [vmem:[%s0 + $0x28] sm:$0xff]
  %v50 = vld [vmem:[%s0 + $0x30] sm:$0xff]
  %v51 = vld [vmem:[%s0 + $0x38] sm:$0xff]
  %v52 = vld [vmem:[%s0 + $0x40] sm:$0xff]
  %v53 = vld [vmem:[%s0 + $0x48] sm:$0xff]
  %v54 = vld [vmem:[%s0 + $0x50] sm:$0xff]
  %v55 = vld [vmem:[%s0 + $0x58] sm:$0xff]
  %v56 = vld [vmem:[%s0 + $0x60] sm:$0xff]
  %v57 = vld [vmem:[%s0 + $0x68] sm:$0xff]
  %v58 = vld [vmem:[%s0 + $0x70] sm:$0xff]
  %v59 = vld [vmem:[%s0 + $0x78] sm:$0xff]
  %v60 = vld [vmem:[%s0 + $0x80] sm:$0xff]
  %v61 = vld [vmem:[%s0 + $0x88] sm:$0xff]
  %v62 = vld [vmem:[%s0 + $0x90] sm:$0xff]
  %v63 = vld [vmem:[%s0 + $0x98] sm:$0xff]
  %v64 = vld [vmem:[%s0 + $0xa0] sm:$0xff]
  %v65 = vld [vmem:[%s0 + $0xa8] sm:$0xff]
  %v66 = vld [vmem:[%s0 + $0xb0] sm:$0xff]
  %v67 = vld [vmem:[%s0 + $0xb8] sm:$0xff]
  %v68 = vld [vmem:[%s0 + $0xc0] sm:$0xff]
  %v69 = vld [vmem:[%s0 + $0xc8] sm:$0xff]
  %v70 = vld [vmem:[%s0 + $0xd0] sm:$0xff]
  %v71 = vld [vmem:[%s0 + $0xd8] sm:$0xff]
  %v72 = vld [vmem:[%s0 + $0xe0] sm:$0xff]
  %v73 = vld [vmem:[%s0 + $0xe8] sm:$0xff]
  %v74 = vld [vmem:[%s0 + $0xf0] sm:$0xff]
  %v75 = vld [vmem:[%s0 + $0xf8] sm:$0xff]
  %v76 = vld [vmem:[%s0 + $0x100] sm:$0xff]
  %v77 = vld [vmem:[%s0 + $0x108] sm:$0xff]
  %v78 = vld [vmem:[%s0 + $0x110] sm:$0xff]
  %v79 = vld [vmem:[%s0 + $0x118] sm:$0xff]
  %v80 = vld [vmem:[%s0 + $0x120] sm:$0xff]
  %v81 = vld [vmem:[%s0 + $0x128] sm:$0xff]
  %v82 = vld [vmem:[%s0 + $0x130] sm:$0xff]
  %v83 = vld [vmem:[%s0 + $0x138] sm:$0xff]
  %v84 = vld [vmem:[%s0 + $0x140] sm:$0xff]
  %v85 = vld [vmem:[%s0 + $0x148] sm:$0xff]
  %v86 = vld [vmem:[%s0 + $0x150] sm:$0xff]
  %v87 = vld [vmem:[%s0 + $0x158] sm:$0xff]
  %v88 = vld [vmem:[%s0 + $0x160] sm:$0xff]
  %v89 = vld [vmem:[%s0 + $0x168] sm:$0xff]
  %v90 = vld [vmem:[%s0 + $0x170] sm:$0xff]
  %v91 = vld [vmem:[%s0 + $0x178] sm:$0xff]
  %v92 = vld [vmem:[%s0 + $0x180] sm:$0xff]
  %v93 = vld [vmem:[%s0 + $0x188] sm:$0xff]
  %v94 = vld [vmem:[%s0 + $0x190] sm:$0xff]
  %v95 = vld [vmem:[%s0 + $0x198] sm:$0xff]
  %v96 = vld [vmem:[%s0 + $0x1a0] sm:$0xff]
  %v97 = vld [vmem:[%s0 + $0x1a8] sm:$0xff]
  %v98 = vld [vmem:[%s0 + $0x1b0] sm:$0xff]
  %v99 = vld [vmem:[%s0 + $0x1b8] sm:$0xff]
  %v100 = vld [vmem:[%s0 + $0x1c0] sm:$0xff]
  %v101 = vld [vmem:[%s0 + $0x1c8] sm:$0xff]
  %v102 = vld [vmem:[%s0 + $0x1d0] sm:$0xff]
  %v103 = vld [vmem:[%s0 + $0x1d8] sm:$0xff]
  %v104 = vld [vmem:[%s0 + $0x1e0] sm:$0xff]
  %v105 = vld [vmem:[%s0 + $0x1e8] sm:$0xff]
  %v106 = vld [vmem:[%s0 + $0x1f0] sm:$0xff]
  %v107 = vld [vmem:[%s0 + $0x1f8] sm:$0xff]
  %v108 = vld [vmem:[%s0 + $0x200] sm:$0xff]
  %v109 = vld [vmem:[%s0 + $0x208] sm:$0xff]
  %v110 = vld [vmem:[%s0 + $0x210] sm:$0xff]
  %v111 = vld [vmem:[%s0 + $0x218] sm:$0xff]
  %v112 = vld [vmem:[%s0 + $0x220] sm:$0xff]
  %v113 = vld [vmem:[%s0 + $0x228] sm:$0xff]
  %v114 = vld [vmem:[%s0 + $0x230] sm:$0xff]
  %v115 = vld [vmem:[%s0 + $0x238] sm:$0xff]
  %v116 = vld [vmem:[%s0 + $0x240] sm:$0xff]
  %v117 = vld [vmem:[%s0 + $0x248] sm:$0xff]
  %v118 = vld [vmem:[%s0 + $0x250] sm:$0xff]
  %v119 = vld [vmem:[%s0 + $0x258] sm:$0xff]
  %v120 = vld [vmem:[%s0 + $0x260] sm:$0xff]
  %v121 = vld [vmem:[%s0 + $0x268] sm:$0xff]
  %v122 = vld [vmem:[%s0 + $0x270] sm:$0xff]
  %v123 = vld [vmem:[%s0 + $0x278] sm:$0xff]
  %v124 = vld [vmem:[%s0 + $0x280] sm:$0xff]
  %v125 = vld [vmem:[%s0 + $0x288] sm:$0xff]
  %v126 = vld [vmem:[%s0 + $0x290] sm:$0xff]
  %v127 = vld [vmem:[%s0 + $0x298] sm:$0xff]
  %v128 = vld [vmem:[%s0 + $0x2a0] sm:$0xff]
  %v129 = vld [vmem:[%s0 + $0x2a8] sm:$0xff]
  %v130 = vld [vmem:[%s0 + $0x2b0] sm:$0xff]
  %v131 = vld [vmem:[%s0 + $0x2b8] sm:$0xff]
  %v132 = vld [vmem:[%s0 + $0x2c0] sm:$0xff]
  %v133 = vld [vmem:[%s0 + $0x2c8] sm:$0xff]
  %v134 = vld [vmem:[%s0 + $0x2d0] sm:$0xff]
  %v135 = vld [vmem:[%s0 + $0x2d8] sm:$0xff]
  %v136 = vld [vmem:[%s0 + $0x2e0] sm:$0xff]
  %v137 = vld [vmem:[%s0 + $0x2e8] sm:$0xff]
  %v138 = vld [vmem:[%s0 + $0x2f0] sm:$0xff]
  %v139 = vld [vmem:[%s0 + $0x2f8] sm:$0xff]
  %v140 = vld [vmem:[%s0 + $0x300] sm:$0xff]
  %v141 = vld [vmem:[%s0 + $0x308] sm:$0xff]
  %v142 = vld [vmem:[%s0 + $0x310] sm:$0xff]
  %v143 = vld [vmem:[%s0 + $0x318] sm:$0xff]
  %v144 = vld [vmem:[%s1] sm:$0xff]
  %v145 = vld [vmem:[%s1 + $0x8] sm:$0xff]
  %v146 = vld [vmem:[%s1 + $0x10] sm:$0xff]
  %v147 = vld [vmem:[%s1 + $0x18] sm:$0xff]
  %v148 = vld [vmem:[%s1 + $0x20] sm:$0xff]
  %v149 = vld [vmem:[%s1 + $0x28] sm:$0xff]
  %v150 = vld [vmem:[%s1 + $0x30] sm:$0xff]
  %v151 = vld [vmem:[%s1 + $0x38] sm:$0xff]
  %v152 = vld [vmem:[%s2] sm:$0x1]
  %v154 = vperm.slane %v152, 0
  %vm156 = vcmask 523264
  %v158 = vsel %vm156, %v44, 0
  %v161 = vsel %vm156, %v45, 0
  %v164 = vsel %vm156, %v46, 0
  %v167 = vsel %vm156, %v47, 0
  %v170 = vsel %vm156, %v48, 0
  %v173 = vsel %vm156, %v49, 0
  %v176 = vsel %vm156, %v50, 0
  %v179 = vsel %vm156, %v51, 0
  %v182 = vsel %vm156, %v52, 0
  %v185 = vsel %vm156, %v53, 0
  %v188 = vsel %vm156, %v54, 0
  %v191 = vsel %vm156, %v55, 0
  %v194 = vsel %vm156, %v56, 0
  %v197 = vsel %vm156, %v57, 0
  %v200 = vsel %vm156, %v58, 0
  %v203 = vsel %vm156, %v59, 0
  %v206 = vsel %vm156, %v60, 0
  %v209 = vsel %vm156, %v61, 0
  %v212 = vsel %vm156, %v62, 0
  %v215 = vsel %vm156, %v63, 0
  %v218 = vsel %vm156, %v64, 0
  %v221 = vsel %vm156, %v65, 0
  %v224 = vsel %vm156, %v66, 0
  %v227 = vsel %vm156, %v67, 0
  %v230 = vsel %vm156, %v68, 0
  %v233 = vsel %vm156, %v69, 0
  %v236 = vsel %vm156, %v70, 0
  %v239 = vsel %vm156, %v71, 0
  %v242 = vsel %vm156, %v72, 0
  %v245 = vsel %vm156, %v73, 0
  %v248 = vsel %vm156, %v74, 0
  %v251 = vsel %vm156, %v75, 0
  %v254 = vsel %vm156, %v76, 0
  %v257 = vsel %vm156, %v77, 0
  %v260 = vsel %vm156, %v78, 0
  %v263 = vsel %vm156, %v79, 0
  %v266 = vsel %vm156, %v80, 0
  %v269 = vsel %vm156, %v81, 0
  %v272 = vsel %vm156, %v82, 0
  %v275 = vsel %vm156, %v83, 0
  %v278 = vsel %vm156, %v84, 0
  %v281 = vsel %vm156, %v85, 0
  %v284 = vsel %vm156, %v86, 0
  %v287 = vsel %vm156, %v87, 0
  %v290 = vsel %vm156, %v88, 0
  %v293 = vsel %vm156, %v89, 0
  %v296 = vsel %vm156, %v90, 0
  %v299 = vsel %vm156, %v91, 0
  %v302 = vsel %vm156, %v92, 0
  %v305 = vsel %vm156, %v93, 0
  %v308 = vsel %vm156, %v94, 0
  %v311 = vsel %vm156, %v95, 0
  %v314 = vsel %vm156, %v96, 0
  %v317 = vsel %vm156, %v97, 0
  %v320 = vsel %vm156, %v98, 0
  %v323 = vsel %vm156, %v99, 0
  %v326 = vsel %vm156, %v100, 0
  %v329 = vsel %vm156, %v101, 0
  %v332 = vsel %vm156, %v102, 0
  %v335 = vsel %vm156, %v103, 0
  %v338 = vsel %vm156, %v104, 0
  %v341 = vsel %vm156, %v105, 0
  %v344 = vsel %vm156, %v106, 0
  %v347 = vsel %vm156, %v107, 0
  %v350 = vsel %vm156, %v108, 0
  %v353 = vsel %vm156, %v109, 0
  %v356 = vsel %vm156, %v110, 0
  %v359 = vsel %vm156, %v111, 0
  %v362 = vsel %vm156, %v112, 0
  %v365 = vsel %vm156, %v113, 0
  %v368 = vsel %vm156, %v114, 0
  %v371 = vsel %vm156, %v115, 0
  %v374 = vsel %vm156, %v116, 0
  %v377 = vsel %vm156, %v117, 0
  %v380 = vsel %vm156, %v118, 0
  %v383 = vsel %vm156, %v119, 0
  %v386 = vsel %vm156, %v120, 0
  %v389 = vsel %vm156, %v121, 0
  %v392 = vsel %vm156, %v122, 0
  %v395 = vsel %vm156, %v123, 0
  %v398 = vsel %vm156, %v124, 0
  %v401 = vsel %vm156, %v125, 0
  %v404 = vsel %vm156, %v126, 0
  %v407 = vsel %vm156, %v127, 0
  %v410 = vsel %vm156, %v128, 0
  %v413 = vsel %vm156, %v129, 0
  %v416 = vsel %vm156, %v130, 0
  %v419 = vsel %vm156, %v131, 0
  %v422 = vsel %vm156, %v132, 0
  %v425 = vsel %vm156, %v133, 0
  %v428 = vsel %vm156, %v134, 0
  %v431 = vsel %vm156, %v135, 0
  %v434 = vsel %vm156, %v136, 0
  %v437 = vsel %vm156, %v137, 0
  %v440 = vsel %vm156, %v138, 0
  %v443 = vsel %vm156, %v139, 0
  %v446 = vsel %vm156, %v140, 0
  %v449 = vsel %vm156, %v141, 0
  %v452 = vsel %vm156, %v142, 0
  %v455 = vsel %vm156, %v143, 0
  %457 = vmatpush.msra.mxu0 0.0
  %458 = vmatpush.msra.mxu0 0.0
  %459 = vmatpush.msra.mxu0 0.0
  %460 = vmatpush.msra.mxu0 0.0
  %461 = vmatpush.msra.mxu0 0.0
  %462 = vmatpush.msra.mxu0 0.0
  %463 = vmatpush.msra.mxu0 0.0
  %464 = vmatpush.msra.mxu0 0.0
  %465 = vmatpush.msra.mxu0 %v151
  %466 = vmatpush.msra.mxu0 %v150
  %467 = vmatpush.msra.mxu0 %v149
  %468 = vmatpush.msra.mxu0 %v148
  %469 = vmatpush.msra.mxu0 %v147
  %470 = vmatpush.msra.mxu0 %v146
  %471 = vmatpush.msra.mxu0 %v145
  %472 = vmatpush.msra.mxu0 %v144
  %473 = vmatmul.f32.gmra.mxu0 %v158
  %v474 = vpop.f32.mrf.mxu0
  %v475 = vadd.f32 %v154, %v474
  %476 = vmatmul.f32.gmra.mxu0 %v161
  %v477 = vpop.f32.mrf.mxu0
  %v478 = vadd.f32 %v154, %v477
  %479 = vmatmul.f32.gmra.mxu0 %v164
  %v480 = vpop.f32.mrf.mxu0
  %v481 = vadd.f32 %v154, %v480
  %482 = vmatmul.f32.gmra.mxu0 %v167
  %v483 = vpop.f32.mrf.mxu0
  %v484 = vadd.f32 %v154, %v483
  %485 = vmatmul.f32.gmra.mxu0 %v170
  %v486 = vpop.f32.mrf.mxu0
  %v487 = vadd.f32 %v154, %v486
  %488 = vmatmul.f32.gmra.mxu0 %v173
  %v489 = vpop.f32.mrf.mxu0
  %v490 = vadd.f32 %v154, %v489
  %491 = vmatmul.f32.gmra.mxu0 %v176
  %v492 = vpop.f32.mrf.mxu0
  %v493 = vadd.f32 %v154, %v492
  %494 = vmatmul.f32.gmra.mxu0 %v179
  %v495 = vpop.f32.mrf.mxu0
  %v496 = vadd.f32 %v154, %v495
  %497 = vmatmul.f32.gmra.mxu0 %v182
  %v498 = vpop.f32.mrf.mxu0
  %v499 = vadd.f32 %v154, %v498
  %500 = vmatmul.f32.gmra.mxu0 %v185
  %v501 = vpop.f32.mrf.mxu0
  %v502 = vadd.f32 %v154, %v501
  %503 = vmatmul.f32.gmra.mxu0 %v188
  %v504 = vpop.f32.mrf.mxu0
  %v505 = vadd.f32 %v154, %v504
  %506 = vmatmul.f32.gmra.mxu0 %v191
  %v507 = vpop.f32.mrf.mxu0
  %v508 = vadd.f32 %v154, %v507
  %509 = vmatmul.f32.gmra.mxu0 %v194
  %v510 = vpop.f32.mrf.mxu0
  %v511 = vadd.f32 %v154, %v510
  %512 = vmatmul.f32.gmra.mxu0 %v197
  %v513 = vpop.f32.mrf.mxu0
  %v514 = vadd.f32 %v154, %v513
  %515 = vmatmul.f32.gmra.mxu0 %v200
  %v516 = vpop.f32.mrf.mxu0
  %v517 = vadd.f32 %v154, %v516
  %518 = vmatmul.f32.gmra.mxu0 %v203
  %v519 = vpop.f32.mrf.mxu0
  %v520 = vadd.f32 %v154, %v519
  %521 = vmatmul.f32.gmra.mxu0 %v206
  %v522 = vpop.f32.mrf.mxu0
  %v523 = vadd.f32 %v154, %v522
  %524 = vmatmul.f32.gmra.mxu0 %v209
  %v525 = vpop.f32.mrf.mxu0
  %v526 = vadd.f32 %v154, %v525
  %527 = vmatmul.f32.gmra.mxu0 %v212
  %v528 = vpop.f32.mrf.mxu0
  %v529 = vadd.f32 %v154, %v528
  %530 = vmatmul.f32.gmra.mxu0 %v215
  %v531 = vpop.f32.mrf.mxu0
  %v532 = vadd.f32 %v154, %v531
  %533 = vmatmul.f32.gmra.mxu0 %v218
  %v534 = vpop.f32.mrf.mxu0
  %v535 = vadd.f32 %v154, %v534
  %536 = vmatmul.f32.gmra.mxu0 %v221
  %v537 = vpop.f32.mrf.mxu0
  %v538 = vadd.f32 %v154, %v537
  %539 = vmatmul.f32.gmra.mxu0 %v224
  %v540 = vpop.f32.mrf.mxu0
  %v541 = vadd.f32 %v154, %v540
  %542 = vmatmul.f32.gmra.mxu0 %v227
  %v543 = vpop.f32.mrf.mxu0
  %v544 = vadd.f32 %v154, %v543
  %545 = vmatmul.f32.gmra.mxu0 %v230
  %v546 = vpop.f32.mrf.mxu0
  %v547 = vadd.f32 %v154, %v546
  %548 = vmatmul.f32.gmra.mxu0 %v233
  %v549 = vpop.f32.mrf.mxu0
  %v550 = vadd.f32 %v154, %v549
  %551 = vmatmul.f32.gmra.mxu0 %v236
  %v552 = vpop.f32.mrf.mxu0
  %v553 = vadd.f32 %v154, %v552
  %554 = vmatmul.f32.gmra.mxu0 %v239
  %v555 = vpop.f32.mrf.mxu0
  %v556 = vadd.f32 %v154, %v555
  %557 = vmatmul.f32.gmra.mxu0 %v242
  %v558 = vpop.f32.mrf.mxu0
  %v559 = vadd.f32 %v154, %v558
  %560 = vmatmul.f32.gmra.mxu0 %v245
  %v561 = vpop.f32.mrf.mxu0
  %v562 = vadd.f32 %v154, %v561
  %563 = vmatmul.f32.gmra.mxu0 %v248
  %v564 = vpop.f32.mrf.mxu0
  %v565 = vadd.f32 %v154, %v564
  %566 = vmatmul.f32.gmra.mxu0 %v251
  %v567 = vpop.f32.mrf.mxu0
  %v568 = vadd.f32 %v154, %v567
  %569 = vmatmul.f32.gmra.mxu0 %v254
  %v570 = vpop.f32.mrf.mxu0
  %v571 = vadd.f32 %v154, %v570
  %572 = vmatmul.f32.gmra.mxu0 %v257
  %v573 = vpop.f32.mrf.mxu0
  %v574 = vadd.f32 %v154, %v573
  %575 = vmatmul.f32.gmra.mxu0 %v260
  %v576 = vpop.f32.mrf.mxu0
  %v577 = vadd.f32 %v154, %v576
  %578 = vmatmul.f32.gmra.mxu0 %v263
  %v579 = vpop.f32.mrf.mxu0
  %v580 = vadd.f32 %v154, %v579
  %581 = vmatmul.f32.gmra.mxu0 %v266
  %v582 = vpop.f32.mrf.mxu0
  %v583 = vadd.f32 %v154, %v582
  %584 = vmatmul.f32.gmra.mxu0 %v269
  %v585 = vpop.f32.mrf.mxu0
  %v586 = vadd.f32 %v154, %v585
  %587 = vmatmul.f32.gmra.mxu0 %v272
  %v588 = vpop.f32.mrf.mxu0
  %v589 = vadd.f32 %v154, %v588
  %590 = vmatmul.f32.gmra.mxu0 %v275
  %v591 = vpop.f32.mrf.mxu0
  %v592 = vadd.f32 %v154, %v591
  %593 = vmatmul.f32.gmra.mxu0 %v278
  %v594 = vpop.f32.mrf.mxu0
  %v595 = vadd.f32 %v154, %v594
  %596 = vmatmul.f32.gmra.mxu0 %v281
  %v597 = vpop.f32.mrf.mxu0
  %v598 = vadd.f32 %v154, %v597
  %599 = vmatmul.f32.gmra.mxu0 %v284
  %v600 = vpop.f32.mrf.mxu0
  %v601 = vadd.f32 %v154, %v600
  %602 = vmatmul.f32.gmra.mxu0 %v287
  %v603 = vpop.f32.mrf.mxu0
  %v604 = vadd.f32 %v154, %v603
  %605 = vmatmul.f32.gmra.mxu0 %v290
  %v606 = vpop.f32.mrf.mxu0
  %v607 = vadd.f32 %v154, %v606
  %608 = vmatmul.f32.gmra.mxu0 %v293
  %v609 = vpop.f32.mrf.mxu0
  %v610 = vadd.f32 %v154, %v609
  %611 = vmatmul.f32.gmra.mxu0 %v296
  %v612 = vpop.f32.mrf.mxu0
  %v613 = vadd.f32 %v154, %v612
  %614 = vmatmul.f32.gmra.mxu0 %v299
  %v615 = vpop.f32.mrf.mxu0
  %v616 = vadd.f32 %v154, %v615
  %617 = vmatmul.f32.gmra.mxu0 %v302
  %v618 = vpop.f32.mrf.mxu0
  %v619 = vadd.f32 %v154, %v618
  %620 = vmatmul.f32.gmra.mxu0 %v305
  %v621 = vpop.f32.mrf.mxu0
  %v622 = vadd.f32 %v154, %v621
  %623 = vmatmul.f32.gmra.mxu0 %v308
  %v624 = vpop.f32.mrf.mxu0
  %v625 = vadd.f32 %v154, %v624
  %626 = vmatmul.f32.gmra.mxu0 %v311
  %v627 = vpop.f32.mrf.mxu0
  %v628 = vadd.f32 %v154, %v627
  %629 = vmatmul.f32.gmra.mxu0 %v314
  %v630 = vpop.f32.mrf.mxu0
  %v631 = vadd.f32 %v154, %v630
  %632 = vmatmul.f32.gmra.mxu0 %v317
  %v633 = vpop.f32.mrf.mxu0
  %v634 = vadd.f32 %v154, %v633
  %635 = vmatmul.f32.gmra.mxu0 %v320
  %v636 = vpop.f32.mrf.mxu0
  %v637 = vadd.f32 %v154, %v636
  %638 = vmatmul.f32.gmra.mxu0 %v323
  %v639 = vpop.f32.mrf.mxu0
  %v640 = vadd.f32 %v154, %v639
  %641 = vmatmul.f32.gmra.mxu0 %v326
  %v642 = vpop.f32.mrf.mxu0
  %v643 = vadd.f32 %v154, %v642
  %644 = vmatmul.f32.gmra.mxu0 %v329
  %v645 = vpop.f32.mrf.mxu0
  %v646 = vadd.f32 %v154, %v645
  %647 = vmatmul.f32.gmra.mxu0 %v332
  %v648 = vpop.f32.mrf.mxu0
  %v649 = vadd.f32 %v154, %v648
  %650 = vmatmul.f32.gmra.mxu0 %v335
  %v651 = vpop.f32.mrf.mxu0
  %v652 = vadd.f32 %v154, %v651
  %653 = vmatmul.f32.gmra.mxu0 %v338
  %v654 = vpop.f32.mrf.mxu0
  %v655 = vadd.f32 %v154, %v654
  %656 = vmatmul.f32.gmra.mxu0 %v341
  %v657 = vpop.f32.mrf.mxu0
  %v658 = vadd.f32 %v154, %v657
  %659 = vmatmul.f32.gmra.mxu0 %v344
  %v660 = vpop.f32.mrf.mxu0
  %v661 = vadd.f32 %v154, %v660
  %662 = vmatmul.f32.gmra.mxu0 %v347
  %v663 = vpop.f32.mrf.mxu0
  %v664 = vadd.f32 %v154, %v663
  %665 = vmatmul.f32.gmra.mxu0 %v350
  %v666 = vpop.f32.mrf.mxu0
  %v667 = vadd.f32 %v154, %v666
  %668 = vmatmul.f32.gmra.mxu0 %v353
  %v669 = vpop.f32.mrf.mxu0
  %v670 = vadd.f32 %v154, %v669
  %671 = vmatmul.f32.gmra.mxu0 %v356
  %v672 = vpop.f32.mrf.mxu0
  %v673 = vadd.f32 %v154, %v672
  %674 = vmatmul.f32.gmra.mxu0 %v359
  %v675 = vpop.f32.mrf.mxu0
  %v676 = vadd.f32 %v154, %v675
  %677 = vmatmul.f32.gmra.mxu0 %v362
  %v678 = vpop.f32.mrf.mxu0
  %v679 = vadd.f32 %v154, %v678
  %680 = vmatmul.f32.gmra.mxu0 %v365
  %v681 = vpop.f32.mrf.mxu0
  %v682 = vadd.f32 %v154, %v681
  %683 = vmatmul.f32.gmra.mxu0 %v368
  %v684 = vpop.f32.mrf.mxu0
  %v685 = vadd.f32 %v154, %v684
  %686 = vmatmul.f32.gmra.mxu0 %v371
  %v687 = vpop.f32.mrf.mxu0
  %v688 = vadd.f32 %v154, %v687
  %689 = vmatmul.f32.gmra.mxu0 %v374
  %v690 = vpop.f32.mrf.mxu0
  %v691 = vadd.f32 %v154, %v690
  %692 = vmatmul.f32.gmra.mxu0 %v377
  %v693 = vpop.f32.mrf.mxu0
  %v694 = vadd.f32 %v154, %v693
  %695 = vmatmul.f32.gmra.mxu0 %v380
  %v696 = vpop.f32.mrf.mxu0
  %v697 = vadd.f32 %v154, %v696
  %698 = vmatmul.f32.gmra.mxu0 %v383
  %v699 = vpop.f32.mrf.mxu0
  %v700 = vadd.f32 %v154, %v699
  %701 = vmatmul.f32.gmra.mxu0 %v386
  %v702 = vpop.f32.mrf.mxu0
  %v703 = vadd.f32 %v154, %v702
  %704 = vmatmul.f32.gmra.mxu0 %v389
  %v705 = vpop.f32.mrf.mxu0
  %v706 = vadd.f32 %v154, %v705
  %707 = vmatmul.f32.gmra.mxu0 %v392
  %v708 = vpop.f32.mrf.mxu0
  %v709 = vadd.f32 %v154, %v708
  %710 = vmatmul.f32.gmra.mxu0 %v395
  %v711 = vpop.f32.mrf.mxu0
  %v712 = vadd.f32 %v154, %v711
  %713 = vmatmul.f32.gmra.mxu0 %v398
  %v714 = vpop.f32.mrf.mxu0
  %v715 = vadd.f32 %v154, %v714
  %716 = vmatmul.f32.gmra.mxu0 %v401
  %v717 = vpop.f32.mrf.mxu0
  %v718 = vadd.f32 %v154, %v717
  %719 = vmatmul.f32.gmra.mxu0 %v404
  %v720 = vpop.f32.mrf.mxu0
  %v721 = vadd.f32 %v154, %v720
  %722 = vmatmul.f32.gmra.mxu0 %v407
  %v723 = vpop.f32.mrf.mxu0
  %v724 = vadd.f32 %v154, %v723
  %725 = vmatmul.f32.gmra.mxu0 %v410
  %v726 = vpop.f32.mrf.mxu0
  %v727 = vadd.f32 %v154, %v726
  %728 = vmatmul.f32.gmra.mxu0 %v413
  %v729 = vpop.f32.mrf.mxu0
  %v730 = vadd.f32 %v154, %v729
  %731 = vmatmul.f32.gmra.mxu0 %v416
  %v732 = vpop.f32.mrf.mxu0
  %v733 = vadd.f32 %v154, %v732
  %734 = vmatmul.f32.gmra.mxu0 %v419
  %v735 = vpop.f32.mrf.mxu0
  %v736 = vadd.f32 %v154, %v735
  %737 = vmatmul.f32.gmra.mxu0 %v422
  %v738 = vpop.f32.mrf.mxu0
  %v739 = vadd.f32 %v154, %v738
  %740 = vmatmul.f32.gmra.mxu0 %v425
  %v741 = vpop.f32.mrf.mxu0
  %v742 = vadd.f32 %v154, %v741
  %743 = vmatmul.f32.gmra.mxu0 %v428
  %v744 = vpop.f32.mrf.mxu0
  %v745 = vadd.f32 %v154, %v744
  %746 = vmatmul.f32.gmra.mxu0 %v431
  %v747 = vpop.f32.mrf.mxu0
  %v748 = vadd.f32 %v154, %v747
  %749 = vmatmul.f32.gmra.mxu0 %v434
  %v750 = vpop.f32.mrf.mxu0
  %v751 = vadd.f32 %v154, %v750
  %752 = vmatmul.f32.gmra.mxu0 %v437
  %v753 = vpop.f32.mrf.mxu0
  %v754 = vadd.f32 %v154, %v753
  %755 = vmatmul.f32.gmra.mxu0 %v440
  %v756 = vpop.f32.mrf.mxu0
  %v757 = vadd.f32 %v154, %v756
  %758 = vmatmul.f32.gmra.mxu0 %v443
  %v759 = vpop.f32.mrf.mxu0
  %v760 = vadd.f32 %v154, %v759
  %761 = vmatmul.f32.gmra.mxu0 %v446
  %v762 = vpop.f32.mrf.mxu0
  %v763 = vadd.f32 %v154, %v762
  %764 = vmatmul.f32.gmra.mxu0 %v449
  %v765 = vpop.f32.mrf.mxu0
  %v766 = vadd.f32 %v154, %v765
  %767 = vmatmul.f32.gmra.mxu0 %v452
  %v768 = vpop.f32.mrf.mxu0
  %v769 = vadd.f32 %v154, %v768
  %770 = vmatmul.f32.gmra.mxu0 %v455
  %v771 = vpop.f32.mrf.mxu0
  %v772 = vadd.f32 %v154, %v771
  %773 = vdwg.mxu0
  %v774 = vmax.f32 %v475, 0.0
  %v775 = vmax.f32 %v478, 0.0
  %v776 = vmax.f32 %v481, 0.0
  %v777 = vmax.f32 %v484, 0.0
  %v778 = vmax.f32 %v487, 0.0
  %v779 = vmax.f32 %v490, 0.0
  %v780 = vmax.f32 %v493, 0.0
  %v781 = vmax.f32 %v496, 0.0
  %v782 = vmax.f32 %v499, 0.0
  %v783 = vmax.f32 %v502, 0.0
  %v784 = vmax.f32 %v505, 0.0
  %v785 = vmax.f32 %v508, 0.0
  %v786 = vmax.f32 %v511, 0.0
  %v787 = vmax.f32 %v514, 0.0
  %v788 = vmax.f32 %v517, 0.0
  %v789 = vmax.f32 %v520, 0.0
  %v790 = vmax.f32 %v523, 0.0
  %v791 = vmax.f32 %v526, 0.0
  %v792 = vmax.f32 %v529, 0.0
  %v793 = vmax.f32 %v532, 0.0
  %v794 = vmax.f32 %v535, 0.0
  %v795 = vmax.f32 %v538, 0.0
  %v796 = vmax.f32 %v541, 0.0
  %v797 = vmax.f32 %v544, 0.0
  %v798 = vmax.f32 %v547, 0.0
  %v799 = vmax.f32 %v550, 0.0
  %v800 = vmax.f32 %v553, 0.0
  %v801 = vmax.f32 %v556, 0.0
  %v802 = vmax.f32 %v559, 0.0
  %v803 = vmax.f32 %v562, 0.0
  %v804 = vmax.f32 %v565, 0.0
  %v805 = vmax.f32 %v568, 0.0
  %v806 = vmax.f32 %v571, 0.0
  %v807 = vmax.f32 %v574, 0.0
  %v808 = vmax.f32 %v577, 0.0
  %v809 = vmax.f32 %v580, 0.0
  %v810 = vmax.f32 %v583, 0.0
  %v811 = vmax.f32 %v586, 0.0
  %v812 = vmax.f32 %v589, 0.0
  %v813 = vmax.f32 %v592, 0.0
  %v814 = vmax.f32 %v595, 0.0
  %v815 = vmax.f32 %v598, 0.0
  %v816 = vmax.f32 %v601, 0.0
  %v817 = vmax.f32 %v604, 0.0
  %v818 = vmax.f32 %v607, 0.0
  %v819 = vmax.f32 %v610, 0.0
  %v820 = vmax.f32 %v613, 0.0
  %v821 = vmax.f32 %v616, 0.0
  %v822 = vmax.f32 %v619, 0.0
  %v823 = vmax.f32 %v622, 0.0
  %v824 = vmax.f32 %v625, 0.0
  %v825 = vmax.f32 %v628, 0.0
  %v826 = vmax.f32 %v631, 0.0
  %v827 = vmax.f32 %v634, 0.0
  %v828 = vmax.f32 %v637, 0.0
  %v829 = vmax.f32 %v640, 0.0
  %v830 = vmax.f32 %v643, 0.0
  %v831 = vmax.f32 %v646, 0.0
  %v832 = vmax.f32 %v649, 0.0
  %v833 = vmax.f32 %v652, 0.0
  %v834 = vmax.f32 %v655, 0.0
  %v835 = vmax.f32 %v658, 0.0
  %v836 = vmax.f32 %v661, 0.0
  %v837 = vmax.f32 %v664, 0.0
  %v838 = vmax.f32 %v667, 0.0
  %v839 = vmax.f32 %v670, 0.0
  %v840 = vmax.f32 %v673, 0.0
  %v841 = vmax.f32 %v676, 0.0
  %v842 = vmax.f32 %v679, 0.0
  %v843 = vmax.f32 %v682, 0.0
  %v844 = vmax.f32 %v685, 0.0
  %v845 = vmax.f32 %v688, 0.0
  %v846 = vmax.f32 %v691, 0.0
  %v847 = vmax.f32 %v694, 0.0
  %v848 = vmax.f32 %v697, 0.0
  %v849 = vmax.f32 %v700, 0.0
  %v850 = vmax.f32 %v703, 0.0
  %v851 = vmax.f32 %v706, 0.0
  %v852 = vmax.f32 %v709, 0.0
  %v853 = vmax.f32 %v712, 0.0
  %v854 = vmax.f32 %v715, 0.0
  %v855 = vmax.f32 %v718, 0.0
  %v856 = vmax.f32 %v721, 0.0
  %v857 = vmax.f32 %v724, 0.0
  %v858 = vmax.f32 %v727, 0.0
  %v859 = vmax.f32 %v730, 0.0
  %v860 = vmax.f32 %v733, 0.0
  %v861 = vmax.f32 %v736, 0.0
  %v862 = vmax.f32 %v739, 0.0
  %v863 = vmax.f32 %v742, 0.0
  %v864 = vmax.f32 %v745, 0.0
  %v865 = vmax.f32 %v748, 0.0
  %v866 = vmax.f32 %v751, 0.0
  %v867 = vmax.f32 %v754, 0.0
  %v868 = vmax.f32 %v757, 0.0
  %v869 = vmax.f32 %v760, 0.0
  %v870 = vmax.f32 %v763, 0.0
  %v871 = vmax.f32 %v766, 0.0
  %v872 = vmax.f32 %v769, 0.0
  %v873 = vmax.f32 %v772, 0.0
  %874 = vst [vmem:[#allocation2] sm:$0xff] %v774
  %875 = vst [vmem:[#allocation2 + $0x8] sm:$0xff] %v775
  %876 = vst [vmem:[#allocation2 + $0x10] sm:$0xff] %v776
  %877 = vst [vmem:[#allocation2 + $0x18] sm:$0xff] %v777
  %878 = vst [vmem:[#allocation2 + $0x20] sm:$0xff] %v778
  %879 = vst [vmem:[#allocation2 + $0x28] sm:$0xff] %v779
  %880 = vst [vmem:[#allocation2 + $0x30] sm:$0xff] %v780
  %881 = vst [vmem:[#allocation2 + $0x38] sm:$0xff] %v781
  %882 = vst [vmem:[#allocation2 + $0x40] sm:$0xff] %v782
  %883 = vst [vmem:[#allocation2 + $0x48] sm:$0xff] %v783
  %884 = vst [vmem:[#allocation2 + $0x50] sm:$0xff] %v784
  %885 = vst [vmem:[#allocation2 + $0x58] sm:$0xff] %v785
  %886 = vst [vmem:[#allocation2 + $0x60] sm:$0xff] %v786
  %887 = vst [vmem:[#allocation2 + $0x68] sm:$0xff] %v787
  %888 = vst [vmem:[#allocation2 + $0x70] sm:$0xff] %v788
  %889 = vst [vmem:[#allocation2 + $0x78] sm:$0xff] %v789
  %890 = vst [vmem:[#allocation2 + $0x80] sm:$0xff] %v790
  %891 = vst [vmem:[#allocation2 + $0x88] sm:$0xff] %v791
  %892 = vst [vmem:[#allocation2 + $0x90] sm:$0xff] %v792
  %893 = vst [vmem:[#allocation2 + $0x98] sm:$0xff] %v793
  %894 = vst [vmem:[#allocation2 + $0xa0] sm:$0xff] %v794
  %895 = vst [vmem:[#allocation2 + $0xa8] sm:$0xff] %v795
  %896 = vst [vmem:[#allocation2 + $0xb0] sm:$0xff] %v796
  %897 = vst [vmem:[#allocation2 + $0xb8] sm:$0xff] %v797
  %898 = vst [vmem:[#allocation2 + $0xc0] sm:$0xff] %v798
  %899 = vst [vmem:[#allocation2 + $0xc8] sm:$0xff] %v799
  %900 = vst [vmem:[#allocation2 + $0xd0] sm:$0xff] %v800
  %901 = vst [vmem:[#allocation2 + $0xd8] sm:$0xff] %v801
  %902 = vst [vmem:[#allocation2 + $0xe0] sm:$0xff] %v802
  %903 = vst [vmem:[#allocation2 + $0xe8] sm:$0xff] %v803
  %904 = vst [vmem:[#allocation2 + $0xf0] sm:$0xff] %v804
  %905 = vst [vmem:[#allocation2 + $0xf8] sm:$0xff] %v805
  %906 = vst [vmem:[#allocation2 + $0x100] sm:$0xff] %v806
  %907 = vst [vmem:[#allocation2 + $0x108] sm:$0xff] %v807
  %908 = vst [vmem:[#allocation2 + $0x110] sm:$0xff] %v808
  %909 = vst [vmem:[#allocation2 + $0x118] sm:$0xff] %v809
  %910 = vst [vmem:[#allocation2 + $0x120] sm:$0xff] %v810
  %911 = vst [vmem:[#allocation2 + $0x128] sm:$0xff] %v811
  %912 = vst [vmem:[#allocation2 + $0x130] sm:$0xff] %v812
  %913 = vst [vmem:[#allocation2 + $0x138] sm:$0xff] %v813
  %914 = vst [vmem:[#allocation2 + $0x140] sm:$0xff] %v814
  %915 = vst [vmem:[#allocation2 + $0x148] sm:$0xff] %v815
  %916 = vst [vmem:[#allocation2 + $0x150] sm:$0xff] %v816
  %917 = vst [vmem:[#allocation2 + $0x158] sm:$0xff] %v817
  %918 = vst [vmem:[#allocation2 + $0x160] sm:$0xff] %v818
  %919 = vst [vmem:[#allocation2 + $0x168] sm:$0xff] %v819
  %920 = vst [vmem:[#allocation2 + $0x170] sm:$0xff] %v820
  %921 = vst [vmem:[#allocation2 + $0x178] sm:$0xff] %v821
  %922 = vst [vmem:[#allocation2 + $0x180] sm:$0xff] %v822
  %923 = vst [vmem:[#allocation2 + $0x188] sm:$0xff] %v823
  %924 = vst [vmem:[#allocation2 + $0x190] sm:$0xff] %v824
  %925 = vst [vmem:[#allocation2 + $0x198] sm:$0xff] %v825
  %926 = vst [vmem:[#allocation2 + $0x1a0] sm:$0xff] %v826
  %927 = vst [vmem:[#allocation2 + $0x1a8] sm:$0xff] %v827
  %928 = vst [vmem:[#allocation2 + $0x1b0] sm:$0xff] %v828
  %929 = vst [vmem:[#allocation2 + $0x1b8] sm:$0xff] %v829
  %930 = vst [vmem:[#allocation2 + $0x1c0] sm:$0xff] %v830
  %931 = vst [vmem:[#allocation2 + $0x1c8] sm:$0xff] %v831
  %932 = vst [vmem:[#allocation2 + $0x1d0] sm:$0xff] %v832
  %933 = vst [vmem:[#allocation2 + $0x1d8] sm:$0xff] %v833
  %934 = vst [vmem:[#allocation2 + $0x1e0] sm:$0xff] %v834
  %935 = vst [vmem:[#allocation2 + $0x1e8] sm:$0xff] %v835
  %936 = vst [vmem:[#allocation2 + $0x1f0] sm:$0xff] %v836
  %937 = vst [vmem:[#allocation2 + $0x1f8] sm:$0xff] %v837
  %938 = vst [vmem:[#allocation2 + $0x200] sm:$0xff] %v838
  %939 = vst [vmem:[#allocation2 + $0x208] sm:$0xff] %v839
  %940 = vst [vmem:[#allocation2 + $0x210] sm:$0xff] %v840
  %941 = vst [vmem:[#allocation2 + $0x218] sm:$0xff] %v841
  %942 = vst [vmem:[#allocation2 + $0x220] sm:$0xff] %v842
  %943 = vst [vmem:[#allocation2 + $0x228] sm:$0xff] %v843
  %944 = vst [vmem:[#allocation2 + $0x230] sm:$0xff] %v844
  %945 = vst [vmem:[#allocation2 + $0x238] sm:$0xff] %v845
  %946 = vst [vmem:[#allocation2 + $0x240] sm:$0xff] %v846
  %947 = vst [vmem:[#allocation2 + $0x248] sm:$0xff] %v847
  %948 = vst [vmem:[#allocation2 + $0x250] sm:$0xff] %v848
  %949 = vst [vmem:[#allocation2 + $0x258] sm:$0xff] %v849
  %950 = vst [vmem:[#allocation2 + $0x260] sm:$0xff] %v850
  %951 = vst [vmem:[#allocation2 + $0x268] sm:$0xff] %v851
  %952 = vst [vmem:[#allocation2 + $0x270] sm:$0xff] %v852
  %953 = vst [vmem:[#allocation2 + $0x278] sm:$0xff] %v853
  %954 = vst [vmem:[#allocation2 + $0x280] sm:$0xff] %v854
  %955 = vst [vmem:[#allocation2 + $0x288] sm:$0xff] %v855
  %956 = vst [vmem:[#allocation2 + $0x290] sm:$0xff] %v856
  %957 = vst [vmem:[#allocation2 + $0x298] sm:$0xff] %v857
  %958 = vst [vmem:[#allocation2 + $0x2a0] sm:$0xff] %v858
  %959 = vst [vmem:[#allocation2 + $0x2a8] sm:$0xff] %v859
  %960 = vst [vmem:[#allocation2 + $0x2b0] sm:$0xff] %v860
  %961 = vst [vmem:[#allocation2 + $0x2b8] sm:$0xff] %v861
  %962 = vst [vmem:[#allocation2 + $0x2c0] sm:$0xff] %v862
  %963 = vst [vmem:[#allocation2 + $0x2c8] sm:$0xff] %v863
  %964 = vst [vmem:[#allocation2 + $0x2d0] sm:$0xff] %v864
  %965 = vst [vmem:[#allocation2 + $0x2d8] sm:$0xff] %v865
  %966 = vst [vmem:[#allocation2 + $0x2e0] sm:$0xff] %v866
  %967 = vst [vmem:[#allocation2 + $0x2e8] sm:$0xff] %v867
  %968 = vst [vmem:[#allocation2 + $0x2f0] sm:$0xff] %v868
  %969 = vst [vmem:[#allocation2 + $0x2f8] sm:$0xff] %v869
  %970 = vst [vmem:[#allocation2 + $0x300] sm:$0xff] %v870
  %971 = vst [vmem:[#allocation2 + $0x308] sm:$0xff] %v871
  %972 = vst [vmem:[#allocation2 + $0x310] sm:$0xff] %v872
  %973 = vst [vmem:[#allocation2 + $0x318] sm:$0xff] %v873
  %v974 = vld [vmem:[#allocation2] sm:$0xff]
  %v975 = vld [vmem:[#allocation2 + $0x8] sm:$0xff]
  %v976 = vld [vmem:[#allocation2 + $0x10] sm:$0xff]
  %v977 = vld [vmem:[#allocation2 + $0x18] sm:$0xff]
  %vm978 = vcmask 261120
  %979 = vst.msk [vmem:[#allocation3] sm:$0xff] %vm978, %v974
  %980 = vst.msk [vmem:[#allocation3 + $0x20] sm:$0xff] %vm978, %v975
  %981 = vst.msk [vmem:[#allocation3 + $0x40] sm:$0xff] %vm978, %v976
  %982 = vst.msk [vmem:[#allocation3 + $0x60] sm:$0xff] %vm978, %v977
  %v983 = vld [vmem:[#allocation2 + $0x28] sm:$0xff]
  %v984 = vld [vmem:[#allocation2 + $0x30] sm:$0xff]
  %v985 = vld [vmem:[#allocation2 + $0x38] sm:$0xff]
  %v986 = vld [vmem:[#allocation2 + $0x40] sm:$0xff]
  %987 = vst.msk [vmem:[#allocation3 + $0x80] sm:$0xff] %vm978, %v983
  %988 = vst.msk [vmem:[#allocation3 + $0xa0] sm:$0xff] %vm978, %v984
  %989 = vst.msk [vmem:[#allocation3 + $0xc0] sm:$0xff] %vm978, %v985
  %990 = vst.msk [vmem:[#allocation3 + $0xe0] sm:$0xff] %vm978, %v986
  %v991 = vld [vmem:[#allocation2 + $0x50] sm:$0xff]
  %v992 = vld [vmem:[#allocation2 + $0x58] sm:$0xff]
  %v993 = vld [vmem:[#allocation2 + $0x60] sm:$0xff]
  %v994 = vld [vmem:[#allocation2 + $0x68] sm:$0xff]
  %995 = vst.msk [vmem:[#allocation3 + $0x100] sm:$0xff] %vm978, %v991
  %996 = vst.msk [vmem:[#allocation3 + $0x120] sm:$0xff] %vm978, %v992
  %997 = vst.msk [vmem:[#allocation3 + $0x140] sm:$0xff] %vm978, %v993
  %998 = vst.msk [vmem:[#allocation3 + $0x160] sm:$0xff] %vm978, %v994
  %v999 = vld [vmem:[#allocation2 + $0x78] sm:$0xff]
  %v1000 = vld [vmem:[#allocation2 + $0x80] sm:$0xff]
  %v1001 = vld [vmem:[#allocation2 + $0x88] sm:$0xff]
  %v1002 = vld [vmem:[#allocation2 + $0x90] sm:$0xff]
  %1003 = vst.msk [vmem:[#allocation3 + $0x180] sm:$0xff] %vm978, %v999
  %1004 = vst.msk [vmem:[#allocation3 + $0x1a0] sm:$0xff] %vm978, %v1000
  %1005 = vst.msk [vmem:[#allocation3 + $0x1c0] sm:$0xff] %vm978, %v1001
  %1006 = vst.msk [vmem:[#allocation3 + $0x1e0] sm:$0xff] %vm978, %v1002
  %v1007 = vld [vmem:[#allocation2 + $0xc8] sm:$0xff]
  %v1008 = vld [vmem:[#allocation2 + $0xd0] sm:$0xff]
  %v1009 = vld [vmem:[#allocation2 + $0xd8] sm:$0xff]
  %v1010 = vld [vmem:[#allocation2 + $0xe0] sm:$0xff]
  %vm1011 = vcmask 523520
  %1012 = vst.msk [vmem:[#allocation3] sm:$0xff] %vm1011, %v1007
  %1013 = vst.msk [vmem:[#allocation3 + $0x20] sm:$0xff] %vm1011, %v1008
  %1014 = vst.msk [vmem:[#allocation3 + $0x40] sm:$0xff] %vm1011, %v1009
  %1015 = vst.msk [vmem:[#allocation3 + $0x60] sm:$0xff] %vm1011, %v1010
  %v1016 = vld [vmem:[#allocation2 + $0xf0] sm:$0xff]
  %v1017 = vld [vmem:[#allocation2 + $0xf8] sm:$0xff]
  %v1018 = vld [vmem:[#allocation2 + $0x100] sm:$0xff]
  %v1019 = vld [vmem:[#allocation2 + $0x108] sm:$0xff]
  %1020 = vst.msk [vmem:[#allocation3 + $0x80] sm:$0xff] %vm1011, %v1016
  %1021 = vst.msk [vmem:[#allocation3 + $0xa0] sm:$0xff] %vm1011, %v1017
  %1022 = vst.msk [vmem:[#allocation3 + $0xc0] sm:$0xff] %vm1011, %v1018
  %1023 = vst.msk [vmem:[#allocation3 + $0xe0] sm:$0xff] %vm1011, %v1019
  %v1024 = vld [vmem:[#allocation2 + $0x118] sm:$0xff]
  %v1025 = vld [vmem:[#allocation2 + $0x120] sm:$0xff]
  %v1026 = vld [vmem:[#allocation2 + $0x128] sm:$0xff]
  %v1027 = vld [vmem:[#allocation2 + $0x130] sm:$0xff]
  %1028 = vst.msk [vmem:[#allocation3 + $0x100] sm:$0xff] %vm1011, %v1024
  %1029 = vst.msk [vmem:[#allocation3 + $0x120] sm:$0xff] %vm1011, %v1025
  %1030 = vst.msk [vmem:[#allocation3 + $0x140] sm:$0xff] %vm1011, %v1026
  %1031 = vst.msk [vmem:[#allocation3 + $0x160] sm:$0xff] %vm1011, %v1027
  %v1032 = vld [vmem:[#allocation2 + $0x140] sm:$0xff]
  %v1033 = vld [vmem:[#allocation2 + $0x148] sm:$0xff]
  %v1034 = vld [vmem:[#allocation2 + $0x150] sm:$0xff]
  %v1035 = vld [vmem:[#allocation2 + $0x158] sm:$0xff]
  %1036 = vst.msk [vmem:[#allocation3 + $0x180] sm:$0xff] %vm1011, %v1032
  %1037 = vst.msk [vmem:[#allocation3 + $0x1a0] sm:$0xff] %vm1011, %v1033
  %1038 = vst.msk [vmem:[#allocation3 + $0x1c0] sm:$0xff] %vm1011, %v1034
  %1039 = vst.msk [vmem:[#allocation3 + $0x1e0] sm:$0xff] %vm1011, %v1035
  %v1040 = vld [vmem:[#allocation2 + $0x8] sm:$0xff]
  %v1041 = vld [vmem:[#allocation2 + $0x10] sm:$0xff]
  %v1042 = vld [vmem:[#allocation2 + $0x18] sm:$0xff]
  %v1043 = vld [vmem:[#allocation2 + $0x20] sm:$0xff]
  %vm1044 = vcmask 785920
  %1045 = vst.msk [vmem:[#allocation3] sm:$0xff] %vm1044, %v1040
  %1046 = vst.msk [vmem:[#allocation3 + $0x20] sm:$0xff] %vm1044, %v1041
  %1047 = vst.msk [vmem:[#allocation3 + $0x40] sm:$0xff] %vm1044, %v1042
  %1048 = vst.msk [vmem:[#allocation3 + $0x60] sm:$0xff] %vm1044, %v1043
  %v1049 = vld [vmem:[#allocation2 + $0x30] sm:$0xff]
  %v1050 = vld [vmem:[#allocation2 + $0x38] sm:$0xff]
  %v1051 = vld [vmem:[#allocation2 + $0x40] sm:$0xff]
  %v1052 = vld [vmem:[#allocation2 + $0x48] sm:$0xff]
  %1053 = vst.msk [vmem:[#allocation3 + $0x80] sm:$0xff] %vm1044, %v1049
  %1054 = vst.msk [vmem:[#allocation3 + $0xa0] sm:$0xff] %vm1044, %v1050
  %1055 = vst.msk [vmem:[#allocation3 + $0xc0] sm:$0xff] %vm1044, %v1051
  %1056 = vst.msk [vmem:[#allocation3 + $0xe0] sm:$0xff] %vm1044, %v1052
  %v1057 = vld [vmem:[#allocation2 + $0x58] sm:$0xff]
  %v1058 = vld [vmem:[#allocation2 + $0x60] sm:$0xff]
  %v1059 = vld [vmem:[#allocation2 + $0x68] sm:$0xff]
  %v1060 = vld [vmem:[#allocation2 + $0x70] sm:$0xff]
  %1061 = vst.msk [vmem:[#allocation3 + $0x100] sm:$0xff] %vm1044, %v1057
  %1062 = vst.msk [vmem:[#allocation3 + $0x120] sm:$0xff] %vm1044, %v1058
  %1063 = vst.msk [vmem:[#allocation3 + $0x140] sm:$0xff] %vm1044, %v1059
  %1064 = vst.msk [vmem:[#allocation3 + $0x160] sm:$0xff] %vm1044, %v1060
  %v1065 = vld [vmem:[#allocation2 + $0x80] sm:$0xff]
  %v1066 = vld [vmem:[#allocation2 + $0x88] sm:$0xff]
  %v1067 = vld [vmem:[#allocation2 + $0x90] sm:$0xff]
  %v1068 = vld [vmem:[#allocation2 + $0x98] sm:$0xff]
  %1069 = vst.msk [vmem:[#allocation3 + $0x180] sm:$0xff] %vm1044, %v1065
  %1070 = vst.msk [vmem:[#allocation3 + $0x1a0] sm:$0xff] %vm1044, %v1066
  %1071 = vst.msk [vmem:[#allocation3 + $0x1c0] sm:$0xff] %vm1044, %v1067
  %1072 = vst.msk [vmem:[#allocation3 + $0x1e0] sm:$0xff] %vm1044, %v1068
  %v1073 = vld [vmem:[#allocation2 + $0xd0] sm:$0xff]
  %v1074 = vld [vmem:[#allocation2 + $0xd8] sm:$0xff]
  %v1075 = vld [vmem:[#allocation2 + $0xe0] sm:$0xff]
  %v1076 = vld [vmem:[#allocation2 + $0xe8] sm:$0xff]
  %vm1077 = vcmask 1048320
  %1078 = vst.msk [vmem:[#allocation3] sm:$0xff] %vm1077, %v1073
  %1079 = vst.msk [vmem:[#allocation3 + $0x20] sm:$0xff] %vm1077, %v1074
  %1080 = vst.msk [vmem:[#allocation3 + $0x40] sm:$0xff] %vm1077, %v1075
  %1081 = vst.msk [vmem:[#allocation3 + $0x60] sm:$0xff] %vm1077, %v1076
  %v1082 = vld [vmem:[#allocation2 + $0xf8] sm:$0xff]
  %v1083 = vld [vmem:[#allocation2 + $0x100] sm:$0xff]
  %v1084 = vld [vmem:[#allocation2 + $0x108] sm:$0xff]
  %v1085 = vld [vmem:[#allocation2 + $0x110] sm:$0xff]
  %1086 = vst.msk [vmem:[#allocation3 + $0x80] sm:$0xff] %vm1077, %v1082
  %1087 = vst.msk [vmem:[#allocation3 + $0xa0] sm:$0xff] %vm1077, %v1083
  %1088 = vst.msk [vmem:[#allocation3 + $0xc0] sm:$0xff] %vm1077, %v1084
  %1089 = vst.msk [vmem:[#allocation3 + $0xe0] sm:$0xff] %vm1077, %v1085
  %v1090 = vld [vmem:[#allocation2 + $0x120] sm:$0xff]
  %v1091 = vld [vmem:[#allocation2 + $0x128] sm:$0xff]
  %v1092 = vld [vmem:[#allocation2 + $0x130] sm:$0xff]
  %v1093 = vld [vmem:[#allocation2 + $0x138] sm:$0xff]
  %1094 = vst.msk [vmem:[#allocation3 + $0x100] sm:$0xff] %vm1077, %v1090
  %1095 = vst.msk [vmem:[#allocation3 + $0x120] sm:$0xff] %vm1077, %v1091
  %1096 = vst.msk [vmem:[#allocation3 + $0x140] sm:$0xff] %vm1077, %v1092
  %1097 = vst.msk [vmem:[#allocation3 + $0x160] sm:$0xff] %vm1077, %v1093
  %v1098 = vld [vmem:[#allocation2 + $0x148] sm:$0xff]
  %v1099 = vld [vmem:[#allocation2 + $0x150] sm:$0xff]
  %v1100 = vld [vmem:[#allocation2 + $0x158] sm:$0xff]
  %v1101 = vld [vmem:[#allocation2 + $0x160] sm:$0xff]
  %1102 = vst.msk [vmem:[#allocation3 + $0x180] sm:$0xff] %vm1077, %v1098
  %1103 = vst.msk [vmem:[#allocation3 + $0x1a0] sm:$0xff] %vm1077, %v1099
  %1104 = vst.msk [vmem:[#allocation3 + $0x1c0] sm:$0xff] %vm1077, %v1100
  %1105 = vst.msk [vmem:[#allocation3 + $0x1e0] sm:$0xff] %vm1077, %v1101
  %v1106 = vld [vmem:[#allocation2 + $0x190] sm:$0xff]
  %v1107 = vld [vmem:[#allocation2 + $0x198] sm:$0xff]
  %v1108 = vld [vmem:[#allocation2 + $0x1a0] sm:$0xff]
  %v1109 = vld [vmem:[#allocation2 + $0x1a8] sm:$0xff]
  %1110 = vst.msk [vmem:[#allocation3 + $0x8] sm:$0xff] %vm978, %v1106
  %1111 = vst.msk [vmem:[#allocation3 + $0x28] sm:$0xff] %vm978, %v1107
  %1112 = vst.msk [vmem:[#allocation3 + $0x48] sm:$0xff] %vm978, %v1108
  %1113 = vst.msk [vmem:[#allocation3 + $0x68] sm:$0xff] %vm978, %v1109
  %v1114 = vld [vmem:[#allocation2 + $0x1b8] sm:$0xff]
  %v1115 = vld [vmem:[#allocation2 + $0x1c0] sm:$0xff]
  %v1116 = vld [vmem:[#allocation2 + $0x1c8] sm:$0xff]
  %v1117 = vld [vmem:[#allocation2 + $0x1d0] sm:$0xff]
  %1118 = vst.msk [vmem:[#allocation3 + $0x88] sm:$0xff] %vm978, %v1114
  %1119 = vst.msk [vmem:[#allocation3 + $0xa8] sm:$0xff] %vm978, %v1115
  %1120 = vst.msk [vmem:[#allocation3 + $0xc8] sm:$0xff] %vm978, %v1116
  %1121 = vst.msk [vmem:[#allocation3 + $0xe8] sm:$0xff] %vm978, %v1117
  %v1122 = vld [vmem:[#allocation2 + $0x1e0] sm:$0xff]
  %v1123 = vld [vmem:[#allocation2 + $0x1e8] sm:$0xff]
  %v1124 = vld [vmem:[#allocation2 + $0x1f0] sm:$0xff]
  %v1125 = vld [vmem:[#allocation2 + $0x1f8] sm:$0xff]
  %1126 = vst.msk [vmem:[#allocation3 + $0x108] sm:$0xff] %vm978, %v1122
  %1127 = vst.msk [vmem:[#allocation3 + $0x128] sm:$0xff] %vm978, %v1123
  %1128 = vst.msk [vmem:[#allocation3 + $0x148] sm:$0xff] %vm978, %v1124
  %1129 = vst.msk [vmem:[#allocation3 + $0x168] sm:$0xff] %vm978, %v1125
  %v1130 = vld [vmem:[#allocation2 + $0x208] sm:$0xff]
  %v1131 = vld [vmem:[#allocation2 + $0x210] sm:$0xff]
  %v1132 = vld [vmem:[#allocation2 + $0x218] sm:$0xff]
  %v1133 = vld [vmem:[#allocation2 + $0x220] sm:$0xff]
  %1134 = vst.msk [vmem:[#allocation3 + $0x188] sm:$0xff] %vm978, %v1130
  %1135 = vst.msk [vmem:[#allocation3 + $0x1a8] sm:$0xff] %vm978, %v1131
  %1136 = vst.msk [vmem:[#allocation3 + $0x1c8] sm:$0xff] %vm978, %v1132
  %1137 = vst.msk [vmem:[#allocation3 + $0x1e8] sm:$0xff] %vm978, %v1133
  %v1138 = vld [vmem:[#allocation2 + $0x258] sm:$0xff]
  %v1139 = vld [vmem:[#allocation2 + $0x260] sm:$0xff]
  %v1140 = vld [vmem:[#allocation2 + $0x268] sm:$0xff]
  %v1141 = vld [vmem:[#allocation2 + $0x270] sm:$0xff]
  %1142 = vst.msk [vmem:[#allocation3 + $0x8] sm:$0xff] %vm1011, %v1138
  %1143 = vst.msk [vmem:[#allocation3 + $0x28] sm:$0xff] %vm1011, %v1139
  %1144 = vst.msk [vmem:[#allocation3 + $0x48] sm:$0xff] %vm1011, %v1140
  %1145 = vst.msk [vmem:[#allocation3 + $0x68] sm:$0xff] %vm1011, %v1141
  %v1146 = vld [vmem:[#allocation2 + $0x280] sm:$0xff]
  %v1147 = vld [vmem:[#allocation2 + $0x288] sm:$0xff]
  %v1148 = vld [vmem:[#allocation2 + $0x290] sm:$0xff]
  %v1149 = vld [vmem:[#allocation2 + $0x298] sm:$0xff]
  %1150 = vst.msk [vmem:[#allocation3 + $0x88] sm:$0xff] %vm1011, %v1146
  %1151 = vst.msk [vmem:[#allocation3 + $0xa8] sm:$0xff] %vm1011, %v1147
  %1152 = vst.msk [vmem:[#allocation3 + $0xc8] sm:$0xff] %vm1011, %v1148
  %1153 = vst.msk [vmem:[#allocation3 + $0xe8] sm:$0xff] %vm1011, %v1149
  %v1154 = vld [vmem:[#allocation2 + $0x2a8] sm:$0xff]
  %v1155 = vld [vmem:[#allocation2 + $0x2b0] sm:$0xff]
  %v1156 = vld [vmem:[#allocation2 + $0x2b8] sm:$0xff]
  %v1157 = vld [vmem:[#allocation2 + $0x2c0] sm:$0xff]
  %1158 = vst.msk [vmem:[#allocation3 + $0x108] sm:$0xff] %vm1011, %v1154
  %1159 = vst.msk [vmem:[#allocation3 + $0x128] sm:$0xff] %vm1011, %v1155
  %1160 = vst.msk [vmem:[#allocation3 + $0x148] sm:$0xff] %vm1011, %v1156
  %1161 = vst.msk [vmem:[#allocation3 + $0x168] sm:$0xff] %vm1011, %v1157
  %v1162 = vld [vmem:[#allocation2 + $0x2d0] sm:$0xff]
  %v1163 = vld [vmem:[#allocation2 + $0x2d8] sm:$0xff]
  %v1164 = vld [vmem:[#allocation2 + $0x2e0] sm:$0xff]
  %v1165 = vld [vmem:[#allocation2 + $0x2e8] sm:$0xff]
  %1166 = vst.msk [vmem:[#allocation3 + $0x188] sm:$0xff] %vm1011, %v1162
  %1167 = vst.msk [vmem:[#allocation3 + $0x1a8] sm:$0xff] %vm1011, %v1163
  %1168 = vst.msk [vmem:[#allocation3 + $0x1c8] sm:$0xff] %vm1011, %v1164
  %1169 = vst.msk [vmem:[#allocation3 + $0x1e8] sm:$0xff] %vm1011, %v1165
  %v1170 = vld [vmem:[#allocation2 + $0x198] sm:$0xff]
  %v1171 = vld [vmem:[#allocation2 + $0x1a0] sm:$0xff]
  %v1172 = vld [vmem:[#allocation2 + $0x1a8] sm:$0xff]
  %v1173 = vld [vmem:[#allocation2 + $0x1b0] sm:$0xff]
  %1174 = vst.msk [vmem:[#allocation3 + $0x8] sm:$0xff] %vm1044, %v1170
  %1175 = vst.msk [vmem:[#allocation3 + $0x28] sm:$0xff] %vm1044, %v1171
  %1176 = vst.msk [vmem:[#allocation3 + $0x48] sm:$0xff] %vm1044, %v1172
  %1177 = vst.msk [vmem:[#allocation3 + $0x68] sm:$0xff] %vm1044, %v1173
  %v1178 = vld [vmem:[#allocation2 + $0x1c0] sm:$0xff]
  %v1179 = vld [vmem:[#allocation2 + $0x1c8] sm:$0xff]
  %v1180 = vld [vmem:[#allocation2 + $0x1d0] sm:$0xff]
  %v1181 = vld [vmem:[#allocation2 + $0x1d8] sm:$0xff]
  %1182 = vst.msk [vmem:[#allocation3 + $0x88] sm:$0xff] %vm1044, %v1178
  %1183 = vst.msk [vmem:[#allocation3 + $0xa8] sm:$0xff] %vm1044, %v1179
  %1184 = vst.msk [vmem:[#allocation3 + $0xc8] sm:$0xff] %vm1044, %v1180
  %1185 = vst.msk [vmem:[#allocation3 + $0xe8] sm:$0xff] %vm1044, %v1181
  %v1186 = vld [vmem:[#allocation2 + $0x1e8] sm:$0xff]
  %v1187 = vld [vmem:[#allocation2 + $0x1f0] sm:$0xff]
  %v1188 = vld [vmem:[#allocation2 + $0x1f8] sm:$0xff]
  %v1189 = vld [vmem:[#allocation2 + $0x200] sm:$0xff]
  %1190 = vst.msk [vmem:[#allocation3 + $0x108] sm:$0xff] %vm1044, %v1186
  %1191 = vst.msk [vmem:[#allocation3 + $0x128] sm:$0xff] %vm1044, %v1187
  %1192 = vst.msk [vmem:[#allocation3 + $0x148] sm:$0xff] %vm1044, %v1188
  %1193 = vst.msk [vmem:[#allocation3 + $0x168] sm:$0xff] %vm1044, %v1189
  %v1194 = vld [vmem:[#allocation2 + $0x210] sm:$0xff]
  %v1195 = vld [vmem:[#allocation2 + $0x218] sm:$0xff]
  %v1196 = vld [vmem:[#allocation2 + $0x220] sm:$0xff]
  %v1197 = vld [vmem:[#allocation2 + $0x228] sm:$0xff]
  %1198 = vst.msk [vmem:[#allocation3 + $0x188] sm:$0xff] %vm1044, %v1194
  %1199 = vst.msk [vmem:[#allocation3 + $0x1a8] sm:$0xff] %vm1044, %v1195
  %1200 = vst.msk [vmem:[#allocation3 + $0x1c8] sm:$0xff] %vm1044, %v1196
  %1201 = vst.msk [vmem:[#allocation3 + $0x1e8] sm:$0xff] %vm1044, %v1197
  %v1202 = vld [vmem:[#allocation2 + $0x260] sm:$0xff]
  %v1203 = vld [vmem:[#allocation2 + $0x268] sm:$0xff]
  %v1204 = vld [vmem:[#allocation2 + $0x270] sm:$0xff]
  %v1205 = vld [vmem:[#allocation2 + $0x278] sm:$0xff]
  %1206 = vst.msk [vmem:[#allocation3 + $0x8] sm:$0xff] %vm1077, %v1202
  %1207 = vst.msk [vmem:[#allocation3 + $0x28] sm:$0xff] %vm1077, %v1203
  %1208 = vst.msk [vmem:[#allocation3 + $0x48] sm:$0xff] %vm1077, %v1204
  %1209 = vst.msk [vmem:[#allocation3 + $0x68] sm:$0xff] %vm1077, %v1205
  %v1210 = vld [vmem:[#allocation2 + $0x288] sm:$0xff]
  %v1211 = vld [vmem:[#allocation2 + $0x290] sm:$0xff]
  %v1212 = vld [vmem:[#allocation2 + $0x298] sm:$0xff]
  %v1213 = vld [vmem:[#allocation2 + $0x2a0] sm:$0xff]
  %1214 = vst.msk [vmem:[#allocation3 + $0x88] sm:$0xff] %vm1077, %v1210
  %1215 = vst.msk [vmem:[#allocation3 + $0xa8] sm:$0xff] %vm1077, %v1211
  %1216 = vst.msk [vmem:[#allocation3 + $0xc8] sm:$0xff] %vm1077, %v1212
  %1217 = vst.msk [vmem:[#allocation3 + $0xe8] sm:$0xff] %vm1077, %v1213
  %v1218 = vld [vmem:[#allocation2 + $0x2b0] sm:$0xff]
  %v1219 = vld [vmem:[#allocation2 + $0x2b8] sm:$0xff]
  %v1220 = vld [vmem:[#allocation2 + $0x2c0] sm:$0xff]
  %v1221 = vld [vmem:[#allocation2 + $0x2c8] sm:$0xff]
  %1222 = vst.msk [vmem:[#allocation3 + $0x108] sm:$0xff] %vm1077, %v1218
  %1223 = vst.msk [vmem:[#allocation3 + $0x128] sm:$0xff] %vm1077, %v1219
  %1224 = vst.msk [vmem:[#allocation3 + $0x148] sm:$0xff] %vm1077, %v1220
  %1225 = vst.msk [vmem:[#allocation3 + $0x168] sm:$0xff] %vm1077, %v1221
  %v1226 = vld [vmem:[#allocation2 + $0x2d8] sm:$0xff]
  %v1227 = vld [vmem:[#allocation2 + $0x2e0] sm:$0xff]
  %v1228 = vld [vmem:[#allocation2 + $0x2e8] sm:$0xff]
  %v1229 = vld [vmem:[#allocation2 + $0x2f0] sm:$0xff]
  %1230 = vst.msk [vmem:[#allocation3 + $0x188] sm:$0xff] %vm1077, %v1226
  %1231 = vst.msk [vmem:[#allocation3 + $0x1a8] sm:$0xff] %vm1077, %v1227
  %1232 = vst.msk [vmem:[#allocation3 + $0x1c8] sm:$0xff] %vm1077, %v1228
  %1233 = vst.msk [vmem:[#allocation3 + $0x1e8] sm:$0xff] %vm1077, %v1229
  %v1234 = vld [vmem:[#allocation2 + $0x28] sm:$0xff]
  %v1235 = vld [vmem:[#allocation2 + $0x30] sm:$0xff]
  %v1236 = vld [vmem:[#allocation2 + $0x38] sm:$0xff]
  %v1237 = vld [vmem:[#allocation2 + $0x40] sm:$0xff]
  %1238 = vst.msk [vmem:[#allocation3 + $0x10] sm:$0xff] %vm978, %v1234
  %1239 = vst.msk [vmem:[#allocation3 + $0x30] sm:$0xff] %vm978, %v1235
  %1240 = vst.msk [vmem:[#allocation3 + $0x50] sm:$0xff] %vm978, %v1236
  %1241 = vst.msk [vmem:[#allocation3 + $0x70] sm:$0xff] %vm978, %v1237
  %v1242 = vld [vmem:[#allocation2 + $0x50] sm:$0xff]
  %v1243 = vld [vmem:[#allocation2 + $0x58] sm:$0xff]
  %v1244 = vld [vmem:[#allocation2 + $0x60] sm:$0xff]
  %v1245 = vld [vmem:[#allocation2 + $0x68] sm:$0xff]
  %1246 = vst.msk [vmem:[#allocation3 + $0x90] sm:$0xff] %vm978, %v1242
  %1247 = vst.msk [vmem:[#allocation3 + $0xb0] sm:$0xff] %vm978, %v1243
  %1248 = vst.msk [vmem:[#allocation3 + $0xd0] sm:$0xff] %vm978, %v1244
  %1249 = vst.msk [vmem:[#allocation3 + $0xf0] sm:$0xff] %vm978, %v1245
  %v1250 = vld [vmem:[#allocation2 + $0x78] sm:$0xff]
  %v1251 = vld [vmem:[#allocation2 + $0x80] sm:$0xff]
  %v1252 = vld [vmem:[#allocation2 + $0x88] sm:$0xff]
  %v1253 = vld [vmem:[#allocation2 + $0x90] sm:$0xff]
  %1254 = vst.msk [vmem:[#allocation3 + $0x110] sm:$0xff] %vm978, %v1250
  %1255 = vst.msk [vmem:[#allocation3 + $0x130] sm:$0xff] %vm978, %v1251
  %1256 = vst.msk [vmem:[#allocation3 + $0x150] sm:$0xff] %vm978, %v1252
  %1257 = vst.msk [vmem:[#allocation3 + $0x170] sm:$0xff] %vm978, %v1253
  %v1258 = vld [vmem:[#allocation2 + $0xa0] sm:$0xff]
  %v1259 = vld [vmem:[#allocation2 + $0xa8] sm:$0xff]
  %v1260 = vld [vmem:[#allocation2 + $0xb0] sm:$0xff]
  %v1261 = vld [vmem:[#allocation2 + $0xb8] sm:$0xff]
  %1262 = vst.msk [vmem:[#allocation3 + $0x190] sm:$0xff] %vm978, %v1258
  %1263 = vst.msk [vmem:[#allocation3 + $0x1b0] sm:$0xff] %vm978, %v1259
  %1264 = vst.msk [vmem:[#allocation3 + $0x1d0] sm:$0xff] %vm978, %v1260
  %1265 = vst.msk [vmem:[#allocation3 + $0x1f0] sm:$0xff] %vm978, %v1261
  %v1266 = vld [vmem:[#allocation2 + $0xf0] sm:$0xff]
  %v1267 = vld [vmem:[#allocation2 + $0xf8] sm:$0xff]
  %v1268 = vld [vmem:[#allocation2 + $0x100] sm:$0xff]
  %v1269 = vld [vmem:[#allocation2 + $0x108] sm:$0xff]
  %1270 = vst.msk [vmem:[#allocation3 + $0x10] sm:$0xff] %vm1011, %v1266
  %1271 = vst.msk [vmem:[#allocation3 + $0x30] sm:$0xff] %vm1011, %v1267
  %1272 = vst.msk [vmem:[#allocation3 + $0x50] sm:$0xff] %vm1011, %v1268
  %1273 = vst.msk [vmem:[#allocation3 + $0x70] sm:$0xff] %vm1011, %v1269
  %v1274 = vld [vmem:[#allocation2 + $0x118] sm:$0xff]
  %v1275 = vld [vmem:[#allocation2 + $0x120] sm:$0xff]
  %v1276 = vld [vmem:[#allocation2 + $0x128] sm:$0xff]
  %v1277 = vld [vmem:[#allocation2 + $0x130] sm:$0xff]
  %1278 = vst.msk [vmem:[#allocation3 + $0x90] sm:$0xff] %vm1011, %v1274
  %1279 = vst.msk [vmem:[#allocation3 + $0xb0] sm:$0xff] %vm1011, %v1275
  %1280 = vst.msk [vmem:[#allocation3 + $0xd0] sm:$0xff] %vm1011, %v1276
  %1281 = vst.msk [vmem:[#allocation3 + $0xf0] sm:$0xff] %vm1011, %v1277
  %v1282 = vld [vmem:[#allocation2 + $0x140] sm:$0xff]
  %v1283 = vld [vmem:[#allocation2 + $0x148] sm:$0xff]
  %v1284 = vld [vmem:[#allocation2 + $0x150] sm:$0xff]
  %v1285 = vld [vmem:[#allocation2 + $0x158] sm:$0xff]
  %1286 = vst.msk [vmem:[#allocation3 + $0x110] sm:$0xff] %vm1011, %v1282
  %1287 = vst.msk [vmem:[#allocation3 + $0x130] sm:$0xff] %vm1011, %v1283
  %1288 = vst.msk [vmem:[#allocation3 + $0x150] sm:$0xff] %vm1011, %v1284
  %1289 = vst.msk [vmem:[#allocation3 + $0x170] sm:$0xff] %vm1011, %v1285
  %v1290 = vld [vmem:[#allocation2 + $0x168] sm:$0xff]
  %v1291 = vld [vmem:[#allocation2 + $0x170] sm:$0xff]
  %v1292 = vld [vmem:[#allocation2 + $0x178] sm:$0xff]
  %v1293 = vld [vmem:[#allocation2 + $0x180] sm:$0xff]
  %1294 = vst.msk [vmem:[#allocation3 + $0x190] sm:$0xff] %vm1011, %v1290
  %1295 = vst.msk [vmem:[#allocation3 + $0x1b0] sm:$0xff] %vm1011, %v1291
  %1296 = vst.msk [vmem:[#allocation3 + $0x1d0] sm:$0xff] %vm1011, %v1292
  %1297 = vst.msk [vmem:[#allocation3 + $0x1f0] sm:$0xff] %vm1011, %v1293
  %v1298 = vld [vmem:[#allocation2 + $0x30] sm:$0xff]
  %v1299 = vld [vmem:[#allocation2 + $0x38] sm:$0xff]
  %v1300 = vld [vmem:[#allocation2 + $0x40] sm:$0xff]
  %v1301 = vld [vmem:[#allocation2 + $0x48] sm:$0xff]
  %1302 = vst.msk [vmem:[#allocation3 + $0x10] sm:$0xff] %vm1044, %v1298
  %1303 = vst.msk [vmem:[#allocation3 + $0x30] sm:$0xff] %vm1044, %v1299
  %1304 = vst.msk [vmem:[#allocation3 + $0x50] sm:$0xff] %vm1044, %v1300
  %1305 = vst.msk [vmem:[#allocation3 + $0x70] sm:$0xff] %vm1044, %v1301
  %v1306 = vld [vmem:[#allocation2 + $0x58] sm:$0xff]
  %v1307 = vld [vmem:[#allocation2 + $0x60] sm:$0xff]
  %v1308 = vld [vmem:[#allocation2 + $0x68] sm:$0xff]
  %v1309 = vld [vmem:[#allocation2 + $0x70] sm:$0xff]
  %1310 = vst.msk [vmem:[#allocation3 + $0x90] sm:$0xff] %vm1044, %v1306
  %1311 = vst.msk [vmem:[#allocation3 + $0xb0] sm:$0xff] %vm1044, %v1307
  %1312 = vst.msk [vmem:[#allocation3 + $0xd0] sm:$0xff] %vm1044, %v1308
  %1313 = vst.msk [vmem:[#allocation3 + $0xf0] sm:$0xff] %vm1044, %v1309
  %v1314 = vld [vmem:[#allocation2 + $0x80] sm:$0xff]
  %v1315 = vld [vmem:[#allocation2 + $0x88] sm:$0xff]
  %v1316 = vld [vmem:[#allocation2 + $0x90] sm:$0xff]
  %v1317 = vld [vmem:[#allocation2 + $0x98] sm:$0xff]
  %1318 = vst.msk [vmem:[#allocation3 + $0x110] sm:$0xff] %vm1044, %v1314
  %1319 = vst.msk [vmem:[#allocation3 + $0x130] sm:$0xff] %vm1044, %v1315
  %1320 = vst.msk [vmem:[#allocation3 + $0x150] sm:$0xff] %vm1044, %v1316
  %1321 = vst.msk [vmem:[#allocation3 + $0x170] sm:$0xff] %vm1044, %v1317
  %v1322 = vld [vmem:[#allocation2 + $0xa8] sm:$0xff]
  %v1323 = vld [vmem:[#allocation2 + $0xb0] sm:$0xff]
  %v1324 = vld [vmem:[#allocation2 + $0xb8] sm:$0xff]
  %v1325 = vld [vmem:[#allocation2 + $0xc0] sm:$0xff]
  %1326 = vst.msk [vmem:[#allocation3 + $0x190] sm:$0xff] %vm1044, %v1322
  %1327 = vst.msk [vmem:[#allocation3 + $0x1b0] sm:$0xff] %vm1044, %v1323
  %1328 = vst.msk [vmem:[#allocation3 + $0x1d0] sm:$0xff] %vm1044, %v1324
  %1329 = vst.msk [vmem:[#allocation3 + $0x1f0] sm:$0xff] %vm1044, %v1325
  %v1330 = vld [vmem:[#allocation2 + $0xf8] sm:$0xff]
  %v1331 = vld [vmem:[#allocation2 + $0x100] sm:$0xff]
  %v1332 = vld [vmem:[#allocation2 + $0x108] sm:$0xff]
  %v1333 = vld [vmem:[#allocation2 + $0x110] sm:$0xff]
  %1334 = vst.msk [vmem:[#allocation3 + $0x10] sm:$0xff] %vm1077, %v1330
  %1335 = vst.msk [vmem:[#allocation3 + $0x30] sm:$0xff] %vm1077, %v1331
  %1336 = vst.msk [vmem:[#allocation3 + $0x50] sm:$0xff] %vm1077, %v1332
  %1337 = vst.msk [vmem:[#allocation3 + $0x70] sm:$0xff] %vm1077, %v1333
  %v1338 = vld [vmem:[#allocation2 + $0x120] sm:$0xff]
  %v1339 = vld [vmem:[#allocation2 + $0x128] sm:$0xff]
  %v1340 = vld [vmem:[#allocation2 + $0x130] sm:$0xff]
  %v1341 = vld [vmem:[#allocation2 + $0x138] sm:$0xff]
  %1342 = vst.msk [vmem:[#allocation3 + $0x90] sm:$0xff] %vm1077, %v1338
  %1343 = vst.msk [vmem:[#allocation3 + $0xb0] sm:$0xff] %vm1077, %v1339
  %1344 = vst.msk [vmem:[#allocation3 + $0xd0] sm:$0xff] %vm1077, %v1340
  %1345 = vst.msk [vmem:[#allocation3 + $0xf0] sm:$0xff] %vm1077, %v1341
  %v1346 = vld [vmem:[#allocation2 + $0x148] sm:$0xff]
  %v1347 = vld [vmem:[#allocation2 + $0x150] sm:$0xff]
  %v1348 = vld [vmem:[#allocation2 + $0x158] sm:$0xff]
  %v1349 = vld [vmem:[#allocation2 + $0x160] sm:$0xff]
  %1350 = vst.msk [vmem:[#allocation3 + $0x110] sm:$0xff] %vm1077, %v1346
  %1351 = vst.msk [vmem:[#allocation3 + $0x130] sm:$0xff] %vm1077, %v1347
  %1352 = vst.msk [vmem:[#allocation3 + $0x150] sm:$0xff] %vm1077, %v1348
  %1353 = vst.msk [vmem:[#allocation3 + $0x170] sm:$0xff] %vm1077, %v1349
  %v1354 = vld [vmem:[#allocation2 + $0x170] sm:$0xff]
  %v1355 = vld [vmem:[#allocation2 + $0x178] sm:$0xff]
  %v1356 = vld [vmem:[#allocation2 + $0x180] sm:$0xff]
  %v1357 = vld [vmem:[#allocation2 + $0x188] sm:$0xff]
  %1358 = vst.msk [vmem:[#allocation3 + $0x190] sm:$0xff] %vm1077, %v1354
  %1359 = vst.msk [vmem:[#allocation3 + $0x1b0] sm:$0xff] %vm1077, %v1355
  %1360 = vst.msk [vmem:[#allocation3 + $0x1d0] sm:$0xff] %vm1077, %v1356
  %1361 = vst.msk [vmem:[#allocation3 + $0x1f0] sm:$0xff] %vm1077, %v1357
  %v1362 = vld [vmem:[#allocation2 + $0x1b8] sm:$0xff]
  %v1363 = vld [vmem:[#allocation2 + $0x1c0] sm:$0xff]
  %v1364 = vld [vmem:[#allocation2 + $0x1c8] sm:$0xff]
  %v1365 = vld [vmem:[#allocation2 + $0x1d0] sm:$0xff]
  %1366 = vst.msk [vmem:[#allocation3 + $0x18] sm:$0xff] %vm978, %v1362
  %1367 = vst.msk [vmem:[#allocation3 + $0x38] sm:$0xff] %vm978, %v1363
  %1368 = vst.msk [vmem:[#allocation3 + $0x58] sm:$0xff] %vm978, %v1364
  %1369 = vst.msk [vmem:[#allocation3 + $0x78] sm:$0xff] %vm978, %v1365
  %v1370 = vld [vmem:[#allocation2 + $0x1e0] sm:$0xff]
  %v1371 = vld [vmem:[#allocation2 + $0x1e8] sm:$0xff]
  %v1372 = vld [vmem:[#allocation2 + $0x1f0] sm:$0xff]
  %v1373 = vld [vmem:[#allocation2 + $0x1f8] sm:$0xff]
  %1374 = vst.msk [vmem:[#allocation3 + $0x98] sm:$0xff] %vm978, %v1370
  %1375 = vst.msk [vmem:[#allocation3 + $0xb8] sm:$0xff] %vm978, %v1371
  %1376 = vst.msk [vmem:[#allocation3 + $0xd8] sm:$0xff] %vm978, %v1372
  %1377 = vst.msk [vmem:[#allocation3 + $0xf8] sm:$0xff] %vm978, %v1373
  %v1378 = vld [vmem:[#allocation2 + $0x208] sm:$0xff]
  %v1379 = vld [vmem:[#allocation2 + $0x210] sm:$0xff]
  %v1380 = vld [vmem:[#allocation2 + $0x218] sm:$0xff]
  %v1381 = vld [vmem:[#allocation2 + $0x220] sm:$0xff]
  %1382 = vst.msk [vmem:[#allocation3 + $0x118] sm:$0xff] %vm978, %v1378
  %1383 = vst.msk [vmem:[#allocation3 + $0x138] sm:$0xff] %vm978, %v1379
  %1384 = vst.msk [vmem:[#allocation3 + $0x158] sm:$0xff] %vm978, %v1380
  %1385 = vst.msk [vmem:[#allocation3 + $0x178] sm:$0xff] %vm978, %v1381
  %v1386 = vld [vmem:[#allocation2 + $0x230] sm:$0xff]
  %v1387 = vld [vmem:[#allocation2 + $0x238] sm:$0xff]
  %v1388 = vld [vmem:[#allocation2 + $0x240] sm:$0xff]
  %v1389 = vld [vmem:[#allocation2 + $0x248] sm:$0xff]
  %1390 = vst.msk [vmem:[#allocation3 + $0x198] sm:$0xff] %vm978, %v1386
  %1391 = vst.msk [vmem:[#allocation3 + $0x1b8] sm:$0xff] %vm978, %v1387
  %1392 = vst.msk [vmem:[#allocation3 + $0x1d8] sm:$0xff] %vm978, %v1388
  %1393 = vst.msk [vmem:[#allocation3 + $0x1f8] sm:$0xff] %vm978, %v1389
  %v1394 = vld [vmem:[#allocation2 + $0x280] sm:$0xff]
  %v1395 = vld [vmem:[#allocation2 + $0x288] sm:$0xff]
  %v1396 = vld [vmem:[#allocation2 + $0x290] sm:$0xff]
  %v1397 = vld [vmem:[#allocation2 + $0x298] sm:$0xff]
  %1398 = vst.msk [vmem:[#allocation3 + $0x18] sm:$0xff] %vm1011, %v1394
  %1399 = vst.msk [vmem:[#allocation3 + $0x38] sm:$0xff] %vm1011, %v1395
  %1400 = vst.msk [vmem:[#allocation3 + $0x58] sm:$0xff] %vm1011, %v1396
  %1401 = vst.msk [vmem:[#allocation3 + $0x78] sm:$0xff] %vm1011, %v1397
  %v1402 = vld [vmem:[#allocation2 + $0x2a8] sm:$0xff]
  %v1403 = vld [vmem:[#allocation2 + $0x2b0] sm:$0xff]
  %v1404 = vld [vmem:[#allocation2 + $0x2b8] sm:$0xff]
  %v1405 = vld [vmem:[#allocation2 + $0x2c0] sm:$0xff]
  %1406 = vst.msk [vmem:[#allocation3 + $0x98] sm:$0xff] %vm1011, %v1402
  %1407 = vst.msk [vmem:[#allocation3 + $0xb8] sm:$0xff] %vm1011, %v1403
  %1408 = vst.msk [vmem:[#allocation3 + $0xd8] sm:$0xff] %vm1011, %v1404
  %1409 = vst.msk [vmem:[#allocation3 + $0xf8] sm:$0xff] %vm1011, %v1405
  %v1410 = vld [vmem:[#allocation2 + $0x2d0] sm:$0xff]
  %v1411 = vld [vmem:[#allocation2 + $0x2d8] sm:$0xff]
  %v1412 = vld [vmem:[#allocation2 + $0x2e0] sm:$0xff]
  %v1413 = vld [vmem:[#allocation2 + $0x2e8] sm:$0xff]
  %1414 = vst.msk [vmem:[#allocation3 + $0x118] sm:$0xff] %vm1011, %v1410
  %1415 = vst.msk [vmem:[#allocation3 + $0x138] sm:$0xff] %vm1011, %v1411
  %1416 = vst.msk [vmem:[#allocation3 + $0x158] sm:$0xff] %vm1011, %v1412
  %1417 = vst.msk [vmem:[#allocation3 + $0x178] sm:$0xff] %vm1011, %v1413
  %v1418 = vld [vmem:[#allocation2 + $0x2f8] sm:$0xff]
  %v1419 = vld [vmem:[#allocation2 + $0x300] sm:$0xff]
  %v1420 = vld [vmem:[#allocation2 + $0x308] sm:$0xff]
  %v1421 = vld [vmem:[#allocation2 + $0x310] sm:$0xff]
  %1422 = vst.msk [vmem:[#allocation3 + $0x198] sm:$0xff] %vm1011, %v1418
  %1423 = vst.msk [vmem:[#allocation3 + $0x1b8] sm:$0xff] %vm1011, %v1419
  %1424 = vst.msk [vmem:[#allocation3 + $0x1d8] sm:$0xff] %vm1011, %v1420
  %1425 = vst.msk [vmem:[#allocation3 + $0x1f8] sm:$0xff] %vm1011, %v1421
  %v1426 = vld [vmem:[#allocation2 + $0x1c0] sm:$0xff]
  %v1427 = vld [vmem:[#allocation2 + $0x1c8] sm:$0xff]
  %v1428 = vld [vmem:[#allocation2 + $0x1d0] sm:$0xff]
  %v1429 = vld [vmem:[#allocation2 + $0x1d8] sm:$0xff]
  %1430 = vst.msk [vmem:[#allocation3 + $0x18] sm:$0xff] %vm1044, %v1426
  %1431 = vst.msk [vmem:[#allocation3 + $0x38] sm:$0xff] %vm1044, %v1427
  %1432 = vst.msk [vmem:[#allocation3 + $0x58] sm:$0xff] %vm1044, %v1428
  %1433 = vst.msk [vmem:[#allocation3 + $0x78] sm:$0xff] %vm1044, %v1429
  %v1434 = vld [vmem:[#allocation2 + $0x1e8] sm:$0xff]
  %v1435 = vld [vmem:[#allocation2 + $0x1f0] sm:$0xff]
  %v1436 = vld [vmem:[#allocation2 + $0x1f8] sm:$0xff]
  %v1437 = vld [vmem:[#allocation2 + $0x200] sm:$0xff]
  %1438 = vst.msk [vmem:[#allocation3 + $0x98] sm:$0xff] %vm1044, %v1434
  %1439 = vst.msk [vmem:[#allocation3 + $0xb8] sm:$0xff] %vm1044, %v1435
  %1440 = vst.msk [vmem:[#allocation3 + $0xd8] sm:$0xff] %vm1044, %v1436
  %1441 = vst.msk [vmem:[#allocation3 + $0xf8] sm:$0xff] %vm1044, %v1437
  %v1442 = vld [vmem:[#allocation2 + $0x210] sm:$0xff]
  %v1443 = vld [vmem:[#allocation2 + $0x218] sm:$0xff]
  %v1444 = vld [vmem:[#allocation2 + $0x220] sm:$0xff]
  %v1445 = vld [vmem:[#allocation2 + $0x228] sm:$0xff]
  %1446 = vst.msk [vmem:[#allocation3 + $0x118] sm:$0xff] %vm1044, %v1442
  %1447 = vst.msk [vmem:[#allocation3 + $0x138] sm:$0xff] %vm1044, %v1443
  %1448 = vst.msk [vmem:[#allocation3 + $0x158] sm:$0xff] %vm1044, %v1444
  %1449 = vst.msk [vmem:[#allocation3 + $0x178] sm:$0xff] %vm1044, %v1445
  %v1450 = vld [vmem:[#allocation2 + $0x238] sm:$0xff]
  %v1451 = vld [vmem:[#allocation2 + $0x240] sm:$0xff]
  %v1452 = vld [vmem:[#allocation2 + $0x248] sm:$0xff]
  %v1453 = vld [vmem:[#allocation2 + $0x250] sm:$0xff]
  %1454 = vst.msk [vmem:[#allocation3 + $0x198] sm:$0xff] %vm1044, %v1450
  %1455 = vst.msk [vmem:[#allocation3 + $0x1b8] sm:$0xff] %vm1044, %v1451
  %1456 = vst.msk [vmem:[#allocation3 + $0x1d8] sm:$0xff] %vm1044, %v1452
  %1457 = vst.msk [vmem:[#allocation3 + $0x1f8] sm:$0xff] %vm1044, %v1453
  %v1458 = vld [vmem:[#allocation2 + $0x288] sm:$0xff]
  %v1459 = vld [vmem:[#allocation2 + $0x290] sm:$0xff]
  %v1460 = vld [vmem:[#allocation2 + $0x298] sm:$0xff]
  %v1461 = vld [vmem:[#allocation2 + $0x2a0] sm:$0xff]
  %1462 = vst.msk [vmem:[#allocation3 + $0x18] sm:$0xff] %vm1077, %v1458
  %1463 = vst.msk [vmem:[#allocation3 + $0x38] sm:$0xff] %vm1077, %v1459
  %1464 = vst.msk [vmem:[#allocation3 + $0x58] sm:$0xff] %vm1077, %v1460
  %1465 = vst.msk [vmem:[#allocation3 + $0x78] sm:$0xff] %vm1077, %v1461
  %v1466 = vld [vmem:[#allocation2 + $0x2b0] sm:$0xff]
  %v1467 = vld [vmem:[#allocation2 + $0x2b8] sm:$0xff]
  %v1468 = vld [vmem:[#allocation2 + $0x2c0] sm:$0xff]
  %v1469 = vld [vmem:[#allocation2 + $0x2c8] sm:$0xff]
  %1470 = vst.msk [vmem:[#allocation3 + $0x98] sm:$0xff] %vm1077, %v1466
  %1471 = vst.msk [vmem:[#allocation3 + $0xb8] sm:$0xff] %vm1077, %v1467
  %1472 = vst.msk [vmem:[#allocation3 + $0xd8] sm:$0xff] %vm1077, %v1468
  %1473 = vst.msk [vmem:[#allocation3 + $0xf8] sm:$0xff] %vm1077, %v1469
  %v1474 = vld [vmem:[#allocation2 + $0x2d8] sm:$0xff]
  %v1475 = vld [vmem:[#allocation2 + $0x2e0] sm:$0xff]
  %v1476 = vld [vmem:[#allocation2 + $0x2e8] sm:$0xff]
  %v1477 = vld [vmem:[#allocation2 + $0x2f0] sm:$0xff]
  %1478 = vst.msk [vmem:[#allocation3 + $0x118] sm:$0xff] %vm1077, %v1474
  %1479 = vst.msk [vmem:[#allocation3 + $0x138] sm:$0xff] %vm1077, %v1475
  %1480 = vst.msk [vmem:[#allocation3 + $0x158] sm:$0xff] %vm1077, %v1476
  %1481 = vst.msk [vmem:[#allocation3 + $0x178] sm:$0xff] %vm1077, %v1477
  %v1482 = vld [vmem:[#allocation2 + $0x300] sm:$0xff]
  %v1483 = vld [vmem:[#allocation2 + $0x308] sm:$0xff]
  %v1484 = vld [vmem:[#allocation2 + $0x310] sm:$0xff]
  %v1485 = vld [vmem:[#allocation2 + $0x318] sm:$0xff]
  %1486 = vst.msk [vmem:[#allocation3 + $0x198] sm:$0xff] %vm1077, %v1482
  %1487 = vst.msk [vmem:[#allocation3 + $0x1b8] sm:$0xff] %vm1077, %v1483
  %1488 = vst.msk [vmem:[#allocation3 + $0x1d8] sm:$0xff] %vm1077, %v1484
  %1489 = vst.msk [vmem:[#allocation3 + $0x1f8] sm:$0xff] %vm1077, %v1485
  %v1490 = vld [vmem:[#allocation3] sm:$0xff]
  %v1491 = vld [vmem:[#allocation3 + $0x8] sm:$0xff]
  %v1492 = vld [vmem:[#allocation3 + $0x10] sm:$0xff]
  %v1493 = vld [vmem:[#allocation3 + $0x18] sm:$0xff]
  %v1494 = vld [vmem:[#allocation3 + $0x20] sm:$0xff]
  %v1495 = vld [vmem:[#allocation3 + $0x28] sm:$0xff]
  %v1496 = vld [vmem:[#allocation3 + $0x30] sm:$0xff]
  %v1497 = vld [vmem:[#allocation3 + $0x38] sm:$0xff]
  %v1498 = vld [vmem:[#allocation3 + $0x40] sm:$0xff]
  %v1499 = vld [vmem:[#allocation3 + $0x48] sm:$0xff]
  %v1500 = vld [vmem:[#allocation3 + $0x50] sm:$0xff]
  %v1501 = vld [vmem:[#allocation3 + $0x58] sm:$0xff]
  %v1502 = vld [vmem:[#allocation3 + $0x60] sm:$0xff]
  %v1503 = vld [vmem:[#allocation3 + $0x68] sm:$0xff]
  %v1504 = vld [vmem:[#allocation3 + $0x70] sm:$0xff]
  %v1505 = vld [vmem:[#allocation3 + $0x78] sm:$0xff]
  %v1506 = vld [vmem:[#allocation3 + $0x80] sm:$0xff]
  %v1507 = vld [vmem:[#allocation3 + $0x88] sm:$0xff]
  %v1508 = vld [vmem:[#allocation3 + $0x90] sm:$0xff]
  %v1509 = vld [vmem:[#allocation3 + $0x98] sm:$0xff]
  %v1510 = vld [vmem:[#allocation3 + $0xa0] sm:$0xff]
  %v1511 = vld [vmem:[#allocation3 + $0xa8] sm:$0xff]
  %v1512 = vld [vmem:[#allocation3 + $0xb0] sm:$0xff]
  %v1513 = vld [vmem:[#allocation3 + $0xb8] sm:$0xff]
  %v1514 = vld [vmem:[#allocation3 + $0xc0] sm:$0xff]
  %v1515 = vld [vmem:[#allocation3 + $0xc8] sm:$0xff]
  %v1516 = vld [vmem:[#allocation3 + $0xd0] sm:$0xff]
  %v1517 = vld [vmem:[#allocation3 + $0xd8] sm:$0xff]
  %v1518 = vld [vmem:[#allocation3 + $0xe0] sm:$0xff]
  %v1519 = vld [vmem:[#allocation3 + $0xe8] sm:$0xff]
  %v1520 = vld [vmem:[#allocation3 + $0xf0] sm:$0xff]
  %v1521 = vld [vmem:[#allocation3 + $0xf8] sm:$0xff]
  %v1522 = vld [vmem:[#allocation3 + $0x100] sm:$0xff]
  %v1523 = vld [vmem:[#allocation3 + $0x108] sm:$0xff]
  %v1524 = vld [vmem:[#allocation3 + $0x110] sm:$0xff]
  %v1525 = vld [vmem:[#allocation3 + $0x118] sm:$0xff]
  %v1526 = vld [vmem:[#allocation3 + $0x120] sm:$0xff]
  %v1527 = vld [vmem:[#allocation3 + $0x128] sm:$0xff]
  %v1528 = vld [vmem:[#allocation3 + $0x130] sm:$0xff]
  %v1529 = vld [vmem:[#allocation3 + $0x138] sm:$0xff]
  %v1530 = vld [vmem:[#allocation3 + $0x140] sm:$0xff]
  %v1531 = vld [vmem:[#allocation3 + $0x148] sm:$0xff]
  %v1532 = vld [vmem:[#allocation3 + $0x150] sm:$0xff]
  %v1533 = vld [vmem:[#allocation3 + $0x158] sm:$0xff]
  %v1534 = vld [vmem:[#allocation3 + $0x160] sm:$0xff]
  %v1535 = vld [vmem:[#allocation3 + $0x168] sm:$0xff]
  %v1536 = vld [vmem:[#allocation3 + $0x170] sm:$0xff]
  %v1537 = vld [vmem:[#allocation3 + $0x178] sm:$0xff]
  %v1538 = vld [vmem:[#allocation3 + $0x180] sm:$0xff]
  %v1539 = vld [vmem:[#allocation3 + $0x188] sm:$0xff]
  %v1540 = vld [vmem:[#allocation3 + $0x190] sm:$0xff]
  %v1541 = vld [vmem:[#allocation3 + $0x198] sm:$0xff]
  %v1542 = vld [vmem:[#allocation3 + $0x1a0] sm:$0xff]
  %v1543 = vld [vmem:[#allocation3 + $0x1a8] sm:$0xff]
  %v1544 = vld [vmem:[#allocation3 + $0x1b0] sm:$0xff]
  %v1545 = vld [vmem:[#allocation3 + $0x1b8] sm:$0xff]
  %v1546 = vld [vmem:[#allocation3 + $0x1c0] sm:$0xff]
  %v1547 = vld [vmem:[#allocation3 + $0x1c8] sm:$0xff]
  %v1548 = vld [vmem:[#allocation3 + $0x1d0] sm:$0xff]
  %v1549 = vld [vmem:[#allocation3 + $0x1d8] sm:$0xff]
  %v1550 = vld [vmem:[#allocation3 + $0x1e0] sm:$0xff]
  %v1551 = vld [vmem:[#allocation3 + $0x1e8] sm:$0xff]
  %v1552 = vld [vmem:[#allocation3 + $0x1f0] sm:$0xff]
  %v1553 = vld [vmem:[#allocation3 + $0x1f8] sm:$0xff]
  %v1554 = vld [vmem:[%s3] sm:$0xff]
  %v1555 = vld [vmem:[%s3 + $0x8] sm:$0xff]
  %v1556 = vld [vmem:[%s3 + $0x10] sm:$0xff]
  %v1557 = vld [vmem:[%s3 + $0x18] sm:$0xff]
  %v1558 = vld [vmem:[%s3 + $0x20] sm:$0xff]
  %v1559 = vld [vmem:[%s3 + $0x28] sm:$0xff]
  %v1560 = vld [vmem:[%s3 + $0x30] sm:$0xff]
  %v1561 = vld [vmem:[%s3 + $0x38] sm:$0xff]
  %v1562 = vld [vmem:[%s3 + $0x40] sm:$0xff]
  %v1563 = vld [vmem:[%s3 + $0x48] sm:$0xff]
  %v1564 = vld [vmem:[%s3 + $0x50] sm:$0xff]
  %v1565 = vld [vmem:[%s3 + $0x58] sm:$0xff]
  %v1566 = vld [vmem:[%s3 + $0x60] sm:$0xff]
  %v1567 = vld [vmem:[%s3 + $0x68] sm:$0xff]
  %v1568 = vld [vmem:[%s3 + $0x70] sm:$0xff]
  %v1569 = vld [vmem:[%s3 + $0x78] sm:$0xff]
  %v1570 = vld [vmem:[%s3 + $0x80] sm:$0xff]
  %v1571 = vld [vmem:[%s3 + $0x88] sm:$0xff]
  %v1572 = vld [vmem:[%s3 + $0x90] sm:$0xff]
  %v1573 = vld [vmem:[%s3 + $0x98] sm:$0xff]
  %v1574 = vld [vmem:[%s3 + $0xa0] sm:$0xff]
  %v1575 = vld [vmem:[%s3 + $0xa8] sm:$0xff]
  %v1576 = vld [vmem:[%s3 + $0xb0] sm:$0xff]
  %v1577 = vld [vmem:[%s3 + $0xb8] sm:$0xff]
  %v1578 = vld [vmem:[%s3 + $0xc0] sm:$0xff]
  %v1579 = vld [vmem:[%s3 + $0xc8] sm:$0xff]
  %v1580 = vld [vmem:[%s3 + $0xd0] sm:$0xff]
  %v1581 = vld [vmem:[%s3 + $0xd8] sm:$0xff]
  %v1582 = vld [vmem:[%s3 + $0xe0] sm:$0xff]
  %v1583 = vld [vmem:[%s3 + $0xe8] sm:$0xff]
  %v1584 = vld [vmem:[%s3 + $0xf0] sm:$0xff]
  %v1585 = vld [vmem:[%s3 + $0xf8] sm:$0xff]
  %v1586 = vld [vmem:[%s3 + $0x100] sm:$0xff]
  %v1587 = vld [vmem:[%s3 + $0x108] sm:$0xff]
  %v1588 = vld [vmem:[%s3 + $0x110] sm:$0xff]
  %v1589 = vld [vmem:[%s3 + $0x118] sm:$0xff]
  %v1590 = vld [vmem:[%s3 + $0x120] sm:$0xff]
  %v1591 = vld [vmem:[%s3 + $0x128] sm:$0xff]
  %v1592 = vld [vmem:[%s3 + $0x130] sm:$0xff]
  %v1593 = vld [vmem:[%s3 + $0x138] sm:$0xff]
  %v1594 = vld [vmem:[%s3 + $0x140] sm:$0xff]
  %v1595 = vld [vmem:[%s3 + $0x148] sm:$0xff]
  %v1596 = vld [vmem:[%s3 + $0x150] sm:$0xff]
  %v1597 = vld [vmem:[%s3 + $0x158] sm:$0xff]
  %v1598 = vld [vmem:[%s3 + $0x160] sm:$0xff]
  %v1599 = vld [vmem:[%s3 + $0x168] sm:$0xff]
  %v1600 = vld [vmem:[%s3 + $0x170] sm:$0xff]
  %v1601 = vld [vmem:[%s3 + $0x178] sm:$0xff]
  %v1602 = vld [vmem:[%s3 + $0x180] sm:$0xff]
  %v1603 = vld [vmem:[%s3 + $0x188] sm:$0xff]
  %v1604 = vld [vmem:[%s3 + $0x190] sm:$0xff]
  %v1605 = vld [vmem:[%s3 + $0x198] sm:$0xff]
  %v1606 = vld [vmem:[%s3 + $0x1a0] sm:$0xff]
  %v1607 = vld [vmem:[%s3 + $0x1a8] sm:$0xff]
  %v1608 = vld [vmem:[%s3 + $0x1b0] sm:$0xff]
  %v1609 = vld [vmem:[%s3 + $0x1b8] sm:$0xff]
  %v1610 = vld [vmem:[%s3 + $0x1c0] sm:$0xff]
  %v1611 = vld [vmem:[%s3 + $0x1c8] sm:$0xff]
  %v1612 = vld [vmem:[%s3 + $0x1d0] sm:$0xff]
  %v1613 = vld [vmem:[%s3 + $0x1d8] sm:$0xff]
  %v1614 = vld [vmem:[%s3 + $0x1e0] sm:$0xff]
  %v1615 = vld [vmem:[%s3 + $0x1e8] sm:$0xff]
  %v1616 = vld [vmem:[%s3 + $0x1f0] sm:$0xff]
  %v1617 = vld [vmem:[%s3 + $0x1f8] sm:$0xff]
  %v1618 = vld [vmem:[%s4] sm:$0x1]
  %v1620 = vperm.slane %v1618, 0
  %1622 = vmatpush.msra.mxu0 %v1569
  %1623 = vmatpush.msra.mxu0 %v1568
  %1624 = vmatpush.msra.mxu0 %v1567
  %1625 = vmatpush.msra.mxu0 %v1566
  %1626 = vmatpush.msra.mxu0 %v1565
  %1627 = vmatpush.msra.mxu0 %v1564
  %1628 = vmatpush.msra.mxu0 %v1563
  %1629 = vmatpush.msra.mxu0 %v1562
  %1630 = vmatpush.msra.mxu0 %v1561
  %1631 = vmatpush.msra.mxu0 %v1560
  %1632 = vmatpush.msra.mxu0 %v1559
  %1633 = vmatpush.msra.mxu0 %v1558
  %1634 = vmatpush.msra.mxu0 %v1557
  %1635 = vmatpush.msra.mxu0 %v1556
  %1636 = vmatpush.msra.mxu0 %v1555
  %1637 = vmatpush.msra.mxu0 %v1554
  %1638 = vmatmul.f32.gmra.mxu0 %v1490
  %v1639 = vpop.f32.mrf.mxu0
  %v1640 = vadd.f32 %v1620, %v1639
  %1641 = vmatmul.f32.gmra.mxu0 %v1494
  %v1642 = vpop.f32.mrf.mxu0
  %v1643 = vadd.f32 %v1620, %v1642
  %1644 = vmatmul.f32.gmra.mxu0 %v1498
  %v1645 = vpop.f32.mrf.mxu0
  %v1646 = vadd.f32 %v1620, %v1645
  %1647 = vmatmul.f32.gmra.mxu0 %v1502
  %v1648 = vpop.f32.mrf.mxu0
  %v1649 = vadd.f32 %v1620, %v1648
  %1650 = vmatmul.f32.gmra.mxu0 %v1506
  %v1651 = vpop.f32.mrf.mxu0
  %v1652 = vadd.f32 %v1620, %v1651
  %1653 = vmatmul.f32.gmra.mxu0 %v1510
  %v1654 = vpop.f32.mrf.mxu0
  %v1655 = vadd.f32 %v1620, %v1654
  %1656 = vmatmul.f32.gmra.mxu0 %v1514
  %v1657 = vpop.f32.mrf.mxu0
  %v1658 = vadd.f32 %v1620, %v1657
  %1659 = vmatmul.f32.gmra.mxu0 %v1518
  %v1660 = vpop.f32.mrf.mxu0
  %v1661 = vadd.f32 %v1620, %v1660
  %1662 = vmatmul.f32.gmra.mxu0 %v1522
  %v1663 = vpop.f32.mrf.mxu0
  %v1664 = vadd.f32 %v1620, %v1663
  %1665 = vmatmul.f32.gmra.mxu0 %v1526
  %v1666 = vpop.f32.mrf.mxu0
  %v1667 = vadd.f32 %v1620, %v1666
  %1668 = vmatmul.f32.gmra.mxu0 %v1530
  %v1669 = vpop.f32.mrf.mxu0
  %v1670 = vadd.f32 %v1620, %v1669
  %1671 = vmatmul.f32.gmra.mxu0 %v1534
  %v1672 = vpop.f32.mrf.mxu0
  %v1673 = vadd.f32 %v1620, %v1672
  %1674 = vmatmul.f32.gmra.mxu0 %v1538
  %v1675 = vpop.f32.mrf.mxu0
  %v1676 = vadd.f32 %v1620, %v1675
  %1677 = vmatmul.f32.gmra.mxu0 %v1542
  %v1678 = vpop.f32.mrf.mxu0
  %v1679 = vadd.f32 %v1620, %v1678
  %1680 = vmatmul.f32.gmra.mxu0 %v1546
  %v1681 = vpop.f32.mrf.mxu0
  %v1682 = vadd.f32 %v1620, %v1681
  %1683 = vmatmul.f32.gmra.mxu0 %v1550
  %v1684 = vpop.f32.mrf.mxu0
  %v1685 = vadd.f32 %v1620, %v1684
  %1686 = vdwg.mxu0
  %1687 = vmatpush.msra.mxu0 %v1585
  %1688 = vmatpush.msra.mxu0 %v1584
  %1689 = vmatpush.msra.mxu0 %v1583
  %1690 = vmatpush.msra.mxu0 %v1582
  %1691 = vmatpush.msra.mxu0 %v1581
  %1692 = vmatpush.msra.mxu0 %v1580
  %1693 = vmatpush.msra.mxu0 %v1579
  %1694 = vmatpush.msra.mxu0 %v1578
  %1695 = vmatpush.msra.mxu0 %v1577
  %1696 = vmatpush.msra.mxu0 %v1576
  %1697 = vmatpush.msra.mxu0 %v1575
  %1698 = vmatpush.msra.mxu0 %v1574
  %1699 = vmatpush.msra.mxu0 %v1573
  %1700 = vmatpush.msra.mxu0 %v1572
  %1701 = vmatpush.msra.mxu0 %v1571
  %1702 = vmatpush.msra.mxu0 %v1570
  %1703 = vmatmul.f32.gmra.mxu0 %v1491
  %v1704 = vpop.f32.mrf.mxu0
  %v1705 = vadd.f32 %v1640, %v1704
  %1706 = vmatmul.f32.gmra.mxu0 %v1495
  %v1707 = vpop.f32.mrf.mxu0
  %v1708 = vadd.f32 %v1643, %v1707
  %1709 = vmatmul.f32.gmra.mxu0 %v1499
  %v1710 = vpop.f32.mrf.mxu0
  %v1711 = vadd.f32 %v1646, %v1710
  %1712 = vmatmul.f32.gmra.mxu0 %v1503
  %v1713 = vpop.f32.mrf.mxu0
  %v1714 = vadd.f32 %v1649, %v1713
  %1715 = vmatmul.f32.gmra.mxu0 %v1507
  %v1716 = vpop.f32.mrf.mxu0
  %v1717 = vadd.f32 %v1652, %v1716
  %1718 = vmatmul.f32.gmra.mxu0 %v1511
  %v1719 = vpop.f32.mrf.mxu0
  %v1720 = vadd.f32 %v1655, %v1719
  %1721 = vmatmul.f32.gmra.mxu0 %v1515
  %v1722 = vpop.f32.mrf.mxu0
  %v1723 = vadd.f32 %v1658, %v1722
  %1724 = vmatmul.f32.gmra.mxu0 %v1519
  %v1725 = vpop.f32.mrf.mxu0
  %v1726 = vadd.f32 %v1661, %v1725
  %1727 = vmatmul.f32.gmra.mxu0 %v1523
  %v1728 = vpop.f32.mrf.mxu0
  %v1729 = vadd.f32 %v1664, %v1728
  %1730 = vmatmul.f32.gmra.mxu0 %v1527
  %v1731 = vpop.f32.mrf.mxu0
  %v1732 = vadd.f32 %v1667, %v1731
  %1733 = vmatmul.f32.gmra.mxu0 %v1531
  %v1734 = vpop.f32.mrf.mxu0
  %v1735 = vadd.f32 %v1670, %v1734
  %1736 = vmatmul.f32.gmra.mxu0 %v1535
  %v1737 = vpop.f32.mrf.mxu0
  %v1738 = vadd.f32 %v1673, %v1737
  %1739 = vmatmul.f32.gmra.mxu0 %v1539
  %v1740 = vpop.f32.mrf.mxu0
  %v1741 = vadd.f32 %v1676, %v1740
  %1742 = vmatmul.f32.gmra.mxu0 %v1543
  %v1743 = vpop.f32.mrf.mxu0
  %v1744 = vadd.f32 %v1679, %v1743
  %1745 = vmatmul.f32.gmra.mxu0 %v1547
  %v1746 = vpop.f32.mrf.mxu0
  %v1747 = vadd.f32 %v1682, %v1746
  %1748 = vmatmul.f32.gmra.mxu0 %v1551
  %v1749 = vpop.f32.mrf.mxu0
  %v1750 = vadd.f32 %v1685, %v1749
  %1751 = vdwg.mxu0
  %1752 = vmatpush.msra.mxu0 %v1601
  %1753 = vmatpush.msra.mxu0 %v1600
  %1754 = vmatpush.msra.mxu0 %v1599
  %1755 = vmatpush.msra.mxu0 %v1598
  %1756 = vmatpush.msra.mxu0 %v1597
  %1757 = vmatpush.msra.mxu0 %v1596
  %1758 = vmatpush.msra.mxu0 %v1595
  %1759 = vmatpush.msra.mxu0 %v1594
  %1760 = vmatpush.msra.mxu0 %v1593
  %1761 = vmatpush.msra.mxu0 %v1592
  %1762 = vmatpush.msra.mxu0 %v1591
  %1763 = vmatpush.msra.mxu0 %v1590
  %1764 = vmatpush.msra.mxu0 %v1589
  %1765 = vmatpush.msra.mxu0 %v1588
  %1766 = vmatpush.msra.mxu0 %v1587
  %1767 = vmatpush.msra.mxu0 %v1586
  %1768 = vmatmul.f32.gmra.mxu0 %v1492
  %v1769 = vpop.f32.mrf.mxu0
  %v1770 = vadd.f32 %v1705, %v1769
  %1771 = vmatmul.f32.gmra.mxu0 %v1496
  %v1772 = vpop.f32.mrf.mxu0
  %v1773 = vadd.f32 %v1708, %v1772
  %1774 = vmatmul.f32.gmra.mxu0 %v1500
  %v1775 = vpop.f32.mrf.mxu0
  %v1776 = vadd.f32 %v1711, %v1775
  %1777 = vmatmul.f32.gmra.mxu0 %v1504
  %v1778 = vpop.f32.mrf.mxu0
  %v1779 = vadd.f32 %v1714, %v1778
  %1780 = vmatmul.f32.gmra.mxu0 %v1508
  %v1781 = vpop.f32.mrf.mxu0
  %v1782 = vadd.f32 %v1717, %v1781
  %1783 = vmatmul.f32.gmra.mxu0 %v1512
  %v1784 = vpop.f32.mrf.mxu0
  %v1785 = vadd.f32 %v1720, %v1784
  %1786 = vmatmul.f32.gmra.mxu0 %v1516
  %v1787 = vpop.f32.mrf.mxu0
  %v1788 = vadd.f32 %v1723, %v1787
  %1789 = vmatmul.f32.gmra.mxu0 %v1520
  %v1790 = vpop.f32.mrf.mxu0
  %v1791 = vadd.f32 %v1726, %v1790
  %1792 = vmatmul.f32.gmra.mxu0 %v1524
  %v1793 = vpop.f32.mrf.mxu0
  %v1794 = vadd.f32 %v1729, %v1793
  %1795 = vmatmul.f32.gmra.mxu0 %v1528
  %v1796 = vpop.f32.mrf.mxu0
  %v1797 = vadd.f32 %v1732, %v1796
  %1798 = vmatmul.f32.gmra.mxu0 %v1532
  %v1799 = vpop.f32.mrf.mxu0
  %v1800 = vadd.f32 %v1735, %v1799
  %1801 = vmatmul.f32.gmra.mxu0 %v1536
  %v1802 = vpop.f32.mrf.mxu0
  %v1803 = vadd.f32 %v1738, %v1802
  %1804 = vmatmul.f32.gmra.mxu0 %v1540
  %v1805 = vpop.f32.mrf.mxu0
  %v1806 = vadd.f32 %v1741, %v1805
  %1807 = vmatmul.f32.gmra.mxu0 %v1544
  %v1808 = vpop.f32.mrf.mxu0
  %v1809 = vadd.f32 %v1744, %v1808
  %1810 = vmatmul.f32.gmra.mxu0 %v1548
  %v1811 = vpop.f32.mrf.mxu0
  %v1812 = vadd.f32 %v1747, %v1811
  %1813 = vmatmul.f32.gmra.mxu0 %v1552
  %v1814 = vpop.f32.mrf.mxu0
  %v1815 = vadd.f32 %v1750, %v1814
  %1816 = vdwg.mxu0
  %1817 = vmatpush.msra.mxu0 %v1617
  %1818 = vmatpush.msra.mxu0 %v1616
  %1819 = vmatpush.msra.mxu0 %v1615
  %1820 = vmatpush.msra.mxu0 %v1614
  %1821 = vmatpush.msra.mxu0 %v1613
  %1822 = vmatpush.msra.mxu0 %v1612
  %1823 = vmatpush.msra.mxu0 %v1611
  %1824 = vmatpush.msra.mxu0 %v1610
  %1825 = vmatpush.msra.mxu0 %v1609
  %1826 = vmatpush.msra.mxu0 %v1608
  %1827 = vmatpush.msra.mxu0 %v1607
  %1828 = vmatpush.msra.mxu0 %v1606
  %1829 = vmatpush.msra.mxu0 %v1605
  %1830 = vmatpush.msra.mxu0 %v1604
  %1831 = vmatpush.msra.mxu0 %v1603
  %1832 = vmatpush.msra.mxu0 %v1602
  %1833 = vmatmul.f32.gmra.mxu0 %v1493
  %v1834 = vpop.f32.mrf.mxu0
  %v1835 = vadd.f32 %v1770, %v1834
  %1836 = vmatmul.f32.gmra.mxu0 %v1497
  %v1837 = vpop.f32.mrf.mxu0
  %v1838 = vadd.f32 %v1773, %v1837
  %1839 = vmatmul.f32.gmra.mxu0 %v1501
  %v1840 = vpop.f32.mrf.mxu0
  %v1841 = vadd.f32 %v1776, %v1840
  %1842 = vmatmul.f32.gmra.mxu0 %v1505
  %v1843 = vpop.f32.mrf.mxu0
  %v1844 = vadd.f32 %v1779, %v1843
  %1845 = vmatmul.f32.gmra.mxu0 %v1509
  %v1846 = vpop.f32.mrf.mxu0
  %v1847 = vadd.f32 %v1782, %v1846
  %1848 = vmatmul.f32.gmra.mxu0 %v1513
  %v1849 = vpop.f32.mrf.mxu0
  %v1850 = vadd.f32 %v1785, %v1849
  %1851 = vmatmul.f32.gmra.mxu0 %v1517
  %v1852 = vpop.f32.mrf.mxu0
  %v1853 = vadd.f32 %v1788, %v1852
  %1854 = vmatmul.f32.gmra.mxu0 %v1521
  %v1855 = vpop.f32.mrf.mxu0
  %v1856 = vadd.f32 %v1791, %v1855
  %1857 = vmatmul.f32.gmra.mxu0 %v1525
  %v1858 = vpop.f32.mrf.mxu0
  %v1859 = vadd.f32 %v1794, %v1858
  %1860 = vmatmul.f32.gmra.mxu0 %v1529
  %v1861 = vpop.f32.mrf.mxu0
  %v1862 = vadd.f32 %v1797, %v1861
  %1863 = vmatmul.f32.gmra.mxu0 %v1533
  %v1864 = vpop.f32.mrf.mxu0
  %v1865 = vadd.f32 %v1800, %v1864
  %1866 = vmatmul.f32.gmra.mxu0 %v1537
  %v1867 = vpop.f32.mrf.mxu0
  %v1868 = vadd.f32 %v1803, %v1867
  %1869 = vmatmul.f32.gmra.mxu0 %v1541
  %v1870 = vpop.f32.mrf.mxu0
  %v1871 = vadd.f32 %v1806, %v1870
  %1872 = vmatmul.f32.gmra.mxu0 %v1545
  %v1873 = vpop.f32.mrf.mxu0
  %v1874 = vadd.f32 %v1809, %v1873
  %1875 = vmatmul.f32.gmra.mxu0 %v1549
  %v1876 = vpop.f32.mrf.mxu0
  %v1877 = vadd.f32 %v1812, %v1876
  %1878 = vmatmul.f32.gmra.mxu0 %v1553
  %v1879 = vpop.f32.mrf.mxu0
  %v1880 = vadd.f32 %v1815, %v1879
  %1881 = vdwg.mxu0
  %v1882 = vmax.f32 %v1835, 0.0
  %v1883 = vmax.f32 %v1838, 0.0
  %v1884 = vmax.f32 %v1841, 0.0
  %v1885 = vmax.f32 %v1844, 0.0
  %v1886 = vmax.f32 %v1847, 0.0
  %v1887 = vmax.f32 %v1850, 0.0
  %v1888 = vmax.f32 %v1853, 0.0
  %v1889 = vmax.f32 %v1856, 0.0
  %v1890 = vmax.f32 %v1859, 0.0
  %v1891 = vmax.f32 %v1862, 0.0
  %v1892 = vmax.f32 %v1865, 0.0
  %v1893 = vmax.f32 %v1868, 0.0
  %v1894 = vmax.f32 %v1871, 0.0
  %v1895 = vmax.f32 %v1874, 0.0
  %v1896 = vmax.f32 %v1877, 0.0
  %v1897 = vmax.f32 %v1880, 0.0
  %1898 = vst [vmem:[#allocation4] sm:$0xff] %v1882
  %1899 = vst [vmem:[#allocation4 + $0x8] sm:$0xff] %v1883
  %1900 = vst [vmem:[#allocation4 + $0x10] sm:$0xff] %v1884
  %1901 = vst [vmem:[#allocation4 + $0x18] sm:$0xff] %v1885
  %1902 = vst [vmem:[#allocation4 + $0x20] sm:$0xff] %v1886
  %1903 = vst [vmem:[#allocation4 + $0x28] sm:$0xff] %v1887
  %1904 = vst [vmem:[#allocation4 + $0x30] sm:$0xff] %v1888
  %1905 = vst [vmem:[#allocation4 + $0x38] sm:$0xff] %v1889
  %1906 = vst [vmem:[#allocation4 + $0x40] sm:$0xff] %v1890
  %1907 = vst [vmem:[#allocation4 + $0x48] sm:$0xff] %v1891
  %1908 = vst [vmem:[#allocation4 + $0x50] sm:$0xff] %v1892
  %1909 = vst [vmem:[#allocation4 + $0x58] sm:$0xff] %v1893
  %1910 = vst [vmem:[#allocation4 + $0x60] sm:$0xff] %v1894
  %1911 = vst [vmem:[#allocation4 + $0x68] sm:$0xff] %v1895
  %1912 = vst [vmem:[#allocation4 + $0x70] sm:$0xff] %v1896
  %1913 = vst [vmem:[#allocation4 + $0x78] sm:$0xff] %v1897
  %v1914 = vld [vmem:[#allocation4] sm:$0xff]
  %v1915 = vld [vmem:[#allocation4 + $0x8] sm:$0xff]
  %1916 = vst.msk [vmem:[#allocation5] sm:$0xff] %vm156, %v1914
  %1917 = vst.msk [vmem:[#allocation5 + $0x28] sm:$0xff] %vm156, %v1915
  %v1918 = vld [vmem:[#allocation4 + $0x20] sm:$0xff]
  %v1919 = vld [vmem:[#allocation4 + $0x28] sm:$0xff]
  %1920 = vst.msk [vmem:[#allocation5 + $0x50] sm:$0xff] %vm156, %v1918
  %1921 = vst.msk [vmem:[#allocation5 + $0x78] sm:$0xff] %vm156, %v1919
  %v1922 = vld [vmem:[#allocation4 + $0x8] sm:$0xff]
  %v1923 = vld [vmem:[#allocation4 + $0x10] sm:$0xff]
  %vm1924 = vcmask 1048064
  %1925 = vst.msk [vmem:[#allocation5] sm:$0xff] %vm1924, %v1922
  %1926 = vst.msk [vmem:[#allocation5 + $0x28] sm:$0xff] %vm1924, %v1923
  %v1927 = vld [vmem:[#allocation4 + $0x28] sm:$0xff]
  %v1928 = vld [vmem:[#allocation4 + $0x30] sm:$0xff]
  %1929 = vst.msk [vmem:[#allocation5 + $0x50] sm:$0xff] %vm1924, %v1927
  %1930 = vst.msk [vmem:[#allocation5 + $0x78] sm:$0xff] %vm1924, %v1928
  %v1931 = vld [vmem:[#allocation4 + $0x10] sm:$0xff]
  %v1932 = vld [vmem:[#allocation4 + $0x18] sm:$0xff]
  %1933 = vst.msk [vmem:[#allocation5 + $0x8] sm:$0xff] %vm156, %v1931
  %1934 = vst.msk [vmem:[#allocation5 + $0x30] sm:$0xff] %vm156, %v1932
  %v1935 = vld [vmem:[#allocation4 + $0x30] sm:$0xff]
  %v1936 = vld [vmem:[#allocation4 + $0x38] sm:$0xff]
  %1937 = vst.msk [vmem:[#allocation5 + $0x58] sm:$0xff] %vm156, %v1935
  %1938 = vst.msk [vmem:[#allocation5 + $0x80] sm:$0xff] %vm156, %v1936
  %v1939 = vld [vmem:[#allocation4 + $0x20] sm:$0xff]
  %v1940 = vld [vmem:[#allocation4 + $0x28] sm:$0xff]
  %1941 = vst.msk [vmem:[#allocation5 + $0x8] sm:$0xff] %vm1924, %v1939
  %1942 = vst.msk [vmem:[#allocation5 + $0x30] sm:$0xff] %vm1924, %v1940
  %v1943 = vld [vmem:[#allocation4 + $0x40] sm:$0xff]
  %v1944 = vld [vmem:[#allocation4 + $0x48] sm:$0xff]
  %1945 = vst.msk [vmem:[#allocation5 + $0x58] sm:$0xff] %vm1924, %v1943
  %1946 = vst.msk [vmem:[#allocation5 + $0x80] sm:$0xff] %vm1924, %v1944
  %v1947 = vld [vmem:[#allocation4 + $0x28] sm:$0xff]
  %v1948 = vld [vmem:[#allocation4 + $0x30] sm:$0xff]
  %1949 = vst.msk [vmem:[#allocation5 + $0x10] sm:$0xff] %vm156, %v1947
  %1950 = vst.msk [vmem:[#allocation5 + $0x38] sm:$0xff] %vm156, %v1948
  %v1951 = vld [vmem:[#allocation4 + $0x48] sm:$0xff]
  %v1952 = vld [vmem:[#allocation4 + $0x50] sm:$0xff]
  %1953 = vst.msk [vmem:[#allocation5 + $0x60] sm:$0xff] %vm156, %v1951
  %1954 = vst.msk [vmem:[#allocation5 + $0x88] sm:$0xff] %vm156, %v1952
  %v1955 = vld [vmem:[#allocation4 + $0x30] sm:$0xff]
  %v1956 = vld [vmem:[#allocation4 + $0x38] sm:$0xff]
  %1957 = vst.msk [vmem:[#allocation5 + $0x10] sm:$0xff] %vm1924, %v1955
  %1958 = vst.msk [vmem:[#allocation5 + $0x38] sm:$0xff] %vm1924, %v1956
  %v1959 = vld [vmem:[#allocation4 + $0x50] sm:$0xff]
  %v1960 = vld [vmem:[#allocation4 + $0x58] sm:$0xff]
  %1961 = vst.msk [vmem:[#allocation5 + $0x60] sm:$0xff] %vm1924, %v1959
  %1962 = vst.msk [vmem:[#allocation5 + $0x88] sm:$0xff] %vm1924, %v1960
  %v1963 = vld [vmem:[#allocation4 + $0x40] sm:$0xff]
  %v1964 = vld [vmem:[#allocation4 + $0x48] sm:$0xff]
  %1965 = vst.msk [vmem:[#allocation5 + $0x18] sm:$0xff] %vm156, %v1963
  %1966 = vst.msk [vmem:[#allocation5 + $0x40] sm:$0xff] %vm156, %v1964
  %v1967 = vld [vmem:[#allocation4 + $0x60] sm:$0xff]
  %v1968 = vld [vmem:[#allocation4 + $0x68] sm:$0xff]
  %1969 = vst.msk [vmem:[#allocation5 + $0x68] sm:$0xff] %vm156, %v1967
  %1970 = vst.msk [vmem:[#allocation5 + $0x90] sm:$0xff] %vm156, %v1968
  %v1971 = vld [vmem:[#allocation4 + $0x48] sm:$0xff]
  %v1972 = vld [vmem:[#allocation4 + $0x50] sm:$0xff]
  %1973 = vst.msk [vmem:[#allocation5 + $0x18] sm:$0xff] %vm1924, %v1971
  %1974 = vst.msk [vmem:[#allocation5 + $0x40] sm:$0xff] %vm1924, %v1972
  %v1975 = vld [vmem:[#allocation4 + $0x68] sm:$0xff]
  %v1976 = vld [vmem:[#allocation4 + $0x70] sm:$0xff]
  %1977 = vst.msk [vmem:[#allocation5 + $0x68] sm:$0xff] %vm1924, %v1975
  %1978 = vst.msk [vmem:[#allocation5 + $0x90] sm:$0xff] %vm1924, %v1976
  %v1979 = vld [vmem:[#allocation4 + $0x50] sm:$0xff]
  %v1980 = vld [vmem:[#allocation4 + $0x58] sm:$0xff]
  %1981 = vst.msk [vmem:[#allocation5 + $0x20] sm:$0xff] %vm156, %v1979
  %1982 = vst.msk [vmem:[#allocation5 + $0x48] sm:$0xff] %vm156, %v1980
  %v1983 = vld [vmem:[#allocation4 + $0x70] sm:$0xff]
  %v1984 = vld [vmem:[#allocation4 + $0x78] sm:$0xff]
  %1985 = vst.msk [vmem:[#allocation5 + $0x70] sm:$0xff] %vm156, %v1983
  %1986 = vst.msk [vmem:[#allocation5 + $0x98] sm:$0xff] %vm156, %v1984
  %v1987 = vld [vmem:[#allocation5] sm:$0xff]
  %v1988 = vld [vmem:[#allocation5 + $0x8] sm:$0xff]
  %v1989 = vld [vmem:[#allocation5 + $0x10] sm:$0xff]
  %v1990 = vld [vmem:[#allocation5 + $0x18] sm:$0xff]
  %v1991 = vld [vmem:[#allocation5 + $0x20] sm:$0xff]
  %v1992 = vld [vmem:[#allocation5 + $0x28] sm:$0xff]
  %v1993 = vld [vmem:[#allocation5 + $0x30] sm:$0xff]
  %v1994 = vld [vmem:[#allocation5 + $0x38] sm:$0xff]
  %v1995 = vld [vmem:[#allocation5 + $0x40] sm:$0xff]
  %v1996 = vld [vmem:[#allocation5 + $0x48] sm:$0xff]
  %v1997 = vld [vmem:[#allocation5 + $0x50] sm:$0xff]
  %v1998 = vld [vmem:[#allocation5 + $0x58] sm:$0xff]
  %v1999 = vld [vmem:[#allocation5 + $0x60] sm:$0xff]
  %v2000 = vld [vmem:[#allocation5 + $0x68] sm:$0xff]
  %v2001 = vld [vmem:[#allocation5 + $0x70] sm:$0xff]
  %v2002 = vld [vmem:[#allocation5 + $0x78] sm:$0xff]
  %v2003 = vld [vmem:[#allocation5 + $0x80] sm:$0xff]
  %v2004 = vld [vmem:[#allocation5 + $0x88] sm:$0xff]
  %v2005 = vld [vmem:[#allocation5 + $0x90] sm:$0xff]
  %v2006 = vld [vmem:[#allocation5 + $0x98] sm:$0xff]
  %v2007 = vld [vmem:[%s5] sm:$0xff]
  %v2008 = vld [vmem:[%s5 + $0x8] sm:$0xff]
  %v2009 = vld [vmem:[%s5 + $0x10] sm:$0xff]
  %v2010 = vld [vmem:[%s5 + $0x18] sm:$0xff]
  %v2011 = vld [vmem:[%s5 + $0x20] sm:$0xff]
  %v2012 = vld [vmem:[%s5 + $0x28] sm:$0xff]
  %v2013 = vld [vmem:[%s5 + $0x30] sm:$0xff]
  %v2014 = vld [vmem:[%s5 + $0x38] sm:$0xff]
  %v2015 = vld [vmem:[%s5 + $0x40] sm:$0xff]
  %v2016 = vld [vmem:[%s5 + $0x48] sm:$0xff]
  %v2017 = vld [vmem:[%s5 + $0x50] sm:$0xff]
  %v2018 = vld [vmem:[%s5 + $0x58] sm:$0xff]
  %v2019 = vld [vmem:[%s5 + $0x60] sm:$0xff]
  %v2020 = vld [vmem:[%s5 + $0x68] sm:$0xff]
  %v2021 = vld [vmem:[%s5 + $0x70] sm:$0xff]
  %v2022 = vld [vmem:[%s5 + $0x78] sm:$0xff]
  %v2023 = vld [vmem:[%s5 + $0x80] sm:$0xff]
  %v2024 = vld [vmem:[%s5 + $0x88] sm:$0xff]
  %v2025 = vld [vmem:[%s5 + $0x90] sm:$0xff]
  %v2026 = vld [vmem:[%s5 + $0x98] sm:$0xff]
  %v2027 = vld [vmem:[%s5 + $0xa0] sm:$0xff]
  %v2028 = vld [vmem:[%s5 + $0xa8] sm:$0xff]
  %v2029 = vld [vmem:[%s5 + $0xb0] sm:$0xff]
  %v2030 = vld [vmem:[%s5 + $0xb8] sm:$0xff]
  %v2031 = vld [vmem:[%s5 + $0xc0] sm:$0xff]
  %v2032 = vld [vmem:[%s5 + $0xc8] sm:$0xff]
  %v2033 = vld [vmem:[%s5 + $0xd0] sm:$0xff]
  %v2034 = vld [vmem:[%s5 + $0xd8] sm:$0xff]
  %v2035 = vld [vmem:[%s5 + $0xe0] sm:$0xff]
  %v2036 = vld [vmem:[%s5 + $0xe8] sm:$0xff]
  %v2037 = vld [vmem:[%s5 + $0xf0] sm:$0xff]
  %v2038 = vld [vmem:[%s5 + $0xf8] sm:$0xff]
  %v2039 = vld [vmem:[%s5 + $0x100] sm:$0xff]
  %v2040 = vld [vmem:[%s5 + $0x108] sm:$0xff]
  %v2041 = vld [vmem:[%s5 + $0x110] sm:$0xff]
  %v2042 = vld [vmem:[%s5 + $0x118] sm:$0xff]
  %v2043 = vld [vmem:[%s5 + $0x120] sm:$0xff]
  %v2044 = vld [vmem:[%s5 + $0x128] sm:$0xff]
  %v2045 = vld [vmem:[%s5 + $0x130] sm:$0xff]
  %v2046 = vld [vmem:[%s5 + $0x138] sm:$0xff]
  %v2047 = vld [vmem:[%s5 + $0x140] sm:$0xff]
  %v2048 = vld [vmem:[%s5 + $0x148] sm:$0xff]
  %v2049 = vld [vmem:[%s5 + $0x150] sm:$0xff]
  %v2050 = vld [vmem:[%s5 + $0x158] sm:$0xff]
  %v2051 = vld [vmem:[%s5 + $0x160] sm:$0xff]
  %v2052 = vld [vmem:[%s5 + $0x168] sm:$0xff]
  %v2053 = vld [vmem:[%s5 + $0x170] sm:$0xff]
  %v2054 = vld [vmem:[%s5 + $0x178] sm:$0xff]
  %v2055 = vld [vmem:[%s5 + $0x180] sm:$0xff]
  %v2056 = vld [vmem:[%s5 + $0x188] sm:$0xff]
  %v2057 = vld [vmem:[%s5 + $0x190] sm:$0xff]
  %v2058 = vld [vmem:[%s5 + $0x198] sm:$0xff]
  %v2059 = vld [vmem:[%s5 + $0x1a0] sm:$0xff]
  %v2060 = vld [vmem:[%s5 + $0x1a8] sm:$0xff]
  %v2061 = vld [vmem:[%s5 + $0x1b0] sm:$0xff]
  %v2062 = vld [vmem:[%s5 + $0x1b8] sm:$0xff]
  %v2063 = vld [vmem:[%s5 + $0x1c0] sm:$0xff]
  %v2064 = vld [vmem:[%s5 + $0x1c8] sm:$0xff]
  %v2065 = vld [vmem:[%s5 + $0x1d0] sm:$0xff]
  %v2066 = vld [vmem:[%s5 + $0x1d8] sm:$0xff]
  %v2067 = vld [vmem:[%s5 + $0x1e0] sm:$0xff]
  %v2068 = vld [vmem:[%s5 + $0x1e8] sm:$0xff]
  %v2069 = vld [vmem:[%s5 + $0x1f0] sm:$0xff]
  %v2070 = vld [vmem:[%s5 + $0x1f8] sm:$0xff]
  %v2071 = vld [vmem:[%s5 + $0x200] sm:$0xff]
  %v2072 = vld [vmem:[%s5 + $0x208] sm:$0xff]
  %v2073 = vld [vmem:[%s5 + $0x210] sm:$0xff]
  %v2074 = vld [vmem:[%s5 + $0x218] sm:$0xff]
  %v2075 = vld [vmem:[%s5 + $0x220] sm:$0xff]
  %v2076 = vld [vmem:[%s5 + $0x228] sm:$0xff]
  %v2077 = vld [vmem:[%s5 + $0x230] sm:$0xff]
  %v2078 = vld [vmem:[%s5 + $0x238] sm:$0xff]
  %v2079 = vld [vmem:[%s6] sm:$0x1]
  %v2081 = vperm.slane %v2079, 0
  %v2084 = vsel %vm156, %v1991, 0
  %v2087 = vsel %vm156, %v1996, 0
  %v2090 = vsel %vm156, %v2001, 0
  %v2093 = vsel %vm156, %v2006, 0
  %2095 = vmatpush.msra.mxu0 %v2022
  %2096 = vmatpush.msra.mxu0 %v2021
  %2097 = vmatpush.msra.mxu0 %v2020
  %2098 = vmatpush.msra.mxu0 %v2019
  %2099 = vmatpush.msra.mxu0 %v2018
  %2100 = vmatpush.msra.mxu0 %v2017
  %2101 = vmatpush.msra.mxu0 %v2016
  %2102 = vmatpush.msra.mxu0 %v2015
  %2103 = vmatpush.msra.mxu0 %v2014
  %2104 = vmatpush.msra.mxu0 %v2013
  %2105 = vmatpush.msra.mxu0 %v2012
  %2106 = vmatpush.msra.mxu0 %v2011
  %2107 = vmatpush.msra.mxu0 %v2010
  %2108 = vmatpush.msra.mxu0 %v2009
  %2109 = vmatpush.msra.mxu0 %v2008
  %2110 = vmatpush.msra.mxu0 %v2007
  %2111 = vmatmul.f32.gmra.mxu0 %v1987
  %v2112 = vpop.f32.mrf.mxu0
  %v2113 = vadd.f32 %v2081, %v2112
  %2114 = vmatmul.f32.gmra.mxu0 %v1992
  %v2115 = vpop.f32.mrf.mxu0
  %v2116 = vadd.f32 %v2081, %v2115
  %2117 = vmatmul.f32.gmra.mxu0 %v1997
  %v2118 = vpop.f32.mrf.mxu0
  %v2119 = vadd.f32 %v2081, %v2118
  %2120 = vmatmul.f32.gmra.mxu0 %v2002
  %v2121 = vpop.f32.mrf.mxu0
  %v2122 = vadd.f32 %v2081, %v2121
  %2123 = vdwg.mxu0
  %2124 = vmatpush.msra.mxu0 %v2038
  %2125 = vmatpush.msra.mxu0 %v2037
  %2126 = vmatpush.msra.mxu0 %v2036
  %2127 = vmatpush.msra.mxu0 %v2035
  %2128 = vmatpush.msra.mxu0 %v2034
  %2129 = vmatpush.msra.mxu0 %v2033
  %2130 = vmatpush.msra.mxu0 %v2032
  %2131 = vmatpush.msra.mxu0 %v2031
  %2132 = vmatpush.msra.mxu0 %v2030
  %2133 = vmatpush.msra.mxu0 %v2029
  %2134 = vmatpush.msra.mxu0 %v2028
  %2135 = vmatpush.msra.mxu0 %v2027
  %2136 = vmatpush.msra.mxu0 %v2026
  %2137 = vmatpush.msra.mxu0 %v2025
  %2138 = vmatpush.msra.mxu0 %v2024
  %2139 = vmatpush.msra.mxu0 %v2023
  %2140 = vmatmul.f32.gmra.mxu0 %v1988
  %v2141 = vpop.f32.mrf.mxu0
  %v2142 = vadd.f32 %v2113, %v2141
  %2143 = vmatmul.f32.gmra.mxu0 %v1993
  %v2144 = vpop.f32.mrf.mxu0
  %v2145 = vadd.f32 %v2116, %v2144
  %2146 = vmatmul.f32.gmra.mxu0 %v1998
  %v2147 = vpop.f32.mrf.mxu0
  %v2148 = vadd.f32 %v2119, %v2147
  %2149 = vmatmul.f32.gmra.mxu0 %v2003
  %v2150 = vpop.f32.mrf.mxu0
  %v2151 = vadd.f32 %v2122, %v2150
  %2152 = vdwg.mxu0
  %2153 = vmatpush.msra.mxu0 %v2054
  %2154 = vmatpush.msra.mxu0 %v2053
  %2155 = vmatpush.msra.mxu0 %v2052
  %2156 = vmatpush.msra.mxu0 %v2051
  %2157 = vmatpush.msra.mxu0 %v2050
  %2158 = vmatpush.msra.mxu0 %v2049
  %2159 = vmatpush.msra.mxu0 %v2048
  %2160 = vmatpush.msra.mxu0 %v2047
  %2161 = vmatpush.msra.mxu0 %v2046
  %2162 = vmatpush.msra.mxu0 %v2045
  %2163 = vmatpush.msra.mxu0 %v2044
  %2164 = vmatpush.msra.mxu0 %v2043
  %2165 = vmatpush.msra.mxu0 %v2042
  %2166 = vmatpush.msra.mxu0 %v2041
  %2167 = vmatpush.msra.mxu0 %v2040
  %2168 = vmatpush.msra.mxu0 %v2039
  %2169 = vmatmul.f32.gmra.mxu0 %v1989
  %v2170 = vpop.f32.mrf.mxu0
  %v2171 = vadd.f32 %v2142, %v2170
  %2172 = vmatmul.f32.gmra.mxu0 %v1994
  %v2173 = vpop.f32.mrf.mxu0
  %v2174 = vadd.f32 %v2145, %v2173
  %2175 = vmatmul.f32.gmra.mxu0 %v1999
  %v2176 = vpop.f32.mrf.mxu0
  %v2177 = vadd.f32 %v2148, %v2176
  %2178 = vmatmul.f32.gmra.mxu0 %v2004
  %v2179 = vpop.f32.mrf.mxu0
  %v2180 = vadd.f32 %v2151, %v2179
  %2181 = vdwg.mxu0
  %2182 = vmatpush.msra.mxu0 %v2070
  %2183 = vmatpush.msra.mxu0 %v2069
  %2184 = vmatpush.msra.mxu0 %v2068
  %2185 = vmatpush.msra.mxu0 %v2067
  %2186 = vmatpush.msra.mxu0 %v2066
  %2187 = vmatpush.msra.mxu0 %v2065
  %2188 = vmatpush.msra.mxu0 %v2064
  %2189 = vmatpush.msra.mxu0 %v2063
  %2190 = vmatpush.msra.mxu0 %v2062
  %2191 = vmatpush.msra.mxu0 %v2061
  %2192 = vmatpush.msra.mxu0 %v2060
  %2193 = vmatpush.msra.mxu0 %v2059
  %2194 = vmatpush.msra.mxu0 %v2058
  %2195 = vmatpush.msra.mxu0 %v2057
  %2196 = vmatpush.msra.mxu0 %v2056
  %2197 = vmatpush.msra.mxu0 %v2055
  %2198 = vmatmul.f32.gmra.mxu0 %v1990
  %v2199 = vpop.f32.mrf.mxu0
  %v2200 = vadd.f32 %v2171, %v2199
  %2201 = vmatmul.f32.gmra.mxu0 %v1995
  %v2202 = vpop.f32.mrf.mxu0
  %v2203 = vadd.f32 %v2174, %v2202
  %2204 = vmatmul.f32.gmra.mxu0 %v2000
  %v2205 = vpop.f32.mrf.mxu0
  %v2206 = vadd.f32 %v2177, %v2205
  %2207 = vmatmul.f32.gmra.mxu0 %v2005
  %v2208 = vpop.f32.mrf.mxu0
  %v2209 = vadd.f32 %v2180, %v2208
  %2210 = vdwg.mxu0
  %2211 = vmatpush.msra.mxu0 0.0
  %2212 = vmatpush.msra.mxu0 0.0
  %2213 = vmatpush.msra.mxu0 0.0
  %2214 = vmatpush.msra.mxu0 0.0
  %2215 = vmatpush.msra.mxu0 0.0
  %2216 = vmatpush.msra.mxu0 0.0
  %2217 = vmatpush.msra.mxu0 0.0
  %2218 = vmatpush.msra.mxu0 0.0
  %2219 = vmatpush.msra.mxu0 %v2078
  %2220 = vmatpush.msra.mxu0 %v2077
  %2221 = vmatpush.msra.mxu0 %v2076
  %2222 = vmatpush.msra.mxu0 %v2075
  %2223 = vmatpush.msra.mxu0 %v2074
  %2224 = vmatpush.msra.mxu0 %v2073
  %2225 = vmatpush.msra.mxu0 %v2072
  %2226 = vmatpush.msra.mxu0 %v2071
  %2227 = vmatmul.f32.gmra.mxu0 %v2084
  %v2228 = vpop.f32.mrf.mxu0
  %v2229 = vadd.f32 %v2200, %v2228
  %2230 = vmatmul.f32.gmra.mxu0 %v2087
  %v2231 = vpop.f32.mrf.mxu0
  %v2232 = vadd.f32 %v2203, %v2231
  %2233 = vmatmul.f32.gmra.mxu0 %v2090
  %v2234 = vpop.f32.mrf.mxu0
  %v2235 = vadd.f32 %v2206, %v2234
  %2236 = vmatmul.f32.gmra.mxu0 %v2093
  %v2237 = vpop.f32.mrf.mxu0
  %v2238 = vadd.f32 %v2209, %v2237
  %2239 = vdwg.mxu0
  %v2240 = vmax.f32 %v2229, 0.0
  %v2241 = vmax.f32 %v2232, 0.0
  %v2242 = vmax.f32 %v2235, 0.0
  %v2243 = vmax.f32 %v2238, 0.0
  %2245 = vrot.lane.b32.xlu0 %v2241, 64
  %v2246 = vpop.permute.xlu0 %2245
  %2249 = vrot.lane.b32.xlu0 %v2243, 64
  %v2250 = vpop.permute.xlu0 %2249
  %v2252 = vsel %vm156, %v2240, %v2246
  %v2253 = vsel %vm156, %v2242, %v2250
  %v2254 = vld [vmem:[%s7] sm:$0xff]
  %v2255 = vld [vmem:[%s7 + $0x8] sm:$0xff]
  %v2256 = vld [vmem:[%s7 + $0x10] sm:$0xff]
  %v2257 = vld [vmem:[%s7 + $0x18] sm:$0xff]
  %v2258 = vld [vmem:[%s7 + $0x20] sm:$0xff]
  %v2259 = vld [vmem:[%s7 + $0x28] sm:$0xff]
  %v2260 = vld [vmem:[%s7 + $0x30] sm:$0xff]
  %v2261 = vld [vmem:[%s7 + $0x38] sm:$0xff]
  %v2262 = vld [vmem:[%s7 + $0x40] sm:$0xff]
  %v2263 = vld [vmem:[%s7 + $0x48] sm:$0xff]
  %v2264 = vld [vmem:[%s7 + $0x50] sm:$0xff]
  %v2265 = vld [vmem:[%s7 + $0x58] sm:$0xff]
  %v2266 = vld [vmem:[%s7 + $0x60] sm:$0xff]
  %v2267 = vld [vmem:[%s7 + $0x68] sm:$0xff]
  %v2268 = vld [vmem:[%s7 + $0x70] sm:$0xff]
  %v2269 = vld [vmem:[%s7 + $0x78] sm:$0xff]
  %v2270 = vld [vmem:[%s7 + $0x80] sm:$0xff]
  %v2271 = vld [vmem:[%s7 + $0x88] sm:$0xff]
  %v2272 = vld [vmem:[%s7 + $0x90] sm:$0xff]
  %v2273 = vld [vmem:[%s7 + $0x98] sm:$0xff]
  %v2274 = vld [vmem:[%s7 + $0xa0] sm:$0xff]
  %v2275 = vld [vmem:[%s7 + $0xa8] sm:$0xff]
  %v2276 = vld [vmem:[%s7 + $0xb0] sm:$0xff]
  %v2277 = vld [vmem:[%s7 + $0xb8] sm:$0xff]
  %v2278 = vld [vmem:[%s7 + $0xc0] sm:$0xff]
  %v2279 = vld [vmem:[%s7 + $0xc8] sm:$0xff]
  %v2280 = vld [vmem:[%s7 + $0xd0] sm:$0xff]
  %v2281 = vld [vmem:[%s7 + $0xd8] sm:$0xff]
  %v2282 = vld [vmem:[%s7 + $0xe0] sm:$0xff]
  %v2283 = vld [vmem:[%s7 + $0xe8] sm:$0xff]
  %v2284 = vld [vmem:[%s7 + $0xf0] sm:$0xff]
  %v2285 = vld [vmem:[%s7 + $0xf8] sm:$0xff]
  %v2286 = vld [vmem:[%s8] sm:$0x1]
  %v2288 = vperm.slane %v2286, 0
  %2290 = vmatpush.msra.mxu0 %v2269
  %2291 = vmatpush.msra.mxu0 %v2268
  %2292 = vmatpush.msra.mxu0 %v2267
  %2293 = vmatpush.msra.mxu0 %v2266
  %2294 = vmatpush.msra.mxu0 %v2265
  %2295 = vmatpush.msra.mxu0 %v2264
  %2296 = vmatpush.msra.mxu0 %v2263
  %2297 = vmatpush.msra.mxu0 %v2262
  %2298 = vmatpush.msra.mxu0 %v2261
  %2299 = vmatpush.msra.mxu0 %v2260
  %2300 = vmatpush.msra.mxu0 %v2259
  %2301 = vmatpush.msra.mxu0 %v2258
  %2302 = vmatpush.msra.mxu0 %v2257
  %2303 = vmatpush.msra.mxu0 %v2256
  %2304 = vmatpush.msra.mxu0 %v2255
  %2305 = vmatpush.msra.mxu0 %v2254
  %2306 = vmatmul.f32.gmra.mxu0 %v2252
  %v2307 = vpop.f32.mrf.mxu0
  %v2308 = vadd.f32 %v2288, %v2307
  %2309 = vdwg.mxu0
  %2310 = vmatpush.msra.mxu0 %v2285
  %2311 = vmatpush.msra.mxu0 %v2284
  %2312 = vmatpush.msra.mxu0 %v2283
  %2313 = vmatpush.msra.mxu0 %v2282
  %2314 = vmatpush.msra.mxu0 %v2281
  %2315 = vmatpush.msra.mxu0 %v2280
  %2316 = vmatpush.msra.mxu0 %v2279
  %2317 = vmatpush.msra.mxu0 %v2278
  %2318 = vmatpush.msra.mxu0 %v2277
  %2319 = vmatpush.msra.mxu0 %v2276
  %2320 = vmatpush.msra.mxu0 %v2275
  %2321 = vmatpush.msra.mxu0 %v2274
  %2322 = vmatpush.msra.mxu0 %v2273
  %2323 = vmatpush.msra.mxu0 %v2272
  %2324 = vmatpush.msra.mxu0 %v2271
  %2325 = vmatpush.msra.mxu0 %v2270
  %2326 = vmatmul.f32.gmra.mxu0 %v2253
  %v2327 = vpop.f32.mrf.mxu0
  %v2328 = vadd.f32 %v2308, %v2327
  %2329 = vdwg.mxu0
  %v2330 = vmax.f32 %v2328, 0.0
  %v2331 = vld [vmem:[%s9] sm:$0xff]
  %v2332 = vld [vmem:[%s9 + $0x8] sm:$0xff]
  %v2333 = vld [vmem:[%s9 + $0x10] sm:$0xff]
  %v2334 = vld [vmem:[%s9 + $0x18] sm:$0xff]
  %v2335 = vld [vmem:[%s9 + $0x20] sm:$0xff]
  %v2336 = vld [vmem:[%s9 + $0x28] sm:$0xff]
  %v2337 = vld [vmem:[%s9 + $0x30] sm:$0xff]
  %v2338 = vld [vmem:[%s9 + $0x38] sm:$0xff]
  %v2339 = vld [vmem:[%s10] sm:$0x1]
  %v2341 = vperm.slane %v2339, 0
  %v2344 = vsel %vm156, %v2330, 0
  %2346 = vmatpush.msra.mxu0 0.0
  %2347 = vmatpush.msra.mxu0 0.0
  %2348 = vmatpush.msra.mxu0 0.0
  %2349 = vmatpush.msra.mxu0 0.0
  %2350 = vmatpush.msra.mxu0 0.0
  %2351 = vmatpush.msra.mxu0 0.0
  %2352 = vmatpush.msra.mxu0 0.0
  %2353 = vmatpush.msra.mxu0 0.0
  %2354 = vmatpush.msra.mxu0 %v2338
  %2355 = vmatpush.msra.mxu0 %v2337
  %2356 = vmatpush.msra.mxu0 %v2336
  %2357 = vmatpush.msra.mxu0 %v2335
  %2358 = vmatpush.msra.mxu0 %v2334
  %2359 = vmatpush.msra.mxu0 %v2333
  %2360 = vmatpush.msra.mxu0 %v2332
  %2361 = vmatpush.msra.mxu0 %v2331
  %2362 = vmatmul.f32.gmra.mxu0 %v2344
  %v2363 = vpop.f32.mrf.mxu0
  %v2364 = vadd.f32 %v2341, %v2363
  %2365 = vdwg.mxu0
  %v2366 = vmax.f32 %v2364, 0.0
  %v2367 = vld [vmem:[%s11] sm:$0xff]
  %v2368 = vld [vmem:[%s11 + $0x8] sm:$0xff]
  %v2369 = vld [vmem:[%s11 + $0x10] sm:$0xff]
  %v2370 = vld [vmem:[%s11 + $0x18] sm:$0xff]
  %v2371 = vld [vmem:[%s12] sm:$0x1]
  %v2373 = vperm.slane %v2371, 0
  %v2376 = vsel %vm978, %v2366, 0
  %2378 = vmatpush.msra.mxu0 0.0
  %2379 = vmatpush.msra.mxu0 0.0
  %2380 = vmatpush.msra.mxu0 0.0
  %2381 = vmatpush.msra.mxu0 0.0
  %2382 = vmatpush.msra.mxu0 0.0
  %2383 = vmatpush.msra.mxu0 0.0
  %2384 = vmatpush.msra.mxu0 0.0
  %2385 = vmatpush.msra.mxu0 0.0
  %2386 = vmatpush.msra.mxu0 0.0
  %2387 = vmatpush.msra.mxu0 0.0
  %2388 = vmatpush.msra.mxu0 0.0
  %2389 = vmatpush.msra.mxu0 0.0
  %2390 = vmatpush.msra.mxu0 %v2370
  %2391 = vmatpush.msra.mxu0 %v2369
  %2392 = vmatpush.msra.mxu0 %v2368
  %2393 = vmatpush.msra.mxu0 %v2367
  %2394 = vmatmul.f32.gmra.mxu0 %v2376
  %v2395 = vpop.f32.mrf.mxu0
  %v2396 = vadd.f32 %v2373, %v2395
  %2397 = vdwg.mxu0
  %vm2398 = vcmask 23552
  %2399 = vst.msk [vmem:[%s13] sm:$0xff] %vm2398, %v2396
  // Predicated region
  $region54: #{dqn_forward.1} parent=0 // pred_check
    _
  $region55: #{dqn_forward.1} parent=0 // pred_check_branch
    %2401 = sbr.rel (0) target = $region57
  $region56: #{dqn_forward.1} parent=0 // pred_region
    _
  $region57: #{dqn_forward.1} parent=0 // pred_fallthru
    _
  // Predicated region
  $region58: #{dqn_forward.1} parent=0 // pred_check
    _
  $region59: #{dqn_forward.1} parent=0 // pred_check_branch
    %2403 = sbr.rel (0) target = $region61
  $region60: #{dqn_forward.1} parent=0 // pred_region
    _
  $region61: #{dqn_forward.1} parent=0 // pred_fallthru
    _

</llo_original>
